<compile_context>
chip_gen: v7x
topology: tpu7x:2x2x1
jax: 0.10.0
libtpu: 0.0.40
codegen_flags: <defaults>
</compile_context>

<pallas_src>
import jax
import jax.numpy as jnp
from jax.experimental import pallas as pl
from jax.experimental.pallas import tpu as pltpu

D_MODEL = 64
N_HEADS = 4          # head_dim = 16; softmax is degenerate for seq_len == 1 (see above)
D_FF = 2048          # PyTorch TransformerEncoderLayer default dim_feedforward
N_LAYERS = 2
EPS = 1e-5           # nn.LayerNorm default eps
PAD_OUT = 128        # lane-dense padded width for fc2/fc3 outputs

# Packed-bias row layout (bias64, 13 rows of width 64, f32):
#   row 0                : fc1_b
#   rows 1 + 6*l .. 6+6*l: [vo_b, norm1_w, norm1_b, ff2_b, norm2_w, norm2_b] for layer l
# bias2048 (2 rows, bf16): ff1_b per layer.
# bias128  (2 rows, f32) : [fc2_b(padded), fc3_b(padded)].


def _dot(a, w_ref):
    """bf16 x bf16 matmul on the MXU with f32 accumulation (cast is a no-op if a is bf16)."""
    return jnp.dot(a.astype(jnp.bfloat16), w_ref[...],
                   preferred_element_type=jnp.float32)


def _layernorm(x, w, b):
    # PyTorch LayerNorm: biased variance over the last dim, f32 math.
    mu = jnp.mean(x, axis=-1, keepdims=True)
    xc = x - mu
    var = jnp.mean(xc * xc, axis=-1, keepdims=True)
    return xc * jax.lax.rsqrt(var + EPS) * w + b


def _encoder_layer(x, vo_w, ff1_w, ff2_w, b64_ref, b2048_ref, layer):
    """Post-norm (norm_first=False) TransformerEncoderLayer, activation=relu, seq_len==1.

    vo_w is the host-folded (V @ out_proj) weight; Q/K are numerically dead for
    seq_len == 1 and are not computed.
    """
    base = 1 + 6 * layer
    vo_b  = b64_ref[base + 0: base + 1, :]     # (1, 64) f32
    n1w   = b64_ref[base + 1: base + 2, :]
    n1b   = b64_ref[base + 2: base + 3, :]
    ff2_b = b64_ref[base + 3: base + 4, :]
    n2w   = b64_ref[base + 4: base + 5, :]
    n2b   = b64_ref[base + 5: base + 6, :]
    ff1_b = b2048_ref[layer: layer + 1, :]     # (1, 2048) bf16

    attn = _dot(x, vo_w) + vo_b                # fused V∘out_proj: single matmul
    x = _layernorm(x + attn, n1w, n1b)         # norm1 (f32)

    # FFN: keep the (B, 2048) intermediate in bf16 for the elementwise path.
    h = _dot(x, ff1_w).astype(jnp.bfloat16) + ff1_b
    h = jnp.maximum(h, 0.0)                    # ReLU in bf16
    h = _dot(h, ff2_w) + ff2_b                 # back to f32 via MXU accumulation
    x = _layernorm(x + h, n2w, n2b)            # norm2 (f32)
    return x


def titanic_kernel(x_ref,
                   fc1_w, vo_w0, ff1_w0, ff2_w0, vo_w1, ff1_w1, ff2_w1,
                   fc2_w, fc3_w, b64_ref, b2048_ref, b128_ref,
                   o_ref):
    x = x_ref[...]                                                  # (B, F) f32
    # fc1 + ReLU
    h = jnp.maximum(_dot(x, fc1_w) + b64_ref[0:1, :], 0.0)          # (B, 64)
    # Transformer encoder (2 layers)
    h = _encoder_layer(h, vo_w0, ff1_w0, ff2_w0, b64_ref, b2048_ref, layer=0)
    h = _encoder_layer(h, vo_w1, ff1_w1, ff2_w1, b64_ref, b2048_ref, layer=1)
    # fc2 + ReLU (padded to 128 lanes; padded columns are exactly 0)
    h = jnp.maximum(_dot(h, fc2_w) + b128_ref[0:1, :], 0.0)         # (B, 128)
    # fc3 + sigmoid (padded to 128 lanes; only column 0 is real)
    logits = _dot(h, fc3_w) + b128_ref[1:2, :]                      # (B, 128)
    o_ref[...] = jax.nn.sigmoid(logits)                             # lane-dense 128-wide store


def make_params(key, in_features):
    """Deterministic init in the packed/fused layout the kernel expects.

    Weights are stored (in, out) — a real PyTorch checkpoint must be transposed on the
    host — and the per-layer attention weights are folded: W_vo = v_w @ out_w,
    b_vo = v_b @ out_w + out_b, where v_w/v_b are the V slice of in_proj
    (rows [128:192] of in_proj_weight, transposed).
    """
    keys = iter(jax.random.split(key, 64))

    def w(shape, fan_in):
        return jax.random.normal(next(keys), shape, jnp.float32) / jnp.sqrt(jnp.float32(fan_in))

    def b(d):
        return jax.random.normal(next(keys), (1, d), jnp.float32) * 0.01

    weights = []
    bias64_rows = []
    bias2048_rows = []

    # fc1
    weights.append(w((in_features, D_MODEL), in_features).astype(jnp.bfloat16))
    bias64_rows.append(b(D_MODEL))

    for _ in range(N_LAYERS):
        # Attention (seq_len == 1): only the V slice of in_proj matters; fold with out_proj.
        v_w   = w((D_MODEL, D_MODEL), D_MODEL)
        v_b   = b(D_MODEL)
        out_w = w((D_MODEL, D_MODEL), D_MODEL)
        out_b = b(D_MODEL)
        vo_w = (v_w @ out_w).astype(jnp.bfloat16)
        vo_b = v_b @ out_w + out_b
        # FFN
        ff1_w = w((D_MODEL, D_FF), D_MODEL)
        ff1_b = b(D_FF)
        ff2_w = w((D_FF, D_MODEL), D_FF)
        ff2_b = b(D_MODEL)
        # LayerNorms
        n1w = jnp.ones((1, D_MODEL), jnp.float32)
        n1b = jnp.zeros((1, D_MODEL), jnp.float32)
        n2w = jnp.ones((1, D_MODEL), jnp.float32)
        n2b = jnp.zeros((1, D_MODEL), jnp.float32)

        weights += [vo_w, ff1_w.astype(jnp.bfloat16), ff2_w.astype(jnp.bfloat16)]
        bias64_rows += [vo_b, n1w, n1b, ff2_b, n2w, n2b]
        bias2048_rows.append(ff1_b)

    # fc2: real (64, 32) zero-padded to (64, 128); fc3: real (32, 1) zero-padded to (128, 128).
    fc2_w = jnp.zeros((D_MODEL, PAD_OUT), jnp.float32).at[:, :32].set(w((D_MODEL, 32), D_MODEL))
    fc2_b = jnp.zeros((1, PAD_OUT), jnp.float32).at[:, :32].set(b(32))
    fc3_w = jnp.zeros((PAD_OUT, PAD_OUT), jnp.float32).at[:32, :1].set(w((32, 1), 32))
    fc3_b = jnp.zeros((1, PAD_OUT), jnp.float32).at[:, :1].set(b(1))
    weights += [fc2_w.astype(jnp.bfloat16), fc3_w.astype(jnp.bfloat16)]

    bias64 = jnp.concatenate(bias64_rows, axis=0)                           # (13, 64)  f32
    bias2048 = jnp.concatenate(bias2048_rows, axis=0).astype(jnp.bfloat16)  # (2, 2048) bf16
    bias128 = jnp.concatenate([fc2_b, fc3_b], axis=0)                       # (2, 128)  f32

    return weights + [bias64, bias2048, bias128]


def titanic_forward(x, params, *, block_batch=None):
    n, f = x.shape
    if block_batch is None:
        # Default: one grid step covering the whole (8-aligned) batch — best on
        # single-TC v5e/v6e and for small batches.  On v7x pass e.g. block_batch=n//2
        # (multiple of 8) to put one block on each TensorCore.
        block_batch = max(8, -(-n // 8) * 8)
    n_pad = -(-n // block_batch) * block_batch
    if n_pad != n:
        x = jnp.pad(x, ((0, n_pad - n), (0, 0)))
    grid = (n_pad // block_batch,)

    in_specs = [pl.BlockSpec((block_batch, f), lambda i: (i, 0))]
    for p in params:
        # Grid-invariant weight/bias blocks: full-array block, constant index_map
        # (never re-DMA'd across grid steps).
        in_specs.append(pl.BlockSpec(p.shape, lambda i: (0, 0)))
    out_spec = pl.BlockSpec((block_batch, PAD_OUT), lambda i: (i, 0))

    sem = ("arbitrary",) if grid[0] == 1 else ("parallel",)
    out = pl.pallas_call(
        titanic_kernel,
        out_shape=jax.ShapeDtypeStruct((n_pad, PAD_OUT), jnp.float32),
        grid_spec=pltpu.PrefetchScalarGridSpec(
            num_scalar_prefetch=0,
            grid=grid,
            in_specs=in_specs,
            out_specs=out_spec,
        ),
        compiler_params=pltpu.CompilerParams(dimension_semantics=sem),
    )(x, *params)
    # Drop batch padding and the 127 padded output lanes.
    return out[:n, :1]


if __name__ == "__main__":
    key = jax.random.PRNGKey(0)
    k_x, k_p = jax.random.split(key)

    batch, features = 8, 8            # X_train.shape[1] -> 8 Titanic-style features
    x = jax.random.normal(k_x, (batch, features), jnp.float32)
    params = make_params(k_p, features)

    # Default path: single grid step (grid=(1,)).
    out = titanic_forward(x, params)
    out = jax.block_until_ready(out)
    assert out.shape == (batch, 1)
    assert bool(jnp.all(jnp.isfinite(out)))
    assert bool(jnp.all((out >= 0.0) & (out <= 1.0)))   # sigmoid range

    # Multi-block path with a ragged batch (exercises padding + "parallel" grid).
    x2 = jax.random.normal(k_x, (20, features), jnp.float32)
    out2 = jax.block_until_ready(titanic_forward(x2, params, block_batch=8))
    assert out2.shape == (20, 1)
    assert bool(jnp.all(jnp.isfinite(out2)))
    assert bool(jnp.all((out2 >= 0.0) & (out2 <= 1.0)))

    print("KERNEL_OK")
</pallas_src>

<mosaic_0001>
module attributes {stable_mosaic.version = 11 : i64} {
  func.func @titanic_kernel(%arg0: i32, %arg1: memref<8x8xf32, #tpu.memory_space<vmem>>, %arg2: memref<8x64xbf16, #tpu.memory_space<vmem>>, %arg3: memref<64x64xbf16, #tpu.memory_space<vmem>>, %arg4: memref<64x2048xbf16, #tpu.memory_space<vmem>>, %arg5: memref<2048x64xbf16, #tpu.memory_space<vmem>>, %arg6: memref<64x64xbf16, #tpu.memory_space<vmem>>, %arg7: memref<64x2048xbf16, #tpu.memory_space<vmem>>, %arg8: memref<2048x64xbf16, #tpu.memory_space<vmem>>, %arg9: memref<64x128xbf16, #tpu.memory_space<vmem>>, %arg10: memref<128x128xbf16, #tpu.memory_space<vmem>>, %arg11: memref<13x64xf32, #tpu.memory_space<vmem>>, %arg12: memref<2x2048xbf16, #tpu.memory_space<vmem>>, %arg13: memref<2x128xf32, #tpu.memory_space<vmem>>, %arg14: memref<8x128xf32, #tpu.memory_space<vmem>>) attributes {dimension_semantics = [#tpu.dimension_semantics<arbitrary>], iteration_bounds = array<i64: 1>, scalar_prefetch = 0 : i64, scratch_operands = 0 : i64, tpu.core_type = #tpu.core_type<tc>, window_params = [{transform_indices = @transform_0, window_bounds = array<i64: 8, 8>}, {pipeline_mode = #tpu.pipeline_mode<synchronous>, transform_indices = @transform_1, window_bounds = array<i64: 8, 64>}, {pipeline_mode = #tpu.pipeline_mode<synchronous>, transform_indices = @transform_2, window_bounds = array<i64: 64, 64>}, {pipeline_mode = #tpu.pipeline_mode<synchronous>, transform_indices = @transform_3, window_bounds = array<i64: 64, 2048>}, {pipeline_mode = #tpu.pipeline_mode<synchronous>, transform_indices = @transform_4, window_bounds = array<i64: 2048, 64>}, {pipeline_mode = #tpu.pipeline_mode<synchronous>, transform_indices = @transform_5, window_bounds = array<i64: 64, 64>}, {pipeline_mode = #tpu.pipeline_mode<synchronous>, transform_indices = @transform_6, window_bounds = array<i64: 64, 2048>}, {pipeline_mode = #tpu.pipeline_mode<synchronous>, transform_indices = @transform_7, window_bounds = array<i64: 2048, 64>}, {pipeline_mode = #tpu.pipeline_mode<synchronous>, transform_indices = @transform_8, window_bounds = array<i64: 64, 128>}, {pipeline_mode = #tpu.pipeline_mode<synchronous>, transform_indices = @transform_9, window_bounds = array<i64: 128, 128>}, {pipeline_mode = #tpu.pipeline_mode<synchronous>, transform_indices = @transform_10, window_bounds = array<i64: 13, 64>}, {pipeline_mode = #tpu.pipeline_mode<synchronous>, transform_indices = @transform_11, window_bounds = array<i64: 2, 2048>}, {pipeline_mode = #tpu.pipeline_mode<synchronous>, transform_indices = @transform_12, window_bounds = array<i64: 2, 128>}, {transform_indices = @transform_13, window_bounds = array<i64: 8, 128>}]} {
    %c0 = arith.constant 0 : index
    %c0_0 = arith.constant 0 : index
    %0 = vector.load %arg1[%c0, %c0_0] : memref<8x8xf32, #tpu.memory_space<vmem>>, vector<8x8xf32>
    %1 = arith.truncf %0 : vector<8x8xf32> to vector<8x8xbf16>
    %c0_1 = arith.constant 0 : index
    %c0_2 = arith.constant 0 : index
    %2 = vector.load %arg2[%c0_1, %c0_2] : memref<8x64xbf16, #tpu.memory_space<vmem>>, vector<8x64xbf16>
    %cst = arith.constant dense<0.000000e+00> : vector<8x64xf32>
    %3 = tpu.matmul %1, %2, %cst {dimension_numbers = #tpu.dot_dimension_numbers<[1], [0], [0], [1], [0, 0, 1, 1], [], []>} : vector<8x8xbf16>, vector<8x64xbf16>, vector<8x64xf32> -> vector<8x64xf32>
    %c0_3 = arith.constant 0 : index
    %c0_4 = arith.constant 0 : index
    %4 = vector.load %arg11[%c0_3, %c0_4] : memref<13x64xf32, #tpu.memory_space<vmem>>, vector<1x64xf32>
    %5 = vector.broadcast %4 : vector<1x64xf32> to vector<8x64xf32>
    %6 = arith.addf %3, %5 : vector<8x64xf32>
    %cst_5 = arith.constant 0.000000e+00 : f32
    %7 = vector.broadcast %cst_5 : f32 to vector<8x64xf32>
    %8 = arith.maximumf %6, %7 : vector<8x64xf32>
    %c1 = arith.constant 1 : index
    %c0_6 = arith.constant 0 : index
    %9 = vector.load %arg11[%c1, %c0_6] : memref<13x64xf32, #tpu.memory_space<vmem>>, vector<1x64xf32>
    %c2 = arith.constant 2 : index
    %c0_7 = arith.constant 0 : index
    %10 = vector.load %arg11[%c2, %c0_7] : memref<13x64xf32, #tpu.memory_space<vmem>>, vector<1x64xf32>
    %c3 = arith.constant 3 : index
    %c0_8 = arith.constant 0 : index
    %11 = vector.load %arg11[%c3, %c0_8] : memref<13x64xf32, #tpu.memory_space<vmem>>, vector<1x64xf32>
    %c4 = arith.constant 4 : index
    %c0_9 = arith.constant 0 : index
    %12 = vector.load %arg11[%c4, %c0_9] : memref<13x64xf32, #tpu.memory_space<vmem>>, vector<1x64xf32>
    %c5 = arith.constant 5 : index
    %c0_10 = arith.constant 0 : index
    %13 = vector.load %arg11[%c5, %c0_10] : memref<13x64xf32, #tpu.memory_space<vmem>>, vector<1x64xf32>
    %c6 = arith.constant 6 : index
    %c0_11 = arith.constant 0 : index
    %14 = vector.load %arg11[%c6, %c0_11] : memref<13x64xf32, #tpu.memory_space<vmem>>, vector<1x64xf32>
    %c0_12 = arith.constant 0 : index
    %c0_13 = arith.constant 0 : index
    %15 = vector.load %arg12[%c0_12, %c0_13] : memref<2x2048xbf16, #tpu.memory_space<vmem>>, vector<1x2048xbf16>
    %16 = arith.truncf %8 : vector<8x64xf32> to vector<8x64xbf16>
    %c0_14 = arith.constant 0 : index
    %c0_15 = arith.constant 0 : index
    %17 = vector.load %arg3[%c0_14, %c0_15] : memref<64x64xbf16, #tpu.memory_space<vmem>>, vector<64x64xbf16>
    %cst_16 = arith.constant dense<0.000000e+00> : vector<8x64xf32>
    %18 = tpu.matmul %16, %17, %cst_16 {dimension_numbers = #tpu.dot_dimension_numbers<[1], [0], [0], [1], [0, 0, 1, 1], [], []>} : vector<8x64xbf16>, vector<64x64xbf16>, vector<8x64xf32> -> vector<8x64xf32>
    %19 = vector.broadcast %9 : vector<1x64xf32> to vector<8x64xf32>
    %20 = arith.addf %18, %19 : vector<8x64xf32>
    %21 = arith.addf %8, %20 : vector<8x64xf32>
    %cst_17 = arith.constant dense<0.000000e+00> : vector<8xf32>
    %22 = vector.multi_reduction <add>, %21, %cst_17 [1] : vector<8x64xf32> to vector<8xf32>
    %23 = vector.shape_cast %22 : vector<8xf32> to vector<8x1xf32>
    %cst_18 = arith.constant 6.400000e+01 : f32
    %24 = vector.broadcast %cst_18 : f32 to vector<8x1xf32>
    %25 = arith.divf %23, %24 : vector<8x1xf32>
    %26 = vector.broadcast %25 : vector<8x1xf32> to vector<8x64xf32>
    %27 = arith.subf %21, %26 : vector<8x64xf32>
    %28 = arith.mulf %27, %27 : vector<8x64xf32>
    %cst_19 = arith.constant dense<0.000000e+00> : vector<8xf32>
    %29 = vector.multi_reduction <add>, %28, %cst_19 [1] : vector<8x64xf32> to vector<8xf32>
    %30 = vector.shape_cast %29 : vector<8xf32> to vector<8x1xf32>
    %cst_20 = arith.constant 6.400000e+01 : f32
    %31 = vector.broadcast %cst_20 : f32 to vector<8x1xf32>
    %32 = arith.divf %30, %31 : vector<8x1xf32>
    %cst_21 = arith.constant 9.99999974E-6 : f32
    %33 = vector.broadcast %cst_21 : f32 to vector<8x1xf32>
    %34 = arith.addf %32, %33 : vector<8x1xf32>
    %35 = math.rsqrt %34 : vector<8x1xf32>
    %36 = vector.broadcast %35 : vector<8x1xf32> to vector<8x64xf32>
    %37 = arith.mulf %27, %36 : vector<8x64xf32>
    %38 = vector.broadcast %10 : vector<1x64xf32> to vector<8x64xf32>
    %39 = arith.mulf %37, %38 : vector<8x64xf32>
    %40 = vector.broadcast %11 : vector<1x64xf32> to vector<8x64xf32>
    %41 = arith.addf %39, %40 : vector<8x64xf32>
    %42 = arith.truncf %41 : vector<8x64xf32> to vector<8x64xbf16>
    %c0_22 = arith.constant 0 : index
    %c0_23 = arith.constant 0 : index
    %43 = vector.load %arg4[%c0_22, %c0_23] : memref<64x2048xbf16, #tpu.memory_space<vmem>>, vector<64x2048xbf16>
    %cst_24 = arith.constant dense<0.000000e+00> : vector<8x2048xf32>
    %44 = tpu.matmul %42, %43, %cst_24 {dimension_numbers = #tpu.dot_dimension_numbers<[1], [0], [0], [1], [0, 0, 1, 1], [], []>} : vector<8x64xbf16>, vector<64x2048xbf16>, vector<8x2048xf32> -> vector<8x2048xf32>
    %45 = arith.truncf %44 : vector<8x2048xf32> to vector<8x2048xbf16>
    %46 = vector.broadcast %15 : vector<1x2048xbf16> to vector<8x2048xbf16>
    %47 = arith.addf %45, %46 : vector<8x2048xbf16>
    %cst_25 = arith.constant 0.000000e+00 : bf16
    %48 = vector.broadcast %cst_25 : bf16 to vector<8x2048xbf16>
    %49 = arith.maximumf %47, %48 : vector<8x2048xbf16>
    %c0_26 = arith.constant 0 : index
    %c0_27 = arith.constant 0 : index
    %50 = vector.load %arg5[%c0_26, %c0_27] : memref<2048x64xbf16, #tpu.memory_space<vmem>>, vector<2048x64xbf16>
    %cst_28 = arith.constant dense<0.000000e+00> : vector<8x64xf32>
    %51 = tpu.matmul %49, %50, %cst_28 {dimension_numbers = #tpu.dot_dimension_numbers<[1], [0], [0], [1], [0, 0, 1, 1], [], []>} : vector<8x2048xbf16>, vector<2048x64xbf16>, vector<8x64xf32> -> vector<8x64xf32>
    %52 = vector.broadcast %12 : vector<1x64xf32> to vector<8x64xf32>
    %53 = arith.addf %51, %52 : vector<8x64xf32>
    %54 = arith.addf %41, %53 : vector<8x64xf32>
    %cst_29 = arith.constant dense<0.000000e+00> : vector<8xf32>
    %55 = vector.multi_reduction <add>, %54, %cst_29 [1] : vector<8x64xf32> to vector<8xf32>
    %56 = vector.shape_cast %55 : vector<8xf32> to vector<8x1xf32>
    %cst_30 = arith.constant 6.400000e+01 : f32
    %57 = vector.broadcast %cst_30 : f32 to vector<8x1xf32>
    %58 = arith.divf %56, %57 : vector<8x1xf32>
    %59 = vector.broadcast %58 : vector<8x1xf32> to vector<8x64xf32>
    %60 = arith.subf %54, %59 : vector<8x64xf32>
    %61 = arith.mulf %60, %60 : vector<8x64xf32>
    %cst_31 = arith.constant dense<0.000000e+00> : vector<8xf32>
    %62 = vector.multi_reduction <add>, %61, %cst_31 [1] : vector<8x64xf32> to vector<8xf32>
    %63 = vector.shape_cast %62 : vector<8xf32> to vector<8x1xf32>
    %cst_32 = arith.constant 6.400000e+01 : f32
    %64 = vector.broadcast %cst_32 : f32 to vector<8x1xf32>
    %65 = arith.divf %63, %64 : vector<8x1xf32>
    %cst_33 = arith.constant 9.99999974E-6 : f32
    %66 = vector.broadcast %cst_33 : f32 to vector<8x1xf32>
    %67 = arith.addf %65, %66 : vector<8x1xf32>
    %68 = math.rsqrt %67 : vector<8x1xf32>
    %69 = vector.broadcast %68 : vector<8x1xf32> to vector<8x64xf32>
    %70 = arith.mulf %60, %69 : vector<8x64xf32>
    %71 = vector.broadcast %13 : vector<1x64xf32> to vector<8x64xf32>
    %72 = arith.mulf %70, %71 : vector<8x64xf32>
    %73 = vector.broadcast %14 : vector<1x64xf32> to vector<8x64xf32>
    %74 = arith.addf %72, %73 : vector<8x64xf32>
    %c7 = arith.constant 7 : index
    %c0_34 = arith.constant 0 : index
    %75 = vector.load %arg11[%c7, %c0_34] : memref<13x64xf32, #tpu.memory_space<vmem>>, vector<1x64xf32>
    %c8 = arith.constant 8 : index
    %c0_35 = arith.constant 0 : index
    %76 = vector.load %arg11[%c8, %c0_35] : memref<13x64xf32, #tpu.memory_space<vmem>>, vector<1x64xf32>
    %c9 = arith.constant 9 : index
    %c0_36 = arith.constant 0 : index
    %77 = vector.load %arg11[%c9, %c0_36] : memref<13x64xf32, #tpu.memory_space<vmem>>, vector<1x64xf32>
    %c10 = arith.constant 10 : index
    %c0_37 = arith.constant 0 : index
    %78 = vector.load %arg11[%c10, %c0_37] : memref<13x64xf32, #tpu.memory_space<vmem>>, vector<1x64xf32>
    %c11 = arith.constant 11 : index
    %c0_38 = arith.constant 0 : index
    %79 = vector.load %arg11[%c11, %c0_38] : memref<13x64xf32, #tpu.memory_space<vmem>>, vector<1x64xf32>
    %c12 = arith.constant 12 : index
    %c0_39 = arith.constant 0 : index
    %80 = vector.load %arg11[%c12, %c0_39] : memref<13x64xf32, #tpu.memory_space<vmem>>, vector<1x64xf32>
    %c1_40 = arith.constant 1 : index
    %c0_41 = arith.constant 0 : index
    %81 = vector.load %arg12[%c1_40, %c0_41] : memref<2x2048xbf16, #tpu.memory_space<vmem>>, vector<1x2048xbf16>
    %82 = arith.truncf %74 : vector<8x64xf32> to vector<8x64xbf16>
    %c0_42 = arith.constant 0 : index
    %c0_43 = arith.constant 0 : index
    %83 = vector.load %arg6[%c0_42, %c0_43] : memref<64x64xbf16, #tpu.memory_space<vmem>>, vector<64x64xbf16>
    %cst_44 = arith.constant dense<0.000000e+00> : vector<8x64xf32>
    %84 = tpu.matmul %82, %83, %cst_44 {dimension_numbers = #tpu.dot_dimension_numbers<[1], [0], [0], [1], [0, 0, 1, 1], [], []>} : vector<8x64xbf16>, vector<64x64xbf16>, vector<8x64xf32> -> vector<8x64xf32>
    %85 = vector.broadcast %75 : vector<1x64xf32> to vector<8x64xf32>
    %86 = arith.addf %84, %85 : vector<8x64xf32>
    %87 = arith.addf %74, %86 : vector<8x64xf32>
    %cst_45 = arith.constant dense<0.000000e+00> : vector<8xf32>
    %88 = vector.multi_reduction <add>, %87, %cst_45 [1] : vector<8x64xf32> to vector<8xf32>
    %89 = vector.shape_cast %88 : vector<8xf32> to vector<8x1xf32>
    %cst_46 = arith.constant 6.400000e+01 : f32
    %90 = vector.broadcast %cst_46 : f32 to vector<8x1xf32>
    %91 = arith.divf %89, %90 : vector<8x1xf32>
    %92 = vector.broadcast %91 : vector<8x1xf32> to vector<8x64xf32>
    %93 = arith.subf %87, %92 : vector<8x64xf32>
    %94 = arith.mulf %93, %93 : vector<8x64xf32>
    %cst_47 = arith.constant dense<0.000000e+00> : vector<8xf32>
    %95 = vector.multi_reduction <add>, %94, %cst_47 [1] : vector<8x64xf32> to vector<8xf32>
    %96 = vector.shape_cast %95 : vector<8xf32> to vector<8x1xf32>
    %cst_48 = arith.constant 6.400000e+01 : f32
    %97 = vector.broadcast %cst_48 : f32 to vector<8x1xf32>
    %98 = arith.divf %96, %97 : vector<8x1xf32>
    %cst_49 = arith.constant 9.99999974E-6 : f32
    %99 = vector.broadcast %cst_49 : f32 to vector<8x1xf32>
    %100 = arith.addf %98, %99 : vector<8x1xf32>
    %101 = math.rsqrt %100 : vector<8x1xf32>
    %102 = vector.broadcast %101 : vector<8x1xf32> to vector<8x64xf32>
    %103 = arith.mulf %93, %102 : vector<8x64xf32>
    %104 = vector.broadcast %76 : vector<1x64xf32> to vector<8x64xf32>
    %105 = arith.mulf %103, %104 : vector<8x64xf32>
    %106 = vector.broadcast %77 : vector<1x64xf32> to vector<8x64xf32>
    %107 = arith.addf %105, %106 : vector<8x64xf32>
    %108 = arith.truncf %107 : vector<8x64xf32> to vector<8x64xbf16>
    %c0_50 = arith.constant 0 : index
    %c0_51 = arith.constant 0 : index
    %109 = vector.load %arg7[%c0_50, %c0_51] : memref<64x2048xbf16, #tpu.memory_space<vmem>>, vector<64x2048xbf16>
    %cst_52 = arith.constant dense<0.000000e+00> : vector<8x2048xf32>
    %110 = tpu.matmul %108, %109, %cst_52 {dimension_numbers = #tpu.dot_dimension_numbers<[1], [0], [0], [1], [0, 0, 1, 1], [], []>} : vector<8x64xbf16>, vector<64x2048xbf16>, vector<8x2048xf32> -> vector<8x2048xf32>
    %111 = arith.truncf %110 : vector<8x2048xf32> to vector<8x2048xbf16>
    %112 = vector.broadcast %81 : vector<1x2048xbf16> to vector<8x2048xbf16>
    %113 = arith.addf %111, %112 : vector<8x2048xbf16>
    %cst_53 = arith.constant 0.000000e+00 : bf16
    %114 = vector.broadcast %cst_53 : bf16 to vector<8x2048xbf16>
    %115 = arith.maximumf %113, %114 : vector<8x2048xbf16>
    %c0_54 = arith.constant 0 : index
    %c0_55 = arith.constant 0 : index
    %116 = vector.load %arg8[%c0_54, %c0_55] : memref<2048x64xbf16, #tpu.memory_space<vmem>>, vector<2048x64xbf16>
    %cst_56 = arith.constant dense<0.000000e+00> : vector<8x64xf32>
    %117 = tpu.matmul %115, %116, %cst_56 {dimension_numbers = #tpu.dot_dimension_numbers<[1], [0], [0], [1], [0, 0, 1, 1], [], []>} : vector<8x2048xbf16>, vector<2048x64xbf16>, vector<8x64xf32> -> vector<8x64xf32>
    %118 = vector.broadcast %78 : vector<1x64xf32> to vector<8x64xf32>
    %119 = arith.addf %117, %118 : vector<8x64xf32>
    %120 = arith.addf %107, %119 : vector<8x64xf32>
    %cst_57 = arith.constant dense<0.000000e+00> : vector<8xf32>
    %121 = vector.multi_reduction <add>, %120, %cst_57 [1] : vector<8x64xf32> to vector<8xf32>
    %122 = vector.shape_cast %121 : vector<8xf32> to vector<8x1xf32>
    %cst_58 = arith.constant 6.400000e+01 : f32
    %123 = vector.broadcast %cst_58 : f32 to vector<8x1xf32>
    %124 = arith.divf %122, %123 : vector<8x1xf32>
    %125 = vector.broadcast %124 : vector<8x1xf32> to vector<8x64xf32>
    %126 = arith.subf %120, %125 : vector<8x64xf32>
    %127 = arith.mulf %126, %126 : vector<8x64xf32>
    %cst_59 = arith.constant dense<0.000000e+00> : vector<8xf32>
    %128 = vector.multi_reduction <add>, %127, %cst_59 [1] : vector<8x64xf32> to vector<8xf32>
    %129 = vector.shape_cast %128 : vector<8xf32> to vector<8x1xf32>
    %cst_60 = arith.constant 6.400000e+01 : f32
    %130 = vector.broadcast %cst_60 : f32 to vector<8x1xf32>
    %131 = arith.divf %129, %130 : vector<8x1xf32>
    %cst_61 = arith.constant 9.99999974E-6 : f32
    %132 = vector.broadcast %cst_61 : f32 to vector<8x1xf32>
    %133 = arith.addf %131, %132 : vector<8x1xf32>
    %134 = math.rsqrt %133 : vector<8x1xf32>
    %135 = vector.broadcast %134 : vector<8x1xf32> to vector<8x64xf32>
    %136 = arith.mulf %126, %135 : vector<8x64xf32>
    %137 = vector.broadcast %79 : vector<1x64xf32> to vector<8x64xf32>
    %138 = arith.mulf %136, %137 : vector<8x64xf32>
    %139 = vector.broadcast %80 : vector<1x64xf32> to vector<8x64xf32>
    %140 = arith.addf %138, %139 : vector<8x64xf32>
    %141 = arith.truncf %140 : vector<8x64xf32> to vector<8x64xbf16>
    %c0_62 = arith.constant 0 : index
    %c0_63 = arith.constant 0 : index
    %142 = vector.load %arg9[%c0_62, %c0_63] : memref<64x128xbf16, #tpu.memory_space<vmem>>, vector<64x128xbf16>
    %cst_64 = arith.constant dense<0.000000e+00> : vector<8x128xf32>
    %143 = tpu.matmul %141, %142, %cst_64 {dimension_numbers = #tpu.dot_dimension_numbers<[1], [0], [0], [1], [0, 0, 1, 1], [], []>} : vector<8x64xbf16>, vector<64x128xbf16>, vector<8x128xf32> -> vector<8x128xf32>
    %c0_65 = arith.constant 0 : index
    %c0_66 = arith.constant 0 : index
    %144 = vector.load %arg13[%c0_65, %c0_66] : memref<2x128xf32, #tpu.memory_space<vmem>>, vector<1x128xf32>
    %145 = vector.broadcast %144 : vector<1x128xf32> to vector<8x128xf32>
    %146 = arith.addf %143, %145 : vector<8x128xf32>
    %cst_67 = arith.constant 0.000000e+00 : f32
    %147 = vector.broadcast %cst_67 : f32 to vector<8x128xf32>
    %148 = arith.maximumf %146, %147 : vector<8x128xf32>
    %149 = arith.truncf %148 : vector<8x128xf32> to vector<8x128xbf16>
    %c0_68 = arith.constant 0 : index
    %c0_69 = arith.constant 0 : index
    %150 = vector.load %arg10[%c0_68, %c0_69] : memref<128x128xbf16, #tpu.memory_space<vmem>>, vector<128x128xbf16>
    %cst_70 = arith.constant dense<0.000000e+00> : vector<8x128xf32>
    %151 = tpu.matmul %149, %150, %cst_70 {dimension_numbers = #tpu.dot_dimension_numbers<[1], [0], [0], [1], [0, 0, 1, 1], [], []>} : vector<8x128xbf16>, vector<128x128xbf16>, vector<8x128xf32> -> vector<8x128xf32>
    %c1_71 = arith.constant 1 : index
    %c0_72 = arith.constant 0 : index
    %152 = vector.load %arg13[%c1_71, %c0_72] : memref<2x128xf32, #tpu.memory_space<vmem>>, vector<1x128xf32>
    %153 = vector.broadcast %152 : vector<1x128xf32> to vector<8x128xf32>
    %154 = arith.addf %151, %153 : vector<8x128xf32>
    %155 = arith.negf %154 : vector<8x128xf32>
    %156 = math.exp %155 : vector<8x128xf32>
    %cst_73 = arith.constant 1.000000e+00 : f32
    %157 = vector.broadcast %cst_73 : f32 to vector<8x128xf32>
    %158 = arith.addf %157, %156 : vector<8x128xf32>
    %159 = arith.divf %157, %158 : vector<8x128xf32>
    %c0_74 = arith.constant 0 : index
    %c0_75 = arith.constant 0 : index
    %160 = vector.load %arg14[%c0_74, %c0_75] : memref<8x128xf32, #tpu.memory_space<vmem>>, vector<8x128xf32>
    tpu.vector_store %arg14[%c0_74, %c0_75], %159 {strides = array<i32>} : memref<8x128xf32, #tpu.memory_space<vmem>>, vector<8x128xf32>,
    return
  }
  func.func @transform_0(%arg0: i32) -> (i32, i32) {
    %c0_i32 = arith.constant 0 : i32
    %c0_i32_0 = arith.constant 0 : i32
    return %arg0, %c0_i32 : i32, i32
  }
  func.func @transform_1(%arg0: i32) -> (i32, i32) {
    %c0_i32 = arith.constant 0 : i32
    %c0_i32_0 = arith.constant 0 : i32
    %c0_i32_1 = arith.constant 0 : i32
    return %c0_i32, %c0_i32_0 : i32, i32
  }
  func.func @transform_2(%arg0: i32) -> (i32, i32) {
    %c0_i32 = arith.constant 0 : i32
    %c0_i32_0 = arith.constant 0 : i32
    %c0_i32_1 = arith.constant 0 : i32
    return %c0_i32, %c0_i32_0 : i32, i32
  }
  func.func @transform_3(%arg0: i32) -> (i32, i32) {
    %c0_i32 = arith.constant 0 : i32
    %c0_i32_0 = arith.constant 0 : i32
    %c0_i32_1 = arith.constant 0 : i32
    return %c0_i32, %c0_i32_0 : i32, i32
  }
  func.func @transform_4(%arg0: i32) -> (i32, i32) {
    %c0_i32 = arith.constant 0 : i32
    %c0_i32_0 = arith.constant 0 : i32
    %c0_i32_1 = arith.constant 0 : i32
    return %c0_i32, %c0_i32_0 : i32, i32
  }
  func.func @transform_5(%arg0: i32) -> (i32, i32) {
    %c0_i32 = arith.constant 0 : i32
    %c0_i32_0 = arith.constant 0 : i32
    %c0_i32_1 = arith.constant 0 : i32
    return %c0_i32, %c0_i32_0 : i32, i32
  }
  func.func @transform_6(%arg0: i32) -> (i32, i32) {
    %c0_i32 = arith.constant 0 : i32
    %c0_i32_0 = arith.constant 0 : i32
    %c0_i32_1 = arith.constant 0 : i32
    return %c0_i32, %c0_i32_0 : i32, i32
  }
  func.func @transform_7(%arg0: i32) -> (i32, i32) {
    %c0_i32 = arith.constant 0 : i32
    %c0_i32_0 = arith.constant 0 : i32
    %c0_i32_1 = arith.constant 0 : i32
    return %c0_i32, %c0_i32_0 : i32, i32
  }
  func.func @transform_8(%arg0: i32) -> (i32, i32) {
    %c0_i32 = arith.constant 0 : i32
    %c0_i32_0 = arith.constant 0 : i32
    %c0_i32_1 = arith.constant 0 : i32
    return %c0_i32, %c0_i32_0 : i32, i32
  }
  func.func @transform_9(%arg0: i32) -> (i32, i32) {
    %c0_i32 = arith.constant 0 : i32
    %c0_i32_0 = arith.constant 0 : i32
    %c0_i32_1 = arith.constant 0 : i32
    return %c0_i32, %c0_i32_0 : i32, i32
  }
  func.func @transform_10(%arg0: i32) -> (i32, i32) {
    %c0_i32 = arith.constant 0 : i32
    %c0_i32_0 = arith.constant 0 : i32
    %c0_i32_1 = arith.constant 0 : i32
    return %c0_i32, %c0_i32_0 : i32, i32
  }
  func.func @transform_11(%arg0: i32) -> (i32, i32) {
    %c0_i32 = arith.constant 0 : i32
    %c0_i32_0 = arith.constant 0 : i32
    %c0_i32_1 = arith.constant 0 : i32
    return %c0_i32, %c0_i32_0 : i32, i32
  }
  func.func @transform_12(%arg0: i32) -> (i32, i32) {
    %c0_i32 = arith.constant 0 : i32
    %c0_i32_0 = arith.constant 0 : i32
    %c0_i32_1 = arith.constant 0 : i32
    return %c0_i32, %c0_i32_0 : i32, i32
  }
  func.func @transform_13(%arg0: i32) -> (i32, i32) {
    %c0_i32 = arith.constant 0 : i32
    %c0_i32_0 = arith.constant 0 : i32
    return %arg0, %c0_i32 : i32, i32
  }
}

</mosaic_0001>

<llo_original>
// kernel: tpu_custom_call.1
$region0: #{tpu_custom_call.1}
  #allocation0 [shape = 'u32[]', space=smem, size = 0x4, offset = 0x4, fixed_abs, tag = 'smem constant byte address 0x4 - core index']
  #allocation1 [shape = 'u32[144,128]{1,0:T(1,128)}', space=vmem, size = 0x12000, scoped, tag = 'internal scratch']
  %s0 = inlined_call_operand.vmem [shape: f32[8,8], index: 0, kind: input, shape index: {}]
  %s1 = inlined_call_operand.vmem [shape: bf16[8,64], index: 1, kind: input, shape index: {}]
  %s2 = inlined_call_operand.vmem [shape: bf16[64,64], index: 2, kind: input, shape index: {}]
  %s3 = inlined_call_operand.vmem [shape: bf16[64,2048], index: 3, kind: input, shape index: {}]
  %s4 = inlined_call_operand.vmem [shape: bf16[2048,64], index: 4, kind: input, shape index: {}]
  %s5 = inlined_call_operand.vmem [shape: bf16[64,64], index: 5, kind: input, shape index: {}]
  %s6 = inlined_call_operand.vmem [shape: bf16[64,2048], index: 6, kind: input, shape index: {}]
  %s7 = inlined_call_operand.vmem [shape: bf16[2048,64], index: 7, kind: input, shape index: {}]
  %s8 = inlined_call_operand.vmem [shape: bf16[64,128], index: 8, kind: input, shape index: {}]
  %s9 = inlined_call_operand.vmem [shape: bf16[128,128], index: 9, kind: input, shape index: {}]
  %s10 = inlined_call_operand.vmem [shape: f32[13,64], index: 10, kind: input, shape index: {}]
  %s11 = inlined_call_operand.vmem [shape: bf16[2,2048], index: 11, kind: input, shape index: {}]
  %s12 = inlined_call_operand.vmem [shape: f32[2,128], index: 12, kind: input, shape index: {}]
  %s13 = inlined_call_operand.hbm [shape: f32[8,128], index: 13, kind: output, shape index: {}]
  %s14 = sld [smem:[#allocation0]]
  $region62: #{tpu_custom_call.1} parent=0
    _
  %s16 = ssub.s32 1, %s14
  %s17 = scalar_select 0, %s16, %s14
  $region1: #{tpu_custom_call.1} parent=0
    #allocation2 [shape = 'u8[4096]{0}', space=vmem, size = 0x1000, scoped, tag = 'output window, operand 0, single buffered']
    #allocation3 [shape = 's32[1]{0}', space=sflag, size = 0x4, scoped, tag = 'scoped memory for tpu_custom_call.1']
    %18 = vsyncpa [#allocation3], 0
    // Predicated region
    $region2: #{tpu_custom_call.1} parent=1 // pred_check
      _
    $region3: #{tpu_custom_call.1} parent=1 // pred_check_branch
      %20 = sbr.rel (0) target = $region5
    $region4: #{tpu_custom_call.1} parent=1 // pred_region
      _
    $region5: #{tpu_custom_call.1} parent=1 // pred_fallthru
      _
    // Predicated region
    $region6: #{tpu_custom_call.1} parent=1 // pred_check
      _
    $region7: #{tpu_custom_call.1} parent=1 // pred_check_branch
      %22 = sbr.rel (0) target = $region9
    $region8: #{tpu_custom_call.1} parent=1 // pred_region
      _
    $region9: #{tpu_custom_call.1} parent=1 // pred_fallthru
      _
    // Predicated region
    $region10: #{tpu_custom_call.1} parent=1 // pred_check
      _
    $region11: #{tpu_custom_call.1} parent=1 // pred_check_branch
      %24 = sbr.rel (0) target = $region13
    $region12: #{tpu_custom_call.1} parent=1 // pred_region
      _
    $region13: #{tpu_custom_call.1} parent=1 // pred_fallthru
      _
    // Predicated region
    $region14: #{tpu_custom_call.1} parent=1 // pred_check
      _
    $region15: #{tpu_custom_call.1} parent=1 // pred_check_branch
      %26 = sbr.rel (0) target = $region17
    $region16: #{tpu_custom_call.1} parent=1 // pred_region
      _
    $region17: #{tpu_custom_call.1} parent=1 // pred_fallthru
      _
    // Predicated region
    $region18: #{tpu_custom_call.1} parent=1 // pred_check
      _
    $region19: #{tpu_custom_call.1} parent=1 // pred_check_branch
      %28 = sbr.rel (0) target = $region21
    $region20: #{tpu_custom_call.1} parent=1 // pred_region
      _
    $region21: #{tpu_custom_call.1} parent=1 // pred_fallthru
      _
    // Predicated region
    $region22: #{tpu_custom_call.1} parent=1 // pred_check
      _
    $region23: #{tpu_custom_call.1} parent=1 // pred_check_branch
      %30 = sbr.rel (0) target = $region25
    $region24: #{tpu_custom_call.1} parent=1 // pred_region
      _
    $region25: #{tpu_custom_call.1} parent=1 // pred_fallthru
      _
    // Predicated region
    $region26: #{tpu_custom_call.1} parent=1 // pred_check
      _
    $region27: #{tpu_custom_call.1} parent=1 // pred_check_branch
      %32 = sbr.rel (0) target = $region29
    $region28: #{tpu_custom_call.1} parent=1 // pred_region
      _
    $region29: #{tpu_custom_call.1} parent=1 // pred_fallthru
      _
    // Predicated region
    $region30: #{tpu_custom_call.1} parent=1 // pred_check
      _
    $region31: #{tpu_custom_call.1} parent=1 // pred_check_branch
      %34 = sbr.rel (0) target = $region33
    $region32: #{tpu_custom_call.1} parent=1 // pred_region
      _
    $region33: #{tpu_custom_call.1} parent=1 // pred_fallthru
      _
    // Predicated region
    $region34: #{tpu_custom_call.1} parent=1 // pred_check
      _
    $region35: #{tpu_custom_call.1} parent=1 // pred_check_branch
      %36 = sbr.rel (0) target = $region37
    $region36: #{tpu_custom_call.1} parent=1 // pred_region
      _
    $region37: #{tpu_custom_call.1} parent=1 // pred_fallthru
      _
    // Predicated region
    $region38: #{tpu_custom_call.1} parent=1 // pred_check
      _
    $region39: #{tpu_custom_call.1} parent=1 // pred_check_branch
      %38 = sbr.rel (0) target = $region41
    $region40: #{tpu_custom_call.1} parent=1 // pred_region
      _
    $region41: #{tpu_custom_call.1} parent=1 // pred_fallthru
      _
    // Predicated region
    $region42: #{tpu_custom_call.1} parent=1 // pred_check
      _
    $region43: #{tpu_custom_call.1} parent=1 // pred_check_branch
      %40 = sbr.rel (0) target = $region45
    $region44: #{tpu_custom_call.1} parent=1 // pred_region
      _
    $region45: #{tpu_custom_call.1} parent=1 // pred_fallthru
      _
    // Predicated region
    $region46: #{tpu_custom_call.1} parent=1 // pred_check
      _
    $region47: #{tpu_custom_call.1} parent=1 // pred_check_branch
      %42 = sbr.rel (0) target = $region49
    $region48: #{tpu_custom_call.1} parent=1 // pred_region
      _
    $region49: #{tpu_custom_call.1} parent=1 // pred_fallthru
      _
    // Predicated region
    $region50: #{tpu_custom_call.1} parent=1 // pred_check
      _
    $region51: #{tpu_custom_call.1} parent=1 // pred_check_branch
      %44 = sbr.rel (0) target = $region53
    $region52: #{tpu_custom_call.1} parent=1 // pred_region
      _
    $region53: #{tpu_custom_call.1} parent=1 // pred_fallthru
      _
    %v46 = vld [vmem:[%s0] sm:$0xff]
    %v47 = vpack.c.bf16 %v46, %v46
    %v48 = vld [vmem:[%s1] sm:$0xf]
    %v49 = vld [vmem:[%s10] sm:$0x1]
    %v50 = vlaneseq
    %v51 = vshrl.u32 %v50, 7
    %v52 = vsub.s32 0, %v51
    %v53 = vrot.slane %v49, %v52
    %vm54 = vcmask 64512
    %v56 = vsel %vm54, %v47, 0
    %vm58 = vcmask 1043456
    %v60 = vsel %vm58, %v48, 0
    %62 = vmatprep.subr.bf16.mxu0 0
    %63 = vmatpush1.bf16.msra.mxu0 %v60
    %64 = vmatprep.subr.bf16.mxu0 0
    %65 = vmatpush1.bf16.msra.mxu0 0
    %66 = vmatprep.subr.bf16.mxu0 0
    %67 = vmatpush1.bf16.msra.mxu0 0
    %68 = vmatprep.subr.bf16.mxu0 0
    %69 = vmatpush1.bf16.msra.mxu0 0
    %70 = vmatprep.subr.bf16.mxu0 0
    %71 = vmatpush1.bf16.msra.mxu0 0
    %72 = vmatprep.subr.bf16.mxu0 0
    %73 = vmatpush1.bf16.msra.mxu0 0
    %74 = vmatprep.subr.bf16.mxu0 0
    %75 = vmatpush1.bf16.msra.mxu0 0
    %76 = vmatprep.subr.bf16.mxu0 0
    %77 = vmatpush1.bf16.msra.mxu0 0
    %78 = vmatprep.subr.bf16.mxu0 0
    %79 = vmatpush1.bf16.msra.mxu0 0
    %80 = vmatprep.subr.bf16.mxu0 0
    %81 = vmatpush1.bf16.msra.mxu0 0
    %82 = vmatprep.subr.bf16.mxu0 0
    %83 = vmatpush1.bf16.msra.mxu0 0
    %84 = vmatprep.subr.bf16.mxu0 0
    %85 = vmatpush1.bf16.msra.mxu0 0
    %86 = vmatprep.subr.bf16.mxu0 0
    %87 = vmatpush1.bf16.msra.mxu0 0
    %88 = vmatprep.subr.bf16.mxu0 0
    %89 = vmatpush1.bf16.msra.mxu0 0
    %90 = vmatprep.subr.bf16.mxu0 0
    %91 = vmatpush1.bf16.msra.mxu0 0
    %92 = vmatprep.subr.bf16.mxu0 0
    %93 = vmatpush1.bf16.msra.mxu0 0
    %94 = vmatprep.mubr.bf16.mxu0 0
    %95 = vmatmul.mubr.bf16.gmra.mrb[0].mxu0 %v56
    %v96 = vpop.f32.mrb[0].mxu0
    %v97 = vadd.f32 %v53, %v96
    %v98 = vpop.f32.mrb[0].mxu0
    %v99 = vpop.f32.mrb[0].mxu0
    %v100 = vpop.f32.mrb[0].mxu0
    %101 = vdwg.mxu0
    %v102 = vmax.f32 %v97, 0.0
    %v103 = vld [vmem:[%s10 + $0x1] sm:$0x1]
    %v104 = vld [vmem:[%s10 + $0x2] sm:$0x1]
    %v105 = vld [vmem:[%s10 + $0x3] sm:$0x1]
    %v106 = vld [vmem:[%s10 + $0x4] sm:$0x1]
    %v107 = vld [vmem:[%s10 + $0x5] sm:$0x1]
    %v108 = vld [vmem:[%s10 + $0x6] sm:$0x1]
    %v109 = vld [vmem:[%s11] sm:$0xff]
    %v110 = vld [vmem:[%s11 + $0x8] sm:$0xff]
    %v111 = vpack.c.bf16 %v102, %v102
    %v112 = vld [vmem:[%s2] sm:$0xf]
    %v113 = vld [vmem:[%s2 + $0x4] sm:$0xf]
    %v114 = vld [vmem:[%s2 + $0x8] sm:$0xf]
    %v115 = vld [vmem:[%s2 + $0xc] sm:$0xf]
    %v116 = vld [vmem:[%s2 + $0x10] sm:$0xf]
    %v117 = vld [vmem:[%s2 + $0x14] sm:$0xf]
    %v118 = vld [vmem:[%s2 + $0x18] sm:$0xf]
    %v119 = vld [vmem:[%s2 + $0x1c] sm:$0xf]
    %v120 = vlaneseq
    %v121 = vshrl.u32 %v120, 7
    %v122 = vsub.s32 0, %v121
    %v123 = vrot.slane %v103, %v122
    %v132 = vunpack.c.l.b16 %v112
    %v133 = vunpack.c.l.b16 %v113
    %v134 = vunpack.c.l.b16 %v114
    %v135 = vunpack.c.l.b16 %v115
    %v136 = vunpack.c.l.b16 %v116
    %v137 = vunpack.c.l.b16 %v117
    %v138 = vunpack.c.l.b16 %v118
    %v139 = vunpack.c.l.b16 %v119
    %v140 = vpack.c.b16 %v133, %v132
    %v141 = vpack.c.b16 %v135, %v134
    %v142 = vpack.c.b16 %v137, %v136
    %v143 = vpack.c.b16 %v139, %v138
    %vm148 = vcmask 523264
    %v150 = vsel %vm148, %v111, 0
    %152 = vmatprep.subr.bf16.mxu0 0
    %153 = vmatpush1.bf16.msra.mxu0 %v140
    %154 = vmatprep.subr.bf16.mxu0 0
    %155 = vmatpush1.bf16.msra.mxu0 %v141
    %156 = vmatprep.subr.bf16.mxu0 0
    %157 = vmatpush1.bf16.msra.mxu0 %v142
    %158 = vmatprep.subr.bf16.mxu0 0
    %159 = vmatpush1.bf16.msra.mxu0 %v143
    %160 = vmatprep.subr.bf16.mxu0 0
    %161 = vmatpush1.bf16.msra.mxu0 0
    %162 = vmatprep.subr.bf16.mxu0 0
    %163 = vmatpush1.bf16.msra.mxu0 0
    %164 = vmatprep.subr.bf16.mxu0 0
    %165 = vmatpush1.bf16.msra.mxu0 0
    %166 = vmatprep.subr.bf16.mxu0 0
    %167 = vmatpush1.bf16.msra.mxu0 0
    %168 = vmatprep.subr.bf16.mxu0 0
    %169 = vmatpush1.bf16.msra.mxu0 0
    %170 = vmatprep.subr.bf16.mxu0 0
    %171 = vmatpush1.bf16.msra.mxu0 0
    %172 = vmatprep.subr.bf16.mxu0 0
    %173 = vmatpush1.bf16.msra.mxu0 0
    %174 = vmatprep.subr.bf16.mxu0 0
    %175 = vmatpush1.bf16.msra.mxu0 0
    %176 = vmatprep.subr.bf16.mxu0 0
    %177 = vmatpush1.bf16.msra.mxu0 0
    %178 = vmatprep.subr.bf16.mxu0 0
    %179 = vmatpush1.bf16.msra.mxu0 0
    %180 = vmatprep.subr.bf16.mxu0 0
    %181 = vmatpush1.bf16.msra.mxu0 0
    %182 = vmatprep.subr.bf16.mxu0 0
    %183 = vmatpush1.bf16.msra.mxu0 0
    %184 = vmatprep.mubr.bf16.mxu0 0
    %185 = vmatmul.mubr.bf16.gmra.mrb[0].mxu0 %v150
    %v186 = vpop.f32.mrb[0].mxu0
    %v187 = vadd.f32 %v123, %v186
    %v188 = vpop.f32.mrb[0].mxu0
    %v189 = vpop.f32.mrb[0].mxu0
    %v190 = vpop.f32.mrb[0].mxu0
    %191 = vdwg.mxu0
    %v192 = vadd.f32 %v102, %v187
    %v193 = vsel %vm148, %v192, 0.0
    %194 = vadd.xlane.f32.xlu0 %v193
    %v195 = vpop.xlane.xlu0 %194
    %v196 = vrcp.pop 64.0
    %v197 = vmul.f32 %v195, %v196
    %v198 = vsub.f32 %v192, %v197
    %v199 = vmul.f32 %v198, %v198
    %v200 = vsel %vm148, %v199, 0.0
    %201 = vadd.xlane.f32.xlu0 %v200
    %v202 = vpop.xlane.xlu0 %201
    %v203 = vmul.f32 %v202, %v196
    %v204 = vadd.f32 %v203, 1e-05
    %v205 = vrsqrt.pop %v204
    %v206 = vmul.f32 %v198, %v205
    %v207 = vlaneseq
    %v208 = vshrl.u32 %v207, 7
    %v209 = vsub.s32 0, %v208
    %v210 = vrot.slane %v104, %v209
    %v211 = vmul.f32 %v206, %v210
    %v212 = vlaneseq
    %v213 = vshrl.u32 %v212, 7
    %v214 = vsub.s32 0, %v213
    %v215 = vrot.slane %v105, %v214
    %v216 = vadd.f32 %v211, %v215
    %v217 = vpack.c.bf16 %v216, %v216
    %v218 = vld [vmem:[%s3] sm:$0xff]
    %v219 = vld [vmem:[%s3 + $0x8] sm:$0xff]
    %v220 = vld [vmem:[%s3 + $0x10] sm:$0xff]
    %v221 = vld [vmem:[%s3 + $0x18] sm:$0xff]
    %v222 = vld [vmem:[%s3 + $0x20] sm:$0xff]
    %v223 = vld [vmem:[%s3 + $0x28] sm:$0xff]
    %v224 = vld [vmem:[%s3 + $0x30] sm:$0xff]
    %v225 = vld [vmem:[%s3 + $0x38] sm:$0xff]
    %v226 = vld [vmem:[%s3 + $0x40] sm:$0xff]
    %v227 = vld [vmem:[%s3 + $0x48] sm:$0xff]
    %v228 = vld [vmem:[%s3 + $0x50] sm:$0xff]
    %v229 = vld [vmem:[%s3 + $0x58] sm:$0xff]
    %v230 = vld [vmem:[%s3 + $0x60] sm:$0xff]
    %v231 = vld [vmem:[%s3 + $0x68] sm:$0xff]
    %v232 = vld [vmem:[%s3 + $0x70] sm:$0xff]
    %v233 = vld [vmem:[%s3 + $0x78] sm:$0xff]
    %v234 = vld [vmem:[%s3 + $0x80] sm:$0xff]
    %v235 = vld [vmem:[%s3 + $0x88] sm:$0xff]
    %v236 = vld [vmem:[%s3 + $0x90] sm:$0xff]
    %v237 = vld [vmem:[%s3 + $0x98] sm:$0xff]
    %v238 = vld [vmem:[%s3 + $0xa0] sm:$0xff]
    %v239 = vld [vmem:[%s3 + $0xa8] sm:$0xff]
    %v240 = vld [vmem:[%s3 + $0xb0] sm:$0xff]
    %v241 = vld [vmem:[%s3 + $0xb8] sm:$0xff]
    %v242 = vld [vmem:[%s3 + $0xc0] sm:$0xff]
    %v243 = vld [vmem:[%s3 + $0xc8] sm:$0xff]
    %v244 = vld [vmem:[%s3 + $0xd0] sm:$0xff]
    %v245 = vld [vmem:[%s3 + $0xd8] sm:$0xff]
    %v246 = vld [vmem:[%s3 + $0xe0] sm:$0xff]
    %v247 = vld [vmem:[%s3 + $0xe8] sm:$0xff]
    %v248 = vld [vmem:[%s3 + $0xf0] sm:$0xff]
    %v249 = vld [vmem:[%s3 + $0xf8] sm:$0xff]
    %v250 = vld [vmem:[%s3 + $0x100] sm:$0xff]
    %v251 = vld [vmem:[%s3 + $0x108] sm:$0xff]
    %v252 = vld [vmem:[%s3 + $0x110] sm:$0xff]
    %v253 = vld [vmem:[%s3 + $0x118] sm:$0xff]
    %v254 = vld [vmem:[%s3 + $0x120] sm:$0xff]
    %v255 = vld [vmem:[%s3 + $0x128] sm:$0xff]
    %v256 = vld [vmem:[%s3 + $0x130] sm:$0xff]
    %v257 = vld [vmem:[%s3 + $0x138] sm:$0xff]
    %v258 = vld [vmem:[%s3 + $0x140] sm:$0xff]
    %v259 = vld [vmem:[%s3 + $0x148] sm:$0xff]
    %v260 = vld [vmem:[%s3 + $0x150] sm:$0xff]
    %v261 = vld [vmem:[%s3 + $0x158] sm:$0xff]
    %v262 = vld [vmem:[%s3 + $0x160] sm:$0xff]
    %v263 = vld [vmem:[%s3 + $0x168] sm:$0xff]
    %v264 = vld [vmem:[%s3 + $0x170] sm:$0xff]
    %v265 = vld [vmem:[%s3 + $0x178] sm:$0xff]
    %v266 = vld [vmem:[%s3 + $0x180] sm:$0xff]
    %v267 = vld [vmem:[%s3 + $0x188] sm:$0xff]
    %v268 = vld [vmem:[%s3 + $0x190] sm:$0xff]
    %v269 = vld [vmem:[%s3 + $0x198] sm:$0xff]
    %v270 = vld [vmem:[%s3 + $0x1a0] sm:$0xff]
    %v271 = vld [vmem:[%s3 + $0x1a8] sm:$0xff]
    %v272 = vld [vmem:[%s3 + $0x1b0] sm:$0xff]
    %v273 = vld [vmem:[%s3 + $0x1b8] sm:$0xff]
    %v274 = vld [vmem:[%s3 + $0x1c0] sm:$0xff]
    %v275 = vld [vmem:[%s3 + $0x1c8] sm:$0xff]
    %v276 = vld [vmem:[%s3 + $0x1d0] sm:$0xff]
    %v277 = vld [vmem:[%s3 + $0x1d8] sm:$0xff]
    %v278 = vld [vmem:[%s3 + $0x1e0] sm:$0xff]
    %v279 = vld [vmem:[%s3 + $0x1e8] sm:$0xff]
    %v280 = vld [vmem:[%s3 + $0x1f0] sm:$0xff]
    %v281 = vld [vmem:[%s3 + $0x1f8] sm:$0xff]
    %v346 = vunpack.c.l.b16 %v218
    %v347 = vunpack.c.h.b16 %v218
    %v348 = vunpack.c.l.b16 %v219
    %v349 = vunpack.c.h.b16 %v219
    %v350 = vunpack.c.l.b16 %v220
    %v351 = vunpack.c.h.b16 %v220
    %v352 = vunpack.c.l.b16 %v221
    %v353 = vunpack.c.h.b16 %v221
    %v354 = vunpack.c.l.b16 %v222
    %v355 = vunpack.c.h.b16 %v222
    %v356 = vunpack.c.l.b16 %v223
    %v357 = vunpack.c.h.b16 %v223
    %v358 = vunpack.c.l.b16 %v224
    %v359 = vunpack.c.h.b16 %v224
    %v360 = vunpack.c.l.b16 %v225
    %v361 = vunpack.c.h.b16 %v225
    %v362 = vunpack.c.l.b16 %v226
    %v363 = vunpack.c.h.b16 %v226
    %v364 = vunpack.c.l.b16 %v227
    %v365 = vunpack.c.h.b16 %v227
    %v366 = vunpack.c.l.b16 %v228
    %v367 = vunpack.c.h.b16 %v228
    %v368 = vunpack.c.l.b16 %v229
    %v369 = vunpack.c.h.b16 %v229
    %v370 = vunpack.c.l.b16 %v230
    %v371 = vunpack.c.h.b16 %v230
    %v372 = vunpack.c.l.b16 %v231
    %v373 = vunpack.c.h.b16 %v231
    %v374 = vunpack.c.l.b16 %v232
    %v375 = vunpack.c.h.b16 %v232
    %v376 = vunpack.c.l.b16 %v233
    %v377 = vunpack.c.h.b16 %v233
    %v378 = vunpack.c.l.b16 %v234
    %v379 = vunpack.c.h.b16 %v234
    %v380 = vunpack.c.l.b16 %v235
    %v381 = vunpack.c.h.b16 %v235
    %v382 = vunpack.c.l.b16 %v236
    %v383 = vunpack.c.h.b16 %v236
    %v384 = vunpack.c.l.b16 %v237
    %v385 = vunpack.c.h.b16 %v237
    %v386 = vunpack.c.l.b16 %v238
    %v387 = vunpack.c.h.b16 %v238
    %v388 = vunpack.c.l.b16 %v239
    %v389 = vunpack.c.h.b16 %v239
    %v390 = vunpack.c.l.b16 %v240
    %v391 = vunpack.c.h.b16 %v240
    %v392 = vunpack.c.l.b16 %v241
    %v393 = vunpack.c.h.b16 %v241
    %v394 = vunpack.c.l.b16 %v242
    %v395 = vunpack.c.h.b16 %v242
    %v396 = vunpack.c.l.b16 %v243
    %v397 = vunpack.c.h.b16 %v243
    %v398 = vunpack.c.l.b16 %v244
    %v399 = vunpack.c.h.b16 %v244
    %v400 = vunpack.c.l.b16 %v245
    %v401 = vunpack.c.h.b16 %v245
    %v402 = vunpack.c.l.b16 %v246
    %v403 = vunpack.c.h.b16 %v246
    %v404 = vunpack.c.l.b16 %v247
    %v405 = vunpack.c.h.b16 %v247
    %v406 = vunpack.c.l.b16 %v248
    %v407 = vunpack.c.h.b16 %v248
    %v408 = vunpack.c.l.b16 %v249
    %v409 = vunpack.c.h.b16 %v249
    %v410 = vunpack.c.l.b16 %v250
    %v411 = vunpack.c.h.b16 %v250
    %v412 = vunpack.c.l.b16 %v251
    %v413 = vunpack.c.h.b16 %v251
    %v414 = vunpack.c.l.b16 %v252
    %v415 = vunpack.c.h.b16 %v252
    %v416 = vunpack.c.l.b16 %v253
    %v417 = vunpack.c.h.b16 %v253
    %v418 = vunpack.c.l.b16 %v254
    %v419 = vunpack.c.h.b16 %v254
    %v420 = vunpack.c.l.b16 %v255
    %v421 = vunpack.c.h.b16 %v255
    %v422 = vunpack.c.l.b16 %v256
    %v423 = vunpack.c.h.b16 %v256
    %v424 = vunpack.c.l.b16 %v257
    %v425 = vunpack.c.h.b16 %v257
    %v426 = vunpack.c.l.b16 %v258
    %v427 = vunpack.c.h.b16 %v258
    %v428 = vunpack.c.l.b16 %v259
    %v429 = vunpack.c.h.b16 %v259
    %v430 = vunpack.c.l.b16 %v260
    %v431 = vunpack.c.h.b16 %v260
    %v432 = vunpack.c.l.b16 %v261
    %v433 = vunpack.c.h.b16 %v261
    %v434 = vunpack.c.l.b16 %v262
    %v435 = vunpack.c.h.b16 %v262
    %v436 = vunpack.c.l.b16 %v263
    %v437 = vunpack.c.h.b16 %v263
    %v438 = vunpack.c.l.b16 %v264
    %v439 = vunpack.c.h.b16 %v264
    %v440 = vunpack.c.l.b16 %v265
    %v441 = vunpack.c.h.b16 %v265
    %v442 = vunpack.c.l.b16 %v266
    %v443 = vunpack.c.h.b16 %v266
    %v444 = vunpack.c.l.b16 %v267
    %v445 = vunpack.c.h.b16 %v267
    %v446 = vunpack.c.l.b16 %v268
    %v447 = vunpack.c.h.b16 %v268
    %v448 = vunpack.c.l.b16 %v269
    %v449 = vunpack.c.h.b16 %v269
    %v450 = vunpack.c.l.b16 %v270
    %v451 = vunpack.c.h.b16 %v270
    %v452 = vunpack.c.l.b16 %v271
    %v453 = vunpack.c.h.b16 %v271
    %v454 = vunpack.c.l.b16 %v272
    %v455 = vunpack.c.h.b16 %v272
    %v456 = vunpack.c.l.b16 %v273
    %v457 = vunpack.c.h.b16 %v273
    %v458 = vunpack.c.l.b16 %v274
    %v459 = vunpack.c.h.b16 %v274
    %v460 = vunpack.c.l.b16 %v275
    %v461 = vunpack.c.h.b16 %v275
    %v462 = vunpack.c.l.b16 %v276
    %v463 = vunpack.c.h.b16 %v276
    %v464 = vunpack.c.l.b16 %v277
    %v465 = vunpack.c.h.b16 %v277
    %v466 = vunpack.c.l.b16 %v278
    %v467 = vunpack.c.h.b16 %v278
    %v468 = vunpack.c.l.b16 %v279
    %v469 = vunpack.c.h.b16 %v279
    %v470 = vunpack.c.l.b16 %v280
    %v471 = vunpack.c.h.b16 %v280
    %v472 = vunpack.c.l.b16 %v281
    %v473 = vunpack.c.h.b16 %v281
    %v474 = vpack.c.b16 %v362, %v346
    %v475 = vpack.c.b16 %v363, %v347
    %v476 = vpack.c.b16 %v364, %v348
    %v477 = vpack.c.b16 %v365, %v349
    %v478 = vpack.c.b16 %v366, %v350
    %v479 = vpack.c.b16 %v367, %v351
    %v480 = vpack.c.b16 %v368, %v352
    %v481 = vpack.c.b16 %v369, %v353
    %v482 = vpack.c.b16 %v370, %v354
    %v483 = vpack.c.b16 %v371, %v355
    %v484 = vpack.c.b16 %v372, %v356
    %v485 = vpack.c.b16 %v373, %v357
    %v486 = vpack.c.b16 %v374, %v358
    %v487 = vpack.c.b16 %v375, %v359
    %v488 = vpack.c.b16 %v376, %v360
    %v489 = vpack.c.b16 %v377, %v361
    %v490 = vpack.c.b16 %v394, %v378
    %v491 = vpack.c.b16 %v395, %v379
    %v492 = vpack.c.b16 %v396, %v380
    %v493 = vpack.c.b16 %v397, %v381
    %v494 = vpack.c.b16 %v398, %v382
    %v495 = vpack.c.b16 %v399, %v383
    %v496 = vpack.c.b16 %v400, %v384
    %v497 = vpack.c.b16 %v401, %v385
    %v498 = vpack.c.b16 %v402, %v386
    %v499 = vpack.c.b16 %v403, %v387
    %v500 = vpack.c.b16 %v404, %v388
    %v501 = vpack.c.b16 %v405, %v389
    %v502 = vpack.c.b16 %v406, %v390
    %v503 = vpack.c.b16 %v407, %v391
    %v504 = vpack.c.b16 %v408, %v392
    %v505 = vpack.c.b16 %v409, %v393
    %v506 = vpack.c.b16 %v426, %v410
    %v507 = vpack.c.b16 %v427, %v411
    %v508 = vpack.c.b16 %v428, %v412
    %v509 = vpack.c.b16 %v429, %v413
    %v510 = vpack.c.b16 %v430, %v414
    %v511 = vpack.c.b16 %v431, %v415
    %v512 = vpack.c.b16 %v432, %v416
    %v513 = vpack.c.b16 %v433, %v417
    %v514 = vpack.c.b16 %v434, %v418
    %v515 = vpack.c.b16 %v435, %v419
    %v516 = vpack.c.b16 %v436, %v420
    %v517 = vpack.c.b16 %v437, %v421
    %v518 = vpack.c.b16 %v438, %v422
    %v519 = vpack.c.b16 %v439, %v423
    %v520 = vpack.c.b16 %v440, %v424
    %v521 = vpack.c.b16 %v441, %v425
    %v522 = vpack.c.b16 %v458, %v442
    %v523 = vpack.c.b16 %v459, %v443
    %v524 = vpack.c.b16 %v460, %v444
    %v525 = vpack.c.b16 %v461, %v445
    %v526 = vpack.c.b16 %v462, %v446
    %v527 = vpack.c.b16 %v463, %v447
    %v528 = vpack.c.b16 %v464, %v448
    %v529 = vpack.c.b16 %v465, %v449
    %v530 = vpack.c.b16 %v466, %v450
    %v531 = vpack.c.b16 %v467, %v451
    %v532 = vpack.c.b16 %v468, %v452
    %v533 = vpack.c.b16 %v469, %v453
    %v534 = vpack.c.b16 %v470, %v454
    %v535 = vpack.c.b16 %v471, %v455
    %v536 = vpack.c.b16 %v472, %v456
    %v537 = vpack.c.b16 %v473, %v457
    %v603 = vsel %vm148, %v217, 0
    %605 = vmatprep.subr.bf16.mxu0 %v475
    %606 = vmatpush1.bf16.msra.mxu0 %v474
    %607 = vmatprep.subr.bf16.mxu0 %v491
    %608 = vmatpush1.bf16.msra.mxu0 %v490
    %609 = vmatprep.subr.bf16.mxu0 %v507
    %610 = vmatpush1.bf16.msra.mxu0 %v506
    %611 = vmatprep.subr.bf16.mxu0 %v523
    %612 = vmatpush1.bf16.msra.mxu0 %v522
    %613 = vmatprep.subr.bf16.mxu0 0
    %614 = vmatpush1.bf16.msra.mxu0 0
    %615 = vmatprep.subr.bf16.mxu0 0
    %616 = vmatpush1.bf16.msra.mxu0 0
    %617 = vmatprep.subr.bf16.mxu0 0
    %618 = vmatpush1.bf16.msra.mxu0 0
    %619 = vmatprep.subr.bf16.mxu0 0
    %620 = vmatpush1.bf16.msra.mxu0 0
    %621 = vmatprep.subr.bf16.mxu0 0
    %622 = vmatpush1.bf16.msra.mxu0 0
    %623 = vmatprep.subr.bf16.mxu0 0
    %624 = vmatpush1.bf16.msra.mxu0 0
    %625 = vmatprep.subr.bf16.mxu0 0
    %626 = vmatpush1.bf16.msra.mxu0 0
    %627 = vmatprep.subr.bf16.mxu0 0
    %628 = vmatpush1.bf16.msra.mxu0 0
    %629 = vmatprep.subr.bf16.mxu0 0
    %630 = vmatpush1.bf16.msra.mxu0 0
    %631 = vmatprep.subr.bf16.mxu0 0
    %632 = vmatpush1.bf16.msra.mxu0 0
    %633 = vmatprep.subr.bf16.mxu0 0
    %634 = vmatpush1.bf16.msra.mxu0 0
    %635 = vmatprep.subr.bf16.mxu0 0
    %636 = vmatpush1.bf16.msra.mxu0 0
    %637 = vmatprep.mubr.bf16.mxu0 0
    %638 = vmatmul.mubr.bf16.gmra.mrb[0].mxu0 %v603
    %v639 = vpop.f32.mrb[0].mxu0
    %v640 = vadd.f32 0.0, %v639
    %v641 = vpop.f32.mrb[0].mxu0
    %v642 = vadd.f32 0.0, %v641
    %v643 = vpop.f32.mrb[0].mxu0
    %v644 = vpop.f32.mrb[0].mxu0
    %645 = vdwg.mxu0
    %646 = vmatprep.subr.bf16.mxu0 %v477
    %647 = vmatpush1.bf16.msra.mxu0 %v476
    %648 = vmatprep.subr.bf16.mxu0 %v493
    %649 = vmatpush1.bf16.msra.mxu0 %v492
    %650 = vmatprep.subr.bf16.mxu0 %v509
    %651 = vmatpush1.bf16.msra.mxu0 %v508
    %652 = vmatprep.subr.bf16.mxu0 %v525
    %653 = vmatpush1.bf16.msra.mxu0 %v524
    %654 = vmatprep.subr.bf16.mxu0 0
    %655 = vmatpush1.bf16.msra.mxu0 0
    %656 = vmatprep.subr.bf16.mxu0 0
    %657 = vmatpush1.bf16.msra.mxu0 0
    %658 = vmatprep.subr.bf16.mxu0 0
    %659 = vmatpush1.bf16.msra.mxu0 0
    %660 = vmatprep.subr.bf16.mxu0 0
    %661 = vmatpush1.bf16.msra.mxu0 0
    %662 = vmatprep.subr.bf16.mxu0 0
    %663 = vmatpush1.bf16.msra.mxu0 0
    %664 = vmatprep.subr.bf16.mxu0 0
    %665 = vmatpush1.bf16.msra.mxu0 0
    %666 = vmatprep.subr.bf16.mxu0 0
    %667 = vmatpush1.bf16.msra.mxu0 0
    %668 = vmatprep.subr.bf16.mxu0 0
    %669 = vmatpush1.bf16.msra.mxu0 0
    %670 = vmatprep.subr.bf16.mxu0 0
    %671 = vmatpush1.bf16.msra.mxu0 0
    %672 = vmatprep.subr.bf16.mxu0 0
    %673 = vmatpush1.bf16.msra.mxu0 0
    %674 = vmatprep.subr.bf16.mxu0 0
    %675 = vmatpush1.bf16.msra.mxu0 0
    %676 = vmatprep.subr.bf16.mxu0 0
    %677 = vmatpush1.bf16.msra.mxu0 0
    %678 = vmatprep.mubr.bf16.mxu0 0
    %679 = vmatmul.mubr.bf16.gmra.mrb[0].mxu0 %v603
    %v680 = vpop.f32.mrb[0].mxu0
    %v681 = vadd.f32 0.0, %v680
    %v682 = vpop.f32.mrb[0].mxu0
    %v683 = vadd.f32 0.0, %v682
    %v684 = vpop.f32.mrb[0].mxu0
    %v685 = vpop.f32.mrb[0].mxu0
    %686 = vdwg.mxu0
    %687 = vmatprep.subr.bf16.mxu0 %v479
    %688 = vmatpush1.bf16.msra.mxu0 %v478
    %689 = vmatprep.subr.bf16.mxu0 %v495
    %690 = vmatpush1.bf16.msra.mxu0 %v494
    %691 = vmatprep.subr.bf16.mxu0 %v511
    %692 = vmatpush1.bf16.msra.mxu0 %v510
    %693 = vmatprep.subr.bf16.mxu0 %v527
    %694 = vmatpush1.bf16.msra.mxu0 %v526
    %695 = vmatprep.subr.bf16.mxu0 0
    %696 = vmatpush1.bf16.msra.mxu0 0
    %697 = vmatprep.subr.bf16.mxu0 0
    %698 = vmatpush1.bf16.msra.mxu0 0
    %699 = vmatprep.subr.bf16.mxu0 0
    %700 = vmatpush1.bf16.msra.mxu0 0
    %701 = vmatprep.subr.bf16.mxu0 0
    %702 = vmatpush1.bf16.msra.mxu0 0
    %703 = vmatprep.subr.bf16.mxu0 0
    %704 = vmatpush1.bf16.msra.mxu0 0
    %705 = vmatprep.subr.bf16.mxu0 0
    %706 = vmatpush1.bf16.msra.mxu0 0
    %707 = vmatprep.subr.bf16.mxu0 0
    %708 = vmatpush1.bf16.msra.mxu0 0
    %709 = vmatprep.subr.bf16.mxu0 0
    %710 = vmatpush1.bf16.msra.mxu0 0
    %711 = vmatprep.subr.bf16.mxu0 0
    %712 = vmatpush1.bf16.msra.mxu0 0
    %713 = vmatprep.subr.bf16.mxu0 0
    %714 = vmatpush1.bf16.msra.mxu0 0
    %715 = vmatprep.subr.bf16.mxu0 0
    %716 = vmatpush1.bf16.msra.mxu0 0
    %717 = vmatprep.subr.bf16.mxu0 0
    %718 = vmatpush1.bf16.msra.mxu0 0
    %719 = vmatprep.mubr.bf16.mxu0 0
    %720 = vmatmul.mubr.bf16.gmra.mrb[0].mxu0 %v603
    %v721 = vpop.f32.mrb[0].mxu0
    %v722 = vadd.f32 0.0, %v721
    %v723 = vpop.f32.mrb[0].mxu0
    %v724 = vadd.f32 0.0, %v723
    %v725 = vpop.f32.mrb[0].mxu0
    %v726 = vpop.f32.mrb[0].mxu0
    %727 = vdwg.mxu0
    %728 = vmatprep.subr.bf16.mxu0 %v481
    %729 = vmatpush1.bf16.msra.mxu0 %v480
    %730 = vmatprep.subr.bf16.mxu0 %v497
    %731 = vmatpush1.bf16.msra.mxu0 %v496
    %732 = vmatprep.subr.bf16.mxu0 %v513
    %733 = vmatpush1.bf16.msra.mxu0 %v512
    %734 = vmatprep.subr.bf16.mxu0 %v529
    %735 = vmatpush1.bf16.msra.mxu0 %v528
    %736 = vmatprep.subr.bf16.mxu0 0
    %737 = vmatpush1.bf16.msra.mxu0 0
    %738 = vmatprep.subr.bf16.mxu0 0
    %739 = vmatpush1.bf16.msra.mxu0 0
    %740 = vmatprep.subr.bf16.mxu0 0
    %741 = vmatpush1.bf16.msra.mxu0 0
    %742 = vmatprep.subr.bf16.mxu0 0
    %743 = vmatpush1.bf16.msra.mxu0 0
    %744 = vmatprep.subr.bf16.mxu0 0
    %745 = vmatpush1.bf16.msra.mxu0 0
    %746 = vmatprep.subr.bf16.mxu0 0
    %747 = vmatpush1.bf16.msra.mxu0 0
    %748 = vmatprep.subr.bf16.mxu0 0
    %749 = vmatpush1.bf16.msra.mxu0 0
    %750 = vmatprep.subr.bf16.mxu0 0
    %751 = vmatpush1.bf16.msra.mxu0 0
    %752 = vmatprep.subr.bf16.mxu0 0
    %753 = vmatpush1.bf16.msra.mxu0 0
    %754 = vmatprep.subr.bf16.mxu0 0
    %755 = vmatpush1.bf16.msra.mxu0 0
    %756 = vmatprep.subr.bf16.mxu0 0
    %757 = vmatpush1.bf16.msra.mxu0 0
    %758 = vmatprep.subr.bf16.mxu0 0
    %759 = vmatpush1.bf16.msra.mxu0 0
    %760 = vmatprep.mubr.bf16.mxu0 0
    %761 = vmatmul.mubr.bf16.gmra.mrb[0].mxu0 %v603
    %v762 = vpop.f32.mrb[0].mxu0
    %v763 = vadd.f32 0.0, %v762
    %v764 = vpop.f32.mrb[0].mxu0
    %v765 = vadd.f32 0.0, %v764
    %v766 = vpop.f32.mrb[0].mxu0
    %v767 = vpop.f32.mrb[0].mxu0
    %768 = vdwg.mxu0
    %769 = vmatprep.subr.bf16.mxu0 %v483
    %770 = vmatpush1.bf16.msra.mxu0 %v482
    %771 = vmatprep.subr.bf16.mxu0 %v499
    %772 = vmatpush1.bf16.msra.mxu0 %v498
    %773 = vmatprep.subr.bf16.mxu0 %v515
    %774 = vmatpush1.bf16.msra.mxu0 %v514
    %775 = vmatprep.subr.bf16.mxu0 %v531
    %776 = vmatpush1.bf16.msra.mxu0 %v530
    %777 = vmatprep.subr.bf16.mxu0 0
    %778 = vmatpush1.bf16.msra.mxu0 0
    %779 = vmatprep.subr.bf16.mxu0 0
    %780 = vmatpush1.bf16.msra.mxu0 0
    %781 = vmatprep.subr.bf16.mxu0 0
    %782 = vmatpush1.bf16.msra.mxu0 0
    %783 = vmatprep.subr.bf16.mxu0 0
    %784 = vmatpush1.bf16.msra.mxu0 0
    %785 = vmatprep.subr.bf16.mxu0 0
    %786 = vmatpush1.bf16.msra.mxu0 0
    %787 = vmatprep.subr.bf16.mxu0 0
    %788 = vmatpush1.bf16.msra.mxu0 0
    %789 = vmatprep.subr.bf16.mxu0 0
    %790 = vmatpush1.bf16.msra.mxu0 0
    %791 = vmatprep.subr.bf16.mxu0 0
    %792 = vmatpush1.bf16.msra.mxu0 0
    %793 = vmatprep.subr.bf16.mxu0 0
    %794 = vmatpush1.bf16.msra.mxu0 0
    %795 = vmatprep.subr.bf16.mxu0 0
    %796 = vmatpush1.bf16.msra.mxu0 0
    %797 = vmatprep.subr.bf16.mxu0 0
    %798 = vmatpush1.bf16.msra.mxu0 0
    %799 = vmatprep.subr.bf16.mxu0 0
    %800 = vmatpush1.bf16.msra.mxu0 0
    %801 = vmatprep.mubr.bf16.mxu0 0
    %802 = vmatmul.mubr.bf16.gmra.mrb[0].mxu0 %v603
    %v803 = vpop.f32.mrb[0].mxu0
    %v804 = vadd.f32 0.0, %v803
    %v805 = vpop.f32.mrb[0].mxu0
    %v806 = vadd.f32 0.0, %v805
    %v807 = vpop.f32.mrb[0].mxu0
    %v808 = vpop.f32.mrb[0].mxu0
    %809 = vdwg.mxu0
    %810 = vmatprep.subr.bf16.mxu0 %v485
    %811 = vmatpush1.bf16.msra.mxu0 %v484
    %812 = vmatprep.subr.bf16.mxu0 %v501
    %813 = vmatpush1.bf16.msra.mxu0 %v500
    %814 = vmatprep.subr.bf16.mxu0 %v517
    %815 = vmatpush1.bf16.msra.mxu0 %v516
    %816 = vmatprep.subr.bf16.mxu0 %v533
    %817 = vmatpush1.bf16.msra.mxu0 %v532
    %818 = vmatprep.subr.bf16.mxu0 0
    %819 = vmatpush1.bf16.msra.mxu0 0
    %820 = vmatprep.subr.bf16.mxu0 0
    %821 = vmatpush1.bf16.msra.mxu0 0
    %822 = vmatprep.subr.bf16.mxu0 0
    %823 = vmatpush1.bf16.msra.mxu0 0
    %824 = vmatprep.subr.bf16.mxu0 0
    %825 = vmatpush1.bf16.msra.mxu0 0
    %826 = vmatprep.subr.bf16.mxu0 0
    %827 = vmatpush1.bf16.msra.mxu0 0
    %828 = vmatprep.subr.bf16.mxu0 0
    %829 = vmatpush1.bf16.msra.mxu0 0
    %830 = vmatprep.subr.bf16.mxu0 0
    %831 = vmatpush1.bf16.msra.mxu0 0
    %832 = vmatprep.subr.bf16.mxu0 0
    %833 = vmatpush1.bf16.msra.mxu0 0
    %834 = vmatprep.subr.bf16.mxu0 0
    %835 = vmatpush1.bf16.msra.mxu0 0
    %836 = vmatprep.subr.bf16.mxu0 0
    %837 = vmatpush1.bf16.msra.mxu0 0
    %838 = vmatprep.subr.bf16.mxu0 0
    %839 = vmatpush1.bf16.msra.mxu0 0
    %840 = vmatprep.subr.bf16.mxu0 0
    %841 = vmatpush1.bf16.msra.mxu0 0
    %842 = vmatprep.mubr.bf16.mxu0 0
    %843 = vmatmul.mubr.bf16.gmra.mrb[0].mxu0 %v603
    %v844 = vpop.f32.mrb[0].mxu0
    %v845 = vadd.f32 0.0, %v844
    %v846 = vpop.f32.mrb[0].mxu0
    %v847 = vadd.f32 0.0, %v846
    %v848 = vpop.f32.mrb[0].mxu0
    %v849 = vpop.f32.mrb[0].mxu0
    %850 = vdwg.mxu0
    %851 = vmatprep.subr.bf16.mxu0 %v487
    %852 = vmatpush1.bf16.msra.mxu0 %v486
    %853 = vmatprep.subr.bf16.mxu0 %v503
    %854 = vmatpush1.bf16.msra.mxu0 %v502
    %855 = vmatprep.subr.bf16.mxu0 %v519
    %856 = vmatpush1.bf16.msra.mxu0 %v518
    %857 = vmatprep.subr.bf16.mxu0 %v535
    %858 = vmatpush1.bf16.msra.mxu0 %v534
    %859 = vmatprep.subr.bf16.mxu0 0
    %860 = vmatpush1.bf16.msra.mxu0 0
    %861 = vmatprep.subr.bf16.mxu0 0
    %862 = vmatpush1.bf16.msra.mxu0 0
    %863 = vmatprep.subr.bf16.mxu0 0
    %864 = vmatpush1.bf16.msra.mxu0 0
    %865 = vmatprep.subr.bf16.mxu0 0
    %866 = vmatpush1.bf16.msra.mxu0 0
    %867 = vmatprep.subr.bf16.mxu0 0
    %868 = vmatpush1.bf16.msra.mxu0 0
    %869 = vmatprep.subr.bf16.mxu0 0
    %870 = vmatpush1.bf16.msra.mxu0 0
    %871 = vmatprep.subr.bf16.mxu0 0
    %872 = vmatpush1.bf16.msra.mxu0 0
    %873 = vmatprep.subr.bf16.mxu0 0
    %874 = vmatpush1.bf16.msra.mxu0 0
    %875 = vmatprep.subr.bf16.mxu0 0
    %876 = vmatpush1.bf16.msra.mxu0 0
    %877 = vmatprep.subr.bf16.mxu0 0
    %878 = vmatpush1.bf16.msra.mxu0 0
    %879 = vmatprep.subr.bf16.mxu0 0
    %880 = vmatpush1.bf16.msra.mxu0 0
    %881 = vmatprep.subr.bf16.mxu0 0
    %882 = vmatpush1.bf16.msra.mxu0 0
    %883 = vmatprep.mubr.bf16.mxu0 0
    %884 = vmatmul.mubr.bf16.gmra.mrb[0].mxu0 %v603
    %v885 = vpop.f32.mrb[0].mxu0
    %v886 = vadd.f32 0.0, %v885
    %v887 = vpop.f32.mrb[0].mxu0
    %v888 = vadd.f32 0.0, %v887
    %v889 = vpop.f32.mrb[0].mxu0
    %v890 = vpop.f32.mrb[0].mxu0
    %891 = vdwg.mxu0
    %892 = vmatprep.subr.bf16.mxu0 %v489
    %893 = vmatpush1.bf16.msra.mxu0 %v488
    %894 = vmatprep.subr.bf16.mxu0 %v505
    %895 = vmatpush1.bf16.msra.mxu0 %v504
    %896 = vmatprep.subr.bf16.mxu0 %v521
    %897 = vmatpush1.bf16.msra.mxu0 %v520
    %898 = vmatprep.subr.bf16.mxu0 %v537
    %899 = vmatpush1.bf16.msra.mxu0 %v536
    %900 = vmatprep.subr.bf16.mxu0 0
    %901 = vmatpush1.bf16.msra.mxu0 0
    %902 = vmatprep.subr.bf16.mxu0 0
    %903 = vmatpush1.bf16.msra.mxu0 0
    %904 = vmatprep.subr.bf16.mxu0 0
    %905 = vmatpush1.bf16.msra.mxu0 0
    %906 = vmatprep.subr.bf16.mxu0 0
    %907 = vmatpush1.bf16.msra.mxu0 0
    %908 = vmatprep.subr.bf16.mxu0 0
    %909 = vmatpush1.bf16.msra.mxu0 0
    %910 = vmatprep.subr.bf16.mxu0 0
    %911 = vmatpush1.bf16.msra.mxu0 0
    %912 = vmatprep.subr.bf16.mxu0 0
    %913 = vmatpush1.bf16.msra.mxu0 0
    %914 = vmatprep.subr.bf16.mxu0 0
    %915 = vmatpush1.bf16.msra.mxu0 0
    %916 = vmatprep.subr.bf16.mxu0 0
    %917 = vmatpush1.bf16.msra.mxu0 0
    %918 = vmatprep.subr.bf16.mxu0 0
    %919 = vmatpush1.bf16.msra.mxu0 0
    %920 = vmatprep.subr.bf16.mxu0 0
    %921 = vmatpush1.bf16.msra.mxu0 0
    %922 = vmatprep.subr.bf16.mxu0 0
    %923 = vmatpush1.bf16.msra.mxu0 0
    %924 = vmatprep.mubr.bf16.mxu0 0
    %925 = vmatmul.mubr.bf16.gmra.mrb[0].mxu0 %v603
    %v926 = vpop.f32.mrb[0].mxu0
    %v927 = vadd.f32 0.0, %v926
    %v928 = vpop.f32.mrb[0].mxu0
    %v929 = vadd.f32 0.0, %v928
    %v930 = vpop.f32.mrb[0].mxu0
    %v931 = vpop.f32.mrb[0].mxu0
    %932 = vdwg.mxu0
    %v933 = vpack.c.bf16 %v640, %v640
    %v934 = vpack.c.bf16 %v642, %v642
    %v935 = vpack.c.bf16 %v681, %v681
    %v936 = vpack.c.bf16 %v683, %v683
    %v937 = vpack.c.bf16 %v722, %v722
    %v938 = vpack.c.bf16 %v724, %v724
    %v939 = vpack.c.bf16 %v763, %v763
    %v940 = vpack.c.bf16 %v765, %v765
    %v941 = vpack.c.bf16 %v804, %v804
    %v942 = vpack.c.bf16 %v806, %v806
    %v943 = vpack.c.bf16 %v845, %v845
    %v944 = vpack.c.bf16 %v847, %v847
    %v945 = vpack.c.bf16 %v886, %v886
    %v946 = vpack.c.bf16 %v888, %v888
    %v947 = vpack.c.bf16 %v927, %v927
    %v948 = vpack.c.bf16 %v929, %v929
    %v951 = vcombine.high %v109, %v109
    %v953 = vunpack.c.l.s4 1966171168
    %v954 = vunpack.c.0.s8 %v953
    %v955 = vlaneseq
    %v956 = vshrl.u32 %v955, 7
    %v957 = vsub.s32 %v954, %v956
    %v958 = vrot.slane %v109, %v957
    %v960 = vunpack.c.l.s4 1966171168
    %v961 = vunpack.c.0.s8 %v960
    %v962 = vlaneseq
    %v963 = vshrl.u32 %v962, 7
    %v964 = vsub.s32 %v961, %v963
    %v965 = vrot.slane %v951, %v964
    %v966 = vcombine.high %v958, %v958
    %v967 = vcombine.high %v965, %v965
    %v969 = vunpack.c.l.s4 1966171168
    %v970 = vunpack.c.0.s8 %v969
    %v971 = vlaneseq
    %v972 = vshrl.u32 %v971, 7
    %v973 = vsub.s32 %v970, %v972
    %v974 = vrot.slane %v958, %v973
    %v976 = vunpack.c.l.s4 1966171168
    %v977 = vunpack.c.0.s8 %v976
    %v978 = vlaneseq
    %v979 = vshrl.u32 %v978, 7
    %v980 = vsub.s32 %v977, %v979
    %v981 = vrot.slane %v965, %v980
    %v983 = vunpack.c.l.s4 1966171168
    %v984 = vunpack.c.0.s8 %v983
    %v985 = vlaneseq
    %v986 = vshrl.u32 %v985, 7
    %v987 = vsub.s32 %v984, %v986
    %v988 = vrot.slane %v966, %v987
    %v990 = vunpack.c.l.s4 1966171168
    %v991 = vunpack.c.0.s8 %v990
    %v992 = vlaneseq
    %v993 = vshrl.u32 %v992, 7
    %v994 = vsub.s32 %v991, %v993
    %v995 = vrot.slane %v967, %v994
    %v996 = vcombine.high %v974, %v974
    %v997 = vcombine.high %v981, %v981
    %v998 = vcombine.high %v988, %v988
    %v999 = vcombine.high %v995, %v995
    %v1000 = vcombine.high %v110, %v110
    %v1002 = vunpack.c.l.s4 1966171168
    %v1003 = vunpack.c.0.s8 %v1002
    %v1004 = vlaneseq
    %v1005 = vshrl.u32 %v1004, 7
    %v1006 = vsub.s32 %v1003, %v1005
    %v1007 = vrot.slane %v110, %v1006
    %v1009 = vunpack.c.l.s4 1966171168
    %v1010 = vunpack.c.0.s8 %v1009
    %v1011 = vlaneseq
    %v1012 = vshrl.u32 %v1011, 7
    %v1013 = vsub.s32 %v1010, %v1012
    %v1014 = vrot.slane %v1000, %v1013
    %v1015 = vcombine.high %v1007, %v1007
    %v1016 = vcombine.high %v1014, %v1014
    %v1018 = vunpack.c.l.s4 1966171168
    %v1019 = vunpack.c.0.s8 %v1018
    %v1020 = vlaneseq
    %v1021 = vshrl.u32 %v1020, 7
    %v1022 = vsub.s32 %v1019, %v1021
    %v1023 = vrot.slane %v1007, %v1022
    %v1025 = vunpack.c.l.s4 1966171168
    %v1026 = vunpack.c.0.s8 %v1025
    %v1027 = vlaneseq
    %v1028 = vshrl.u32 %v1027, 7
    %v1029 = vsub.s32 %v1026, %v1028
    %v1030 = vrot.slane %v1014, %v1029
    %v1032 = vunpack.c.l.s4 1966171168
    %v1033 = vunpack.c.0.s8 %v1032
    %v1034 = vlaneseq
    %v1035 = vshrl.u32 %v1034, 7
    %v1036 = vsub.s32 %v1033, %v1035
    %v1037 = vrot.slane %v1015, %v1036
    %v1039 = vunpack.c.l.s4 1966171168
    %v1040 = vunpack.c.0.s8 %v1039
    %v1041 = vlaneseq
    %v1042 = vshrl.u32 %v1041, 7
    %v1043 = vsub.s32 %v1040, %v1042
    %v1044 = vrot.slane %v1016, %v1043
    %v1045 = vcombine.high %v1023, %v1023
    %v1046 = vcombine.high %v1030, %v1030
    %v1047 = vcombine.high %v1037, %v1037
    %v1048 = vcombine.high %v1044, %v1044
    %v1050 = vpack.i.b16 %v974, %v974
    %v1052 = vlaneseq
    %v1053 = vshrl.u32 %v1052, 7
    %v1054 = vsub.s32 0, %v1053
    %v1055 = vrot.slane %v1050, %v1054
    %v1057 = vpack.i.b16 %v988, %v988
    %v1059 = vlaneseq
    %v1060 = vshrl.u32 %v1059, 7
    %v1061 = vsub.s32 0, %v1060
    %v1062 = vrot.slane %v1057, %v1061
    %v1064 = vpack.i.b16 %v996, %v996
    %v1066 = vlaneseq
    %v1067 = vshrl.u32 %v1066, 7
    %v1068 = vsub.s32 0, %v1067
    %v1069 = vrot.slane %v1064, %v1068
    %v1071 = vpack.i.b16 %v998, %v998
    %v1073 = vlaneseq
    %v1074 = vshrl.u32 %v1073, 7
    %v1075 = vsub.s32 0, %v1074
    %v1076 = vrot.slane %v1071, %v1075
    %v1078 = vpack.i.b16 %v981, %v981
    %v1080 = vlaneseq
    %v1081 = vshrl.u32 %v1080, 7
    %v1082 = vsub.s32 0, %v1081
    %v1083 = vrot.slane %v1078, %v1082
    %v1085 = vpack.i.b16 %v995, %v995
    %v1087 = vlaneseq
    %v1088 = vshrl.u32 %v1087, 7
    %v1089 = vsub.s32 0, %v1088
    %v1090 = vrot.slane %v1085, %v1089
    %v1092 = vpack.i.b16 %v997, %v997
    %v1094 = vlaneseq
    %v1095 = vshrl.u32 %v1094, 7
    %v1096 = vsub.s32 0, %v1095
    %v1097 = vrot.slane %v1092, %v1096
    %v1099 = vpack.i.b16 %v999, %v999
    %v1101 = vlaneseq
    %v1102 = vshrl.u32 %v1101, 7
    %v1103 = vsub.s32 0, %v1102
    %v1104 = vrot.slane %v1099, %v1103
    %v1106 = vpack.i.b16 %v1023, %v1023
    %v1108 = vlaneseq
    %v1109 = vshrl.u32 %v1108, 7
    %v1110 = vsub.s32 0, %v1109
    %v1111 = vrot.slane %v1106, %v1110
    %v1113 = vpack.i.b16 %v1037, %v1037
    %v1115 = vlaneseq
    %v1116 = vshrl.u32 %v1115, 7
    %v1117 = vsub.s32 0, %v1116
    %v1118 = vrot.slane %v1113, %v1117
    %v1120 = vpack.i.b16 %v1045, %v1045
    %v1122 = vlaneseq
    %v1123 = vshrl.u32 %v1122, 7
    %v1124 = vsub.s32 0, %v1123
    %v1125 = vrot.slane %v1120, %v1124
    %v1127 = vpack.i.b16 %v1047, %v1047
    %v1129 = vlaneseq
    %v1130 = vshrl.u32 %v1129, 7
    %v1131 = vsub.s32 0, %v1130
    %v1132 = vrot.slane %v1127, %v1131
    %v1134 = vpack.i.b16 %v1030, %v1030
    %v1136 = vlaneseq
    %v1137 = vshrl.u32 %v1136, 7
    %v1138 = vsub.s32 0, %v1137
    %v1139 = vrot.slane %v1134, %v1138
    %v1141 = vpack.i.b16 %v1044, %v1044
    %v1143 = vlaneseq
    %v1144 = vshrl.u32 %v1143, 7
    %v1145 = vsub.s32 0, %v1144
    %v1146 = vrot.slane %v1141, %v1145
    %v1148 = vpack.i.b16 %v1046, %v1046
    %v1150 = vlaneseq
    %v1151 = vshrl.u32 %v1150, 7
    %v1152 = vsub.s32 0, %v1151
    %v1153 = vrot.slane %v1148, %v1152
    %v1155 = vpack.i.b16 %v1048, %v1048
    %v1157 = vlaneseq
    %v1158 = vshrl.u32 %v1157, 7
    %v1159 = vsub.s32 0, %v1158
    %v1160 = vrot.slane %v1155, %v1159
    %v1161 = vadd.bf16 %v933, %v1055
    %v1162 = vadd.bf16 %v934, %v1062
    %v1163 = vadd.bf16 %v935, %v1069
    %v1164 = vadd.bf16 %v936, %v1076
    %v1165 = vadd.bf16 %v937, %v1083
    %v1166 = vadd.bf16 %v938, %v1090
    %v1167 = vadd.bf16 %v939, %v1097
    %v1168 = vadd.bf16 %v940, %v1104
    %v1169 = vadd.bf16 %v941, %v1111
    %v1170 = vadd.bf16 %v942, %v1118
    %v1171 = vadd.bf16 %v943, %v1125
    %v1172 = vadd.bf16 %v944, %v1132
    %v1173 = vadd.bf16 %v945, %v1139
    %v1174 = vadd.bf16 %v946, %v1146
    %v1175 = vadd.bf16 %v947, %v1153
    %v1176 = vadd.bf16 %v948, %v1160
    %v1177 = vmax.bf16 %v1161, 0
    %v1178 = vmax.bf16 %v1162, 0
    %v1179 = vmax.bf16 %v1163, 0
    %v1180 = vmax.bf16 %v1164, 0
    %v1181 = vmax.bf16 %v1165, 0
    %v1182 = vmax.bf16 %v1166, 0
    %v1183 = vmax.bf16 %v1167, 0
    %v1184 = vmax.bf16 %v1168, 0
    %v1185 = vmax.bf16 %v1169, 0
    %v1186 = vmax.bf16 %v1170, 0
    %v1187 = vmax.bf16 %v1171, 0
    %v1188 = vmax.bf16 %v1172, 0
    %v1189 = vmax.bf16 %v1173, 0
    %v1190 = vmax.bf16 %v1174, 0
    %v1191 = vmax.bf16 %v1175, 0
    %v1192 = vmax.bf16 %v1176, 0
    %v1193 = vld [vmem:[%s4] sm:$0xf]
    %v1194 = vld [vmem:[%s4 + $0x4] sm:$0xf]
    %v1195 = vld [vmem:[%s4 + $0x8] sm:$0xf]
    %v1196 = vld [vmem:[%s4 + $0xc] sm:$0xf]
    %v1197 = vld [vmem:[%s4 + $0x10] sm:$0xf]
    %v1198 = vld [vmem:[%s4 + $0x14] sm:$0xf]
    %v1199 = vld [vmem:[%s4 + $0x18] sm:$0xf]
    %v1200 = vld [vmem:[%s4 + $0x1c] sm:$0xf]
    %v1201 = vld [vmem:[%s4 + $0x20] sm:$0xf]
    %v1202 = vld [vmem:[%s4 + $0x24] sm:$0xf]
    %v1203 = vld [vmem:[%s4 + $0x28] sm:$0xf]
    %v1204 = vld [vmem:[%s4 + $0x2c] sm:$0xf]
    %v1205 = vld [vmem:[%s4 + $0x30] sm:$0xf]
    %v1206 = vld [vmem:[%s4 + $0x34] sm:$0xf]
    %v1207 = vld [vmem:[%s4 + $0x38] sm:$0xf]
    %v1208 = vld [vmem:[%s4 + $0x3c] sm:$0xf]
    %v1209 = vld [vmem:[%s4 + $0x40] sm:$0xf]
    %v1210 = vld [vmem:[%s4 + $0x44] sm:$0xf]
    %v1211 = vld [vmem:[%s4 + $0x48] sm:$0xf]
    %v1212 = vld [vmem:[%s4 + $0x4c] sm:$0xf]
    %v1213 = vld [vmem:[%s4 + $0x50] sm:$0xf]
    %v1214 = vld [vmem:[%s4 + $0x54] sm:$0xf]
    %v1215 = vld [vmem:[%s4 + $0x58] sm:$0xf]
    %v1216 = vld [vmem:[%s4 + $0x5c] sm:$0xf]
    %v1217 = vld [vmem:[%s4 + $0x60] sm:$0xf]
    %v1218 = vld [vmem:[%s4 + $0x64] sm:$0xf]
    %v1219 = vld [vmem:[%s4 + $0x68] sm:$0xf]
    %v1220 = vld [vmem:[%s4 + $0x6c] sm:$0xf]
    %v1221 = vld [vmem:[%s4 + $0x70] sm:$0xf]
    %v1222 = vld [vmem:[%s4 + $0x74] sm:$0xf]
    %v1223 = vld [vmem:[%s4 + $0x78] sm:$0xf]
    %v1224 = vld [vmem:[%s4 + $0x7c] sm:$0xf]
    %v1225 = vld [vmem:[%s4 + $0x80] sm:$0xf]
    %v1226 = vld [vmem:[%s4 + $0x84] sm:$0xf]
    %v1227 = vld [vmem:[%s4 + $0x88] sm:$0xf]
    %v1228 = vld [vmem:[%s4 + $0x8c] sm:$0xf]
    %v1229 = vld [vmem:[%s4 + $0x90] sm:$0xf]
    %v1230 = vld [vmem:[%s4 + $0x94] sm:$0xf]
    %v1231 = vld [vmem:[%s4 + $0x98] sm:$0xf]
    %v1232 = vld [vmem:[%s4 + $0x9c] sm:$0xf]
    %v1233 = vld [vmem:[%s4 + $0xa0] sm:$0xf]
    %v1234 = vld [vmem:[%s4 + $0xa4] sm:$0xf]
    %v1235 = vld [vmem:[%s4 + $0xa8] sm:$0xf]
    %v1236 = vld [vmem:[%s4 + $0xac] sm:$0xf]
    %v1237 = vld [vmem:[%s4 + $0xb0] sm:$0xf]
    %v1238 = vld [vmem:[%s4 + $0xb4] sm:$0xf]
    %v1239 = vld [vmem:[%s4 + $0xb8] sm:$0xf]
    %v1240 = vld [vmem:[%s4 + $0xbc] sm:$0xf]
    %v1241 = vld [vmem:[%s4 + $0xc0] sm:$0xf]
    %v1242 = vld [vmem:[%s4 + $0xc4] sm:$0xf]
    %v1243 = vld [vmem:[%s4 + $0xc8] sm:$0xf]
    %v1244 = vld [vmem:[%s4 + $0xcc] sm:$0xf]
    %v1245 = vld [vmem:[%s4 + $0xd0] sm:$0xf]
    %v1246 = vld [vmem:[%s4 + $0xd4] sm:$0xf]
    %v1247 = vld [vmem:[%s4 + $0xd8] sm:$0xf]
    %v1248 = vld [vmem:[%s4 + $0xdc] sm:$0xf]
    %v1249 = vld [vmem:[%s4 + $0xe0] sm:$0xf]
    %v1250 = vld [vmem:[%s4 + $0xe4] sm:$0xf]
    %v1251 = vld [vmem:[%s4 + $0xe8] sm:$0xf]
    %v1252 = vld [vmem:[%s4 + $0xec] sm:$0xf]
    %v1253 = vld [vmem:[%s4 + $0xf0] sm:$0xf]
    %v1254 = vld [vmem:[%s4 + $0xf4] sm:$0xf]
    %v1255 = vld [vmem:[%s4 + $0xf8] sm:$0xf]
    %v1256 = vld [vmem:[%s4 + $0xfc] sm:$0xf]
    %v1257 = vld [vmem:[%s4 + $0x100] sm:$0xf]
    %v1258 = vld [vmem:[%s4 + $0x104] sm:$0xf]
    %v1259 = vld [vmem:[%s4 + $0x108] sm:$0xf]
    %v1260 = vld [vmem:[%s4 + $0x10c] sm:$0xf]
    %v1261 = vld [vmem:[%s4 + $0x110] sm:$0xf]
    %v1262 = vld [vmem:[%s4 + $0x114] sm:$0xf]
    %v1263 = vld [vmem:[%s4 + $0x118] sm:$0xf]
    %v1264 = vld [vmem:[%s4 + $0x11c] sm:$0xf]
    %v1265 = vld [vmem:[%s4 + $0x120] sm:$0xf]
    %v1266 = vld [vmem:[%s4 + $0x124] sm:$0xf]
    %v1267 = vld [vmem:[%s4 + $0x128] sm:$0xf]
    %v1268 = vld [vmem:[%s4 + $0x12c] sm:$0xf]
    %v1269 = vld [vmem:[%s4 + $0x130] sm:$0xf]
    %v1270 = vld [vmem:[%s4 + $0x134] sm:$0xf]
    %v1271 = vld [vmem:[%s4 + $0x138] sm:$0xf]
    %v1272 = vld [vmem:[%s4 + $0x13c] sm:$0xf]
    %v1273 = vld [vmem:[%s4 + $0x140] sm:$0xf]
    %v1274 = vld [vmem:[%s4 + $0x144] sm:$0xf]
    %v1275 = vld [vmem:[%s4 + $0x148] sm:$0xf]
    %v1276 = vld [vmem:[%s4 + $0x14c] sm:$0xf]
    %v1277 = vld [vmem:[%s4 + $0x150] sm:$0xf]
    %v1278 = vld [vmem:[%s4 + $0x154] sm:$0xf]
    %v1279 = vld [vmem:[%s4 + $0x158] sm:$0xf]
    %v1280 = vld [vmem:[%s4 + $0x15c] sm:$0xf]
    %v1281 = vld [vmem:[%s4 + $0x160] sm:$0xf]
    %v1282 = vld [vmem:[%s4 + $0x164] sm:$0xf]
    %v1283 = vld [vmem:[%s4 + $0x168] sm:$0xf]
    %v1284 = vld [vmem:[%s4 + $0x16c] sm:$0xf]
    %v1285 = vld [vmem:[%s4 + $0x170] sm:$0xf]
    %v1286 = vld [vmem:[%s4 + $0x174] sm:$0xf]
    %v1287 = vld [vmem:[%s4 + $0x178] sm:$0xf]
    %v1288 = vld [vmem:[%s4 + $0x17c] sm:$0xf]
    %v1289 = vld [vmem:[%s4 + $0x180] sm:$0xf]
    %v1290 = vld [vmem:[%s4 + $0x184] sm:$0xf]
    %v1291 = vld [vmem:[%s4 + $0x188] sm:$0xf]
    %v1292 = vld [vmem:[%s4 + $0x18c] sm:$0xf]
    %v1293 = vld [vmem:[%s4 + $0x190] sm:$0xf]
    %v1294 = vld [vmem:[%s4 + $0x194] sm:$0xf]
    %v1295 = vld [vmem:[%s4 + $0x198] sm:$0xf]
    %v1296 = vld [vmem:[%s4 + $0x19c] sm:$0xf]
    %v1297 = vld [vmem:[%s4 + $0x1a0] sm:$0xf]
    %v1298 = vld [vmem:[%s4 + $0x1a4] sm:$0xf]
    %v1299 = vld [vmem:[%s4 + $0x1a8] sm:$0xf]
    %v1300 = vld [vmem:[%s4 + $0x1ac] sm:$0xf]
    %v1301 = vld [vmem:[%s4 + $0x1b0] sm:$0xf]
    %v1302 = vld [vmem:[%s4 + $0x1b4] sm:$0xf]
    %v1303 = vld [vmem:[%s4 + $0x1b8] sm:$0xf]
    %v1304 = vld [vmem:[%s4 + $0x1bc] sm:$0xf]
    %v1305 = vld [vmem:[%s4 + $0x1c0] sm:$0xf]
    %v1306 = vld [vmem:[%s4 + $0x1c4] sm:$0xf]
    %v1307 = vld [vmem:[%s4 + $0x1c8] sm:$0xf]
    %v1308 = vld [vmem:[%s4 + $0x1cc] sm:$0xf]
    %v1309 = vld [vmem:[%s4 + $0x1d0] sm:$0xf]
    %v1310 = vld [vmem:[%s4 + $0x1d4] sm:$0xf]
    %v1311 = vld [vmem:[%s4 + $0x1d8] sm:$0xf]
    %v1312 = vld [vmem:[%s4 + $0x1dc] sm:$0xf]
    %v1313 = vld [vmem:[%s4 + $0x1e0] sm:$0xf]
    %v1314 = vld [vmem:[%s4 + $0x1e4] sm:$0xf]
    %v1315 = vld [vmem:[%s4 + $0x1e8] sm:$0xf]
    %v1316 = vld [vmem:[%s4 + $0x1ec] sm:$0xf]
    %v1317 = vld [vmem:[%s4 + $0x1f0] sm:$0xf]
    %v1318 = vld [vmem:[%s4 + $0x1f4] sm:$0xf]
    %v1319 = vld [vmem:[%s4 + $0x1f8] sm:$0xf]
    %v1320 = vld [vmem:[%s4 + $0x1fc] sm:$0xf]
    %v1321 = vld [vmem:[%s4 + $0x200] sm:$0xf]
    %v1322 = vld [vmem:[%s4 + $0x204] sm:$0xf]
    %v1323 = vld [vmem:[%s4 + $0x208] sm:$0xf]
    %v1324 = vld [vmem:[%s4 + $0x20c] sm:$0xf]
    %v1325 = vld [vmem:[%s4 + $0x210] sm:$0xf]
    %v1326 = vld [vmem:[%s4 + $0x214] sm:$0xf]
    %v1327 = vld [vmem:[%s4 + $0x218] sm:$0xf]
    %v1328 = vld [vmem:[%s4 + $0x21c] sm:$0xf]
    %v1329 = vld [vmem:[%s4 + $0x220] sm:$0xf]
    %v1330 = vld [vmem:[%s4 + $0x224] sm:$0xf]
    %v1331 = vld [vmem:[%s4 + $0x228] sm:$0xf]
    %v1332 = vld [vmem:[%s4 + $0x22c] sm:$0xf]
    %v1333 = vld [vmem:[%s4 + $0x230] sm:$0xf]
    %v1334 = vld [vmem:[%s4 + $0x234] sm:$0xf]
    %v1335 = vld [vmem:[%s4 + $0x238] sm:$0xf]
    %v1336 = vld [vmem:[%s4 + $0x23c] sm:$0xf]
    %v1337 = vld [vmem:[%s4 + $0x240] sm:$0xf]
    %v1338 = vld [vmem:[%s4 + $0x244] sm:$0xf]
    %v1339 = vld [vmem:[%s4 + $0x248] sm:$0xf]
    %v1340 = vld [vmem:[%s4 + $0x24c] sm:$0xf]
    %v1341 = vld [vmem:[%s4 + $0x250] sm:$0xf]
    %v1342 = vld [vmem:[%s4 + $0x254] sm:$0xf]
    %v1343 = vld [vmem:[%s4 + $0x258] sm:$0xf]
    %v1344 = vld [vmem:[%s4 + $0x25c] sm:$0xf]
    %v1345 = vld [vmem:[%s4 + $0x260] sm:$0xf]
    %v1346 = vld [vmem:[%s4 + $0x264] sm:$0xf]
    %v1347 = vld [vmem:[%s4 + $0x268] sm:$0xf]
    %v1348 = vld [vmem:[%s4 + $0x26c] sm:$0xf]
    %v1349 = vld [vmem:[%s4 + $0x270] sm:$0xf]
    %v1350 = vld [vmem:[%s4 + $0x274] sm:$0xf]
    %v1351 = vld [vmem:[%s4 + $0x278] sm:$0xf]
    %v1352 = vld [vmem:[%s4 + $0x27c] sm:$0xf]
    %v1353 = vld [vmem:[%s4 + $0x280] sm:$0xf]
    %v1354 = vld [vmem:[%s4 + $0x284] sm:$0xf]
    %v1355 = vld [vmem:[%s4 + $0x288] sm:$0xf]
    %v1356 = vld [vmem:[%s4 + $0x28c] sm:$0xf]
    %v1357 = vld [vmem:[%s4 + $0x290] sm:$0xf]
    %v1358 = vld [vmem:[%s4 + $0x294] sm:$0xf]
    %v1359 = vld [vmem:[%s4 + $0x298] sm:$0xf]
    %v1360 = vld [vmem:[%s4 + $0x29c] sm:$0xf]
    %v1361 = vld [vmem:[%s4 + $0x2a0] sm:$0xf]
    %v1362 = vld [vmem:[%s4 + $0x2a4] sm:$0xf]
    %v1363 = vld [vmem:[%s4 + $0x2a8] sm:$0xf]
    %v1364 = vld [vmem:[%s4 + $0x2ac] sm:$0xf]
    %v1365 = vld [vmem:[%s4 + $0x2b0] sm:$0xf]
    %v1366 = vld [vmem:[%s4 + $0x2b4] sm:$0xf]
    %v1367 = vld [vmem:[%s4 + $0x2b8] sm:$0xf]
    %v1368 = vld [vmem:[%s4 + $0x2bc] sm:$0xf]
    %v1369 = vld [vmem:[%s4 + $0x2c0] sm:$0xf]
    %v1370 = vld [vmem:[%s4 + $0x2c4] sm:$0xf]
    %v1371 = vld [vmem:[%s4 + $0x2c8] sm:$0xf]
    %v1372 = vld [vmem:[%s4 + $0x2cc] sm:$0xf]
    %v1373 = vld [vmem:[%s4 + $0x2d0] sm:$0xf]
    %v1374 = vld [vmem:[%s4 + $0x2d4] sm:$0xf]
    %v1375 = vld [vmem:[%s4 + $0x2d8] sm:$0xf]
    %v1376 = vld [vmem:[%s4 + $0x2dc] sm:$0xf]
    %v1377 = vld [vmem:[%s4 + $0x2e0] sm:$0xf]
    %v1378 = vld [vmem:[%s4 + $0x2e4] sm:$0xf]
    %v1379 = vld [vmem:[%s4 + $0x2e8] sm:$0xf]
    %v1380 = vld [vmem:[%s4 + $0x2ec] sm:$0xf]
    %v1381 = vld [vmem:[%s4 + $0x2f0] sm:$0xf]
    %v1382 = vld [vmem:[%s4 + $0x2f4] sm:$0xf]
    %v1383 = vld [vmem:[%s4 + $0x2f8] sm:$0xf]
    %v1384 = vld [vmem:[%s4 + $0x2fc] sm:$0xf]
    %v1385 = vld [vmem:[%s4 + $0x300] sm:$0xf]
    %v1386 = vld [vmem:[%s4 + $0x304] sm:$0xf]
    %v1387 = vld [vmem:[%s4 + $0x308] sm:$0xf]
    %v1388 = vld [vmem:[%s4 + $0x30c] sm:$0xf]
    %v1389 = vld [vmem:[%s4 + $0x310] sm:$0xf]
    %v1390 = vld [vmem:[%s4 + $0x314] sm:$0xf]
    %v1391 = vld [vmem:[%s4 + $0x318] sm:$0xf]
    %v1392 = vld [vmem:[%s4 + $0x31c] sm:$0xf]
    %v1393 = vld [vmem:[%s4 + $0x320] sm:$0xf]
    %v1394 = vld [vmem:[%s4 + $0x324] sm:$0xf]
    %v1395 = vld [vmem:[%s4 + $0x328] sm:$0xf]
    %v1396 = vld [vmem:[%s4 + $0x32c] sm:$0xf]
    %v1397 = vld [vmem:[%s4 + $0x330] sm:$0xf]
    %v1398 = vld [vmem:[%s4 + $0x334] sm:$0xf]
    %v1399 = vld [vmem:[%s4 + $0x338] sm:$0xf]
    %v1400 = vld [vmem:[%s4 + $0x33c] sm:$0xf]
    %v1401 = vld [vmem:[%s4 + $0x340] sm:$0xf]
    %v1402 = vld [vmem:[%s4 + $0x344] sm:$0xf]
    %v1403 = vld [vmem:[%s4 + $0x348] sm:$0xf]
    %v1404 = vld [vmem:[%s4 + $0x34c] sm:$0xf]
    %v1405 = vld [vmem:[%s4 + $0x350] sm:$0xf]
    %v1406 = vld [vmem:[%s4 + $0x354] sm:$0xf]
    %v1407 = vld [vmem:[%s4 + $0x358] sm:$0xf]
    %v1408 = vld [vmem:[%s4 + $0x35c] sm:$0xf]
    %v1409 = vld [vmem:[%s4 + $0x360] sm:$0xf]
    %v1410 = vld [vmem:[%s4 + $0x364] sm:$0xf]
    %v1411 = vld [vmem:[%s4 + $0x368] sm:$0xf]
    %v1412 = vld [vmem:[%s4 + $0x36c] sm:$0xf]
    %v1413 = vld [vmem:[%s4 + $0x370] sm:$0xf]
    %v1414 = vld [vmem:[%s4 + $0x374] sm:$0xf]
    %v1415 = vld [vmem:[%s4 + $0x378] sm:$0xf]
    %v1416 = vld [vmem:[%s4 + $0x37c] sm:$0xf]
    %v1417 = vld [vmem:[%s4 + $0x380] sm:$0xf]
    %v1418 = vld [vmem:[%s4 + $0x384] sm:$0xf]
    %v1419 = vld [vmem:[%s4 + $0x388] sm:$0xf]
    %v1420 = vld [vmem:[%s4 + $0x38c] sm:$0xf]
    %v1421 = vld [vmem:[%s4 + $0x390] sm:$0xf]
    %v1422 = vld [vmem:[%s4 + $0x394] sm:$0xf]
    %v1423 = vld [vmem:[%s4 + $0x398] sm:$0xf]
    %v1424 = vld [vmem:[%s4 + $0x39c] sm:$0xf]
    %v1425 = vld [vmem:[%s4 + $0x3a0] sm:$0xf]
    %v1426 = vld [vmem:[%s4 + $0x3a4] sm:$0xf]
    %v1427 = vld [vmem:[%s4 + $0x3a8] sm:$0xf]
    %v1428 = vld [vmem:[%s4 + $0x3ac] sm:$0xf]
    %v1429 = vld [vmem:[%s4 + $0x3b0] sm:$0xf]
    %v1430 = vld [vmem:[%s4 + $0x3b4] sm:$0xf]
    %v1431 = vld [vmem:[%s4 + $0x3b8] sm:$0xf]
    %v1432 = vld [vmem:[%s4 + $0x3bc] sm:$0xf]
    %v1433 = vld [vmem:[%s4 + $0x3c0] sm:$0xf]
    %v1434 = vld [vmem:[%s4 + $0x3c4] sm:$0xf]
    %v1435 = vld [vmem:[%s4 + $0x3c8] sm:$0xf]
    %v1436 = vld [vmem:[%s4 + $0x3cc] sm:$0xf]
    %v1437 = vld [vmem:[%s4 + $0x3d0] sm:$0xf]
    %v1438 = vld [vmem:[%s4 + $0x3d4] sm:$0xf]
    %v1439 = vld [vmem:[%s4 + $0x3d8] sm:$0xf]
    %v1440 = vld [vmem:[%s4 + $0x3dc] sm:$0xf]
    %v1441 = vld [vmem:[%s4 + $0x3e0] sm:$0xf]
    %v1442 = vld [vmem:[%s4 + $0x3e4] sm:$0xf]
    %v1443 = vld [vmem:[%s4 + $0x3e8] sm:$0xf]
    %v1444 = vld [vmem:[%s4 + $0x3ec] sm:$0xf]
    %v1445 = vld [vmem:[%s4 + $0x3f0] sm:$0xf]
    %v1446 = vld [vmem:[%s4 + $0x3f4] sm:$0xf]
    %v1447 = vld [vmem:[%s4 + $0x3f8] sm:$0xf]
    %v1448 = vld [vmem:[%s4 + $0x3fc] sm:$0xf]
    %v1449 = vlaneseq
    %v1450 = vshrl.u32 %v1449, 7
    %v1451 = vsub.s32 0, %v1450
    %v1452 = vrot.slane %v106, %v1451
    %v1709 = vunpack.c.l.b16 %v1193
    %v1710 = vunpack.c.l.b16 %v1194
    %v1711 = vunpack.c.l.b16 %v1195
    %v1712 = vunpack.c.l.b16 %v1196
    %v1713 = vunpack.c.l.b16 %v1197
    %v1714 = vunpack.c.l.b16 %v1198
    %v1715 = vunpack.c.l.b16 %v1199
    %v1716 = vunpack.c.l.b16 %v1200
    %v1717 = vunpack.c.l.b16 %v1201
    %v1718 = vunpack.c.l.b16 %v1202
    %v1719 = vunpack.c.l.b16 %v1203
    %v1720 = vunpack.c.l.b16 %v1204
    %v1721 = vunpack.c.l.b16 %v1205
    %v1722 = vunpack.c.l.b16 %v1206
    %v1723 = vunpack.c.l.b16 %v1207
    %v1724 = vunpack.c.l.b16 %v1208
    %v1725 = vunpack.c.l.b16 %v1209
    %v1726 = vunpack.c.l.b16 %v1210
    %v1727 = vunpack.c.l.b16 %v1211
    %v1728 = vunpack.c.l.b16 %v1212
    %v1729 = vunpack.c.l.b16 %v1213
    %v1730 = vunpack.c.l.b16 %v1214
    %v1731 = vunpack.c.l.b16 %v1215
    %v1732 = vunpack.c.l.b16 %v1216
    %v1733 = vunpack.c.l.b16 %v1217
    %v1734 = vunpack.c.l.b16 %v1218
    %v1735 = vunpack.c.l.b16 %v1219
    %v1736 = vunpack.c.l.b16 %v1220
    %v1737 = vunpack.c.l.b16 %v1221
    %v1738 = vunpack.c.l.b16 %v1222
    %v1739 = vunpack.c.l.b16 %v1223
    %v1740 = vunpack.c.l.b16 %v1224
    %v1741 = vunpack.c.l.b16 %v1225
    %v1742 = vunpack.c.l.b16 %v1226
    %v1743 = vunpack.c.l.b16 %v1227
    %v1744 = vunpack.c.l.b16 %v1228
    %v1745 = vunpack.c.l.b16 %v1229
    %v1746 = vunpack.c.l.b16 %v1230
    %v1747 = vunpack.c.l.b16 %v1231
    %v1748 = vunpack.c.l.b16 %v1232
    %v1749 = vunpack.c.l.b16 %v1233
    %v1750 = vunpack.c.l.b16 %v1234
    %v1751 = vunpack.c.l.b16 %v1235
    %v1752 = vunpack.c.l.b16 %v1236
    %v1753 = vunpack.c.l.b16 %v1237
    %v1754 = vunpack.c.l.b16 %v1238
    %v1755 = vunpack.c.l.b16 %v1239
    %v1756 = vunpack.c.l.b16 %v1240
    %v1757 = vunpack.c.l.b16 %v1241
    %v1758 = vunpack.c.l.b16 %v1242
    %v1759 = vunpack.c.l.b16 %v1243
    %v1760 = vunpack.c.l.b16 %v1244
    %v1761 = vunpack.c.l.b16 %v1245
    %v1762 = vunpack.c.l.b16 %v1246
    %v1763 = vunpack.c.l.b16 %v1247
    %v1764 = vunpack.c.l.b16 %v1248
    %v1765 = vunpack.c.l.b16 %v1249
    %v1766 = vunpack.c.l.b16 %v1250
    %v1767 = vunpack.c.l.b16 %v1251
    %v1768 = vunpack.c.l.b16 %v1252
    %v1769 = vunpack.c.l.b16 %v1253
    %v1770 = vunpack.c.l.b16 %v1254
    %v1771 = vunpack.c.l.b16 %v1255
    %v1772 = vunpack.c.l.b16 %v1256
    %v1773 = vunpack.c.l.b16 %v1257
    %v1774 = vunpack.c.l.b16 %v1258
    %v1775 = vunpack.c.l.b16 %v1259
    %v1776 = vunpack.c.l.b16 %v1260
    %v1777 = vunpack.c.l.b16 %v1261
    %v1778 = vunpack.c.l.b16 %v1262
    %v1779 = vunpack.c.l.b16 %v1263
    %v1780 = vunpack.c.l.b16 %v1264
    %v1781 = vunpack.c.l.b16 %v1265
    %v1782 = vunpack.c.l.b16 %v1266
    %v1783 = vunpack.c.l.b16 %v1267
    %v1784 = vunpack.c.l.b16 %v1268
    %v1785 = vunpack.c.l.b16 %v1269
    %v1786 = vunpack.c.l.b16 %v1270
    %v1787 = vunpack.c.l.b16 %v1271
    %v1788 = vunpack.c.l.b16 %v1272
    %v1789 = vunpack.c.l.b16 %v1273
    %v1790 = vunpack.c.l.b16 %v1274
    %v1791 = vunpack.c.l.b16 %v1275
    %v1792 = vunpack.c.l.b16 %v1276
    %v1793 = vunpack.c.l.b16 %v1277
    %v1794 = vunpack.c.l.b16 %v1278
    %v1795 = vunpack.c.l.b16 %v1279
    %v1796 = vunpack.c.l.b16 %v1280
    %v1797 = vunpack.c.l.b16 %v1281
    %v1798 = vunpack.c.l.b16 %v1282
    %v1799 = vunpack.c.l.b16 %v1283
    %v1800 = vunpack.c.l.b16 %v1284
    %v1801 = vunpack.c.l.b16 %v1285
    %v1802 = vunpack.c.l.b16 %v1286
    %v1803 = vunpack.c.l.b16 %v1287
    %v1804 = vunpack.c.l.b16 %v1288
    %v1805 = vunpack.c.l.b16 %v1289
    %v1806 = vunpack.c.l.b16 %v1290
    %v1807 = vunpack.c.l.b16 %v1291
    %v1808 = vunpack.c.l.b16 %v1292
    %v1809 = vunpack.c.l.b16 %v1293
    %v1810 = vunpack.c.l.b16 %v1294
    %v1811 = vunpack.c.l.b16 %v1295
    %v1812 = vunpack.c.l.b16 %v1296
    %v1813 = vunpack.c.l.b16 %v1297
    %v1814 = vunpack.c.l.b16 %v1298
    %v1815 = vunpack.c.l.b16 %v1299
    %v1816 = vunpack.c.l.b16 %v1300
    %v1817 = vunpack.c.l.b16 %v1301
    %v1818 = vunpack.c.l.b16 %v1302
    %v1819 = vunpack.c.l.b16 %v1303
    %v1820 = vunpack.c.l.b16 %v1304
    %v1821 = vunpack.c.l.b16 %v1305
    %v1822 = vunpack.c.l.b16 %v1306
    %v1823 = vunpack.c.l.b16 %v1307
    %v1824 = vunpack.c.l.b16 %v1308
    %v1825 = vunpack.c.l.b16 %v1309
    %v1826 = vunpack.c.l.b16 %v1310
    %v1827 = vunpack.c.l.b16 %v1311
    %v1828 = vunpack.c.l.b16 %v1312
    %v1829 = vunpack.c.l.b16 %v1313
    %v1830 = vunpack.c.l.b16 %v1314
    %v1831 = vunpack.c.l.b16 %v1315
    %v1832 = vunpack.c.l.b16 %v1316
    %v1833 = vunpack.c.l.b16 %v1317
    %v1834 = vunpack.c.l.b16 %v1318
    %v1835 = vunpack.c.l.b16 %v1319
    %v1836 = vunpack.c.l.b16 %v1320
    %v1837 = vunpack.c.l.b16 %v1321
    %v1838 = vunpack.c.l.b16 %v1322
    %v1839 = vunpack.c.l.b16 %v1323
    %v1840 = vunpack.c.l.b16 %v1324
    %v1841 = vunpack.c.l.b16 %v1325
    %v1842 = vunpack.c.l.b16 %v1326
    %v1843 = vunpack.c.l.b16 %v1327
    %v1844 = vunpack.c.l.b16 %v1328
    %v1845 = vunpack.c.l.b16 %v1329
    %v1846 = vunpack.c.l.b16 %v1330
    %v1847 = vunpack.c.l.b16 %v1331
    %v1848 = vunpack.c.l.b16 %v1332
    %v1849 = vunpack.c.l.b16 %v1333
    %v1850 = vunpack.c.l.b16 %v1334
    %v1851 = vunpack.c.l.b16 %v1335
    %v1852 = vunpack.c.l.b16 %v1336
    %v1853 = vunpack.c.l.b16 %v1337
    %v1854 = vunpack.c.l.b16 %v1338
    %v1855 = vunpack.c.l.b16 %v1339
    %v1856 = vunpack.c.l.b16 %v1340
    %v1857 = vunpack.c.l.b16 %v1341
    %v1858 = vunpack.c.l.b16 %v1342
    %v1859 = vunpack.c.l.b16 %v1343
    %v1860 = vunpack.c.l.b16 %v1344
    %v1861 = vunpack.c.l.b16 %v1345
    %v1862 = vunpack.c.l.b16 %v1346
    %v1863 = vunpack.c.l.b16 %v1347
    %v1864 = vunpack.c.l.b16 %v1348
    %v1865 = vunpack.c.l.b16 %v1349
    %v1866 = vunpack.c.l.b16 %v1350
    %v1867 = vunpack.c.l.b16 %v1351
    %v1868 = vunpack.c.l.b16 %v1352
    %v1869 = vunpack.c.l.b16 %v1353
    %v1870 = vunpack.c.l.b16 %v1354
    %v1871 = vunpack.c.l.b16 %v1355
    %v1872 = vunpack.c.l.b16 %v1356
    %v1873 = vunpack.c.l.b16 %v1357
    %v1874 = vunpack.c.l.b16 %v1358
    %v1875 = vunpack.c.l.b16 %v1359
    %v1876 = vunpack.c.l.b16 %v1360
    %v1877 = vunpack.c.l.b16 %v1361
    %v1878 = vunpack.c.l.b16 %v1362
    %v1879 = vunpack.c.l.b16 %v1363
    %v1880 = vunpack.c.l.b16 %v1364
    %v1881 = vunpack.c.l.b16 %v1365
    %v1882 = vunpack.c.l.b16 %v1366
    %v1883 = vunpack.c.l.b16 %v1367
    %v1884 = vunpack.c.l.b16 %v1368
    %v1885 = vunpack.c.l.b16 %v1369
    %v1886 = vunpack.c.l.b16 %v1370
    %v1887 = vunpack.c.l.b16 %v1371
    %v1888 = vunpack.c.l.b16 %v1372
    %v1889 = vunpack.c.l.b16 %v1373
    %v1890 = vunpack.c.l.b16 %v1374
    %v1891 = vunpack.c.l.b16 %v1375
    %v1892 = vunpack.c.l.b16 %v1376
    %v1893 = vunpack.c.l.b16 %v1377
    %v1894 = vunpack.c.l.b16 %v1378
    %v1895 = vunpack.c.l.b16 %v1379
    %v1896 = vunpack.c.l.b16 %v1380
    %v1897 = vunpack.c.l.b16 %v1381
    %v1898 = vunpack.c.l.b16 %v1382
    %v1899 = vunpack.c.l.b16 %v1383
    %v1900 = vunpack.c.l.b16 %v1384
    %v1901 = vunpack.c.l.b16 %v1385
    %v1902 = vunpack.c.l.b16 %v1386
    %v1903 = vunpack.c.l.b16 %v1387
    %v1904 = vunpack.c.l.b16 %v1388
    %v1905 = vunpack.c.l.b16 %v1389
    %v1906 = vunpack.c.l.b16 %v1390
    %v1907 = vunpack.c.l.b16 %v1391
    %v1908 = vunpack.c.l.b16 %v1392
    %v1909 = vunpack.c.l.b16 %v1393
    %v1910 = vunpack.c.l.b16 %v1394
    %v1911 = vunpack.c.l.b16 %v1395
    %v1912 = vunpack.c.l.b16 %v1396
    %v1913 = vunpack.c.l.b16 %v1397
    %v1914 = vunpack.c.l.b16 %v1398
    %v1915 = vunpack.c.l.b16 %v1399
    %v1916 = vunpack.c.l.b16 %v1400
    %v1917 = vunpack.c.l.b16 %v1401
    %v1918 = vunpack.c.l.b16 %v1402
    %v1919 = vunpack.c.l.b16 %v1403
    %v1920 = vunpack.c.l.b16 %v1404
    %v1921 = vunpack.c.l.b16 %v1405
    %v1922 = vunpack.c.l.b16 %v1406
    %v1923 = vunpack.c.l.b16 %v1407
    %v1924 = vunpack.c.l.b16 %v1408
    %v1925 = vunpack.c.l.b16 %v1409
    %v1926 = vunpack.c.l.b16 %v1410
    %v1927 = vunpack.c.l.b16 %v1411
    %v1928 = vunpack.c.l.b16 %v1412
    %v1929 = vunpack.c.l.b16 %v1413
    %v1930 = vunpack.c.l.b16 %v1414
    %v1931 = vunpack.c.l.b16 %v1415
    %v1932 = vunpack.c.l.b16 %v1416
    %v1933 = vunpack.c.l.b16 %v1417
    %v1934 = vunpack.c.l.b16 %v1418
    %v1935 = vunpack.c.l.b16 %v1419
    %v1936 = vunpack.c.l.b16 %v1420
    %v1937 = vunpack.c.l.b16 %v1421
    %v1938 = vunpack.c.l.b16 %v1422
    %v1939 = vunpack.c.l.b16 %v1423
    %v1940 = vunpack.c.l.b16 %v1424
    %v1941 = vunpack.c.l.b16 %v1425
    %v1942 = vunpack.c.l.b16 %v1426
    %v1943 = vunpack.c.l.b16 %v1427
    %v1944 = vunpack.c.l.b16 %v1428
    %v1945 = vunpack.c.l.b16 %v1429
    %v1946 = vunpack.c.l.b16 %v1430
    %v1947 = vunpack.c.l.b16 %v1431
    %v1948 = vunpack.c.l.b16 %v1432
    %v1949 = vunpack.c.l.b16 %v1433
    %v1950 = vunpack.c.l.b16 %v1434
    %v1951 = vunpack.c.l.b16 %v1435
    %v1952 = vunpack.c.l.b16 %v1436
    %v1953 = vunpack.c.l.b16 %v1437
    %v1954 = vunpack.c.l.b16 %v1438
    %v1955 = vunpack.c.l.b16 %v1439
    %v1956 = vunpack.c.l.b16 %v1440
    %v1957 = vunpack.c.l.b16 %v1441
    %v1958 = vunpack.c.l.b16 %v1442
    %v1959 = vunpack.c.l.b16 %v1443
    %v1960 = vunpack.c.l.b16 %v1444
    %v1961 = vunpack.c.l.b16 %v1445
    %v1962 = vunpack.c.l.b16 %v1446
    %v1963 = vunpack.c.l.b16 %v1447
    %v1964 = vunpack.c.l.b16 %v1448
    %v1965 = vpack.c.b16 %v1710, %v1709
    %v1966 = vpack.c.b16 %v1712, %v1711
    %v1967 = vpack.c.b16 %v1714, %v1713
    %v1968 = vpack.c.b16 %v1716, %v1715
    %v1969 = vpack.c.b16 %v1718, %v1717
    %v1970 = vpack.c.b16 %v1720, %v1719
    %v1971 = vpack.c.b16 %v1722, %v1721
    %v1972 = vpack.c.b16 %v1724, %v1723
    %v1973 = vpack.c.b16 %v1726, %v1725
    %v1974 = vpack.c.b16 %v1728, %v1727
    %v1975 = vpack.c.b16 %v1730, %v1729
    %v1976 = vpack.c.b16 %v1732, %v1731
    %v1977 = vpack.c.b16 %v1734, %v1733
    %v1978 = vpack.c.b16 %v1736, %v1735
    %v1979 = vpack.c.b16 %v1738, %v1737
    %v1980 = vpack.c.b16 %v1740, %v1739
    %v1981 = vpack.c.b16 %v1742, %v1741
    %v1982 = vpack.c.b16 %v1744, %v1743
    %v1983 = vpack.c.b16 %v1746, %v1745
    %v1984 = vpack.c.b16 %v1748, %v1747
    %v1985 = vpack.c.b16 %v1750, %v1749
    %v1986 = vpack.c.b16 %v1752, %v1751
    %v1987 = vpack.c.b16 %v1754, %v1753
    %v1988 = vpack.c.b16 %v1756, %v1755
    %v1989 = vpack.c.b16 %v1758, %v1757
    %v1990 = vpack.c.b16 %v1760, %v1759
    %v1991 = vpack.c.b16 %v1762, %v1761
    %v1992 = vpack.c.b16 %v1764, %v1763
    %v1993 = vpack.c.b16 %v1766, %v1765
    %v1994 = vpack.c.b16 %v1768, %v1767
    %v1995 = vpack.c.b16 %v1770, %v1769
    %v1996 = vpack.c.b16 %v1772, %v1771
    %v1997 = vpack.c.b16 %v1774, %v1773
    %v1998 = vpack.c.b16 %v1776, %v1775
    %v1999 = vpack.c.b16 %v1778, %v1777
    %v2000 = vpack.c.b16 %v1780, %v1779
    %v2001 = vpack.c.b16 %v1782, %v1781
    %v2002 = vpack.c.b16 %v1784, %v1783
    %v2003 = vpack.c.b16 %v1786, %v1785
    %v2004 = vpack.c.b16 %v1788, %v1787
    %v2005 = vpack.c.b16 %v1790, %v1789
    %v2006 = vpack.c.b16 %v1792, %v1791
    %v2007 = vpack.c.b16 %v1794, %v1793
    %v2008 = vpack.c.b16 %v1796, %v1795
    %v2009 = vpack.c.b16 %v1798, %v1797
    %v2010 = vpack.c.b16 %v1800, %v1799
    %v2011 = vpack.c.b16 %v1802, %v1801
    %v2012 = vpack.c.b16 %v1804, %v1803
    %v2013 = vpack.c.b16 %v1806, %v1805
    %v2014 = vpack.c.b16 %v1808, %v1807
    %v2015 = vpack.c.b16 %v1810, %v1809
    %v2016 = vpack.c.b16 %v1812, %v1811
    %v2017 = vpack.c.b16 %v1814, %v1813
    %v2018 = vpack.c.b16 %v1816, %v1815
    %v2019 = vpack.c.b16 %v1818, %v1817
    %v2020 = vpack.c.b16 %v1820, %v1819
    %v2021 = vpack.c.b16 %v1822, %v1821
    %v2022 = vpack.c.b16 %v1824, %v1823
    %v2023 = vpack.c.b16 %v1826, %v1825
    %v2024 = vpack.c.b16 %v1828, %v1827
    %v2025 = vpack.c.b16 %v1830, %v1829
    %v2026 = vpack.c.b16 %v1832, %v1831
    %v2027 = vpack.c.b16 %v1834, %v1833
    %v2028 = vpack.c.b16 %v1836, %v1835
    %v2029 = vpack.c.b16 %v1838, %v1837
    %v2030 = vpack.c.b16 %v1840, %v1839
    %v2031 = vpack.c.b16 %v1842, %v1841
    %v2032 = vpack.c.b16 %v1844, %v1843
    %v2033 = vpack.c.b16 %v1846, %v1845
    %v2034 = vpack.c.b16 %v1848, %v1847
    %v2035 = vpack.c.b16 %v1850, %v1849
    %v2036 = vpack.c.b16 %v1852, %v1851
    %v2037 = vpack.c.b16 %v1854, %v1853
    %v2038 = vpack.c.b16 %v1856, %v1855
    %v2039 = vpack.c.b16 %v1858, %v1857
    %v2040 = vpack.c.b16 %v1860, %v1859
    %v2041 = vpack.c.b16 %v1862, %v1861
    %v2042 = vpack.c.b16 %v1864, %v1863
    %v2043 = vpack.c.b16 %v1866, %v1865
    %v2044 = vpack.c.b16 %v1868, %v1867
    %v2045 = vpack.c.b16 %v1870, %v1869
    %v2046 = vpack.c.b16 %v1872, %v1871
    %v2047 = vpack.c.b16 %v1874, %v1873
    %v2048 = vpack.c.b16 %v1876, %v1875
    %v2049 = vpack.c.b16 %v1878, %v1877
    %v2050 = vpack.c.b16 %v1880, %v1879
    %v2051 = vpack.c.b16 %v1882, %v1881
    %v2052 = vpack.c.b16 %v1884, %v1883
    %v2053 = vpack.c.b16 %v1886, %v1885
    %v2054 = vpack.c.b16 %v1888, %v1887
    %v2055 = vpack.c.b16 %v1890, %v1889
    %v2056 = vpack.c.b16 %v1892, %v1891
    %v2057 = vpack.c.b16 %v1894, %v1893
    %v2058 = vpack.c.b16 %v1896, %v1895
    %v2059 = vpack.c.b16 %v1898, %v1897
    %v2060 = vpack.c.b16 %v1900, %v1899
    %v2061 = vpack.c.b16 %v1902, %v1901
    %v2062 = vpack.c.b16 %v1904, %v1903
    %v2063 = vpack.c.b16 %v1906, %v1905
    %v2064 = vpack.c.b16 %v1908, %v1907
    %v2065 = vpack.c.b16 %v1910, %v1909
    %v2066 = vpack.c.b16 %v1912, %v1911
    %v2067 = vpack.c.b16 %v1914, %v1913
    %v2068 = vpack.c.b16 %v1916, %v1915
    %v2069 = vpack.c.b16 %v1918, %v1917
    %v2070 = vpack.c.b16 %v1920, %v1919
    %v2071 = vpack.c.b16 %v1922, %v1921
    %v2072 = vpack.c.b16 %v1924, %v1923
    %v2073 = vpack.c.b16 %v1926, %v1925
    %v2074 = vpack.c.b16 %v1928, %v1927
    %v2075 = vpack.c.b16 %v1930, %v1929
    %v2076 = vpack.c.b16 %v1932, %v1931
    %v2077 = vpack.c.b16 %v1934, %v1933
    %v2078 = vpack.c.b16 %v1936, %v1935
    %v2079 = vpack.c.b16 %v1938, %v1937
    %v2080 = vpack.c.b16 %v1940, %v1939
    %v2081 = vpack.c.b16 %v1942, %v1941
    %v2082 = vpack.c.b16 %v1944, %v1943
    %v2083 = vpack.c.b16 %v1946, %v1945
    %v2084 = vpack.c.b16 %v1948, %v1947
    %v2085 = vpack.c.b16 %v1950, %v1949
    %v2086 = vpack.c.b16 %v1952, %v1951
    %v2087 = vpack.c.b16 %v1954, %v1953
    %v2088 = vpack.c.b16 %v1956, %v1955
    %v2089 = vpack.c.b16 %v1958, %v1957
    %v2090 = vpack.c.b16 %v1960, %v1959
    %v2091 = vpack.c.b16 %v1962, %v1961
    %v2092 = vpack.c.b16 %v1964, %v1963
    %2221 = vmatprep.subr.bf16.mxu0 0
    %2222 = vmatpush1.bf16.msra.mxu0 %v1965
    %2223 = vmatprep.subr.bf16.mxu0 0
    %2224 = vmatpush1.bf16.msra.mxu0 %v1966
    %2225 = vmatprep.subr.bf16.mxu0 0
    %2226 = vmatpush1.bf16.msra.mxu0 %v1967
    %2227 = vmatprep.subr.bf16.mxu0 0
    %2228 = vmatpush1.bf16.msra.mxu0 %v1968
    %2229 = vmatprep.subr.bf16.mxu0 0
    %2230 = vmatpush1.bf16.msra.mxu0 %v1969
    %2231 = vmatprep.subr.bf16.mxu0 0
    %2232 = vmatpush1.bf16.msra.mxu0 %v1970
    %2233 = vmatprep.subr.bf16.mxu0 0
    %2234 = vmatpush1.bf16.msra.mxu0 %v1971
    %2235 = vmatprep.subr.bf16.mxu0 0
    %2236 = vmatpush1.bf16.msra.mxu0 %v1972
    %2237 = vmatprep.subr.bf16.mxu0 0
    %2238 = vmatpush1.bf16.msra.mxu0 %v1973
    %2239 = vmatprep.subr.bf16.mxu0 0
    %2240 = vmatpush1.bf16.msra.mxu0 %v1974
    %2241 = vmatprep.subr.bf16.mxu0 0
    %2242 = vmatpush1.bf16.msra.mxu0 %v1975
    %2243 = vmatprep.subr.bf16.mxu0 0
    %2244 = vmatpush1.bf16.msra.mxu0 %v1976
    %2245 = vmatprep.subr.bf16.mxu0 0
    %2246 = vmatpush1.bf16.msra.mxu0 %v1977
    %2247 = vmatprep.subr.bf16.mxu0 0
    %2248 = vmatpush1.bf16.msra.mxu0 %v1978
    %2249 = vmatprep.subr.bf16.mxu0 0
    %2250 = vmatpush1.bf16.msra.mxu0 %v1979
    %2251 = vmatprep.subr.bf16.mxu0 0
    %2252 = vmatpush1.bf16.msra.mxu0 %v1980
    %2253 = vmatprep.mubr.bf16.mxu0 %v1178
    %2254 = vmatmul.mubr.bf16.gmra.mrb[0].mxu0 %v1177
    %v2255 = vpop.f32.mrb[0].mxu0
    %v2256 = vadd.f32 %v1452, %v2255
    %v2257 = vpop.f32.mrb[0].mxu0
    %v2258 = vpop.f32.mrb[0].mxu0
    %v2259 = vpop.f32.mrb[0].mxu0
    %2260 = vdwg.mxu0
    %2261 = vmatprep.subr.bf16.mxu0 0
    %2262 = vmatpush1.bf16.msra.mxu0 %v1981
    %2263 = vmatprep.subr.bf16.mxu0 0
    %2264 = vmatpush1.bf16.msra.mxu0 %v1982
    %2265 = vmatprep.subr.bf16.mxu0 0
    %2266 = vmatpush1.bf16.msra.mxu0 %v1983
    %2267 = vmatprep.subr.bf16.mxu0 0
    %2268 = vmatpush1.bf16.msra.mxu0 %v1984
    %2269 = vmatprep.subr.bf16.mxu0 0
    %2270 = vmatpush1.bf16.msra.mxu0 %v1985
    %2271 = vmatprep.subr.bf16.mxu0 0
    %2272 = vmatpush1.bf16.msra.mxu0 %v1986
    %2273 = vmatprep.subr.bf16.mxu0 0
    %2274 = vmatpush1.bf16.msra.mxu0 %v1987
    %2275 = vmatprep.subr.bf16.mxu0 0
    %2276 = vmatpush1.bf16.msra.mxu0 %v1988
    %2277 = vmatprep.subr.bf16.mxu0 0
    %2278 = vmatpush1.bf16.msra.mxu0 %v1989
    %2279 = vmatprep.subr.bf16.mxu0 0
    %2280 = vmatpush1.bf16.msra.mxu0 %v1990
    %2281 = vmatprep.subr.bf16.mxu0 0
    %2282 = vmatpush1.bf16.msra.mxu0 %v1991
    %2283 = vmatprep.subr.bf16.mxu0 0
    %2284 = vmatpush1.bf16.msra.mxu0 %v1992
    %2285 = vmatprep.subr.bf16.mxu0 0
    %2286 = vmatpush1.bf16.msra.mxu0 %v1993
    %2287 = vmatprep.subr.bf16.mxu0 0
    %2288 = vmatpush1.bf16.msra.mxu0 %v1994
    %2289 = vmatprep.subr.bf16.mxu0 0
    %2290 = vmatpush1.bf16.msra.mxu0 %v1995
    %2291 = vmatprep.subr.bf16.mxu0 0
    %2292 = vmatpush1.bf16.msra.mxu0 %v1996
    %2293 = vmatprep.mubr.bf16.mxu0 %v1180
    %2294 = vmatmul.mubr.bf16.gmra.mrb[0].mxu0 %v1179
    %v2295 = vpop.f32.mrb[0].mxu0
    %v2296 = vadd.f32 %v2256, %v2295
    %v2297 = vpop.f32.mrb[0].mxu0
    %v2298 = vpop.f32.mrb[0].mxu0
    %v2299 = vpop.f32.mrb[0].mxu0
    %2300 = vdwg.mxu0
    %2301 = vmatprep.subr.bf16.mxu0 0
    %2302 = vmatpush1.bf16.msra.mxu0 %v1997
    %2303 = vmatprep.subr.bf16.mxu0 0
    %2304 = vmatpush1.bf16.msra.mxu0 %v1998
    %2305 = vmatprep.subr.bf16.mxu0 0
    %2306 = vmatpush1.bf16.msra.mxu0 %v1999
    %2307 = vmatprep.subr.bf16.mxu0 0
    %2308 = vmatpush1.bf16.msra.mxu0 %v2000
    %2309 = vmatprep.subr.bf16.mxu0 0
    %2310 = vmatpush1.bf16.msra.mxu0 %v2001
    %2311 = vmatprep.subr.bf16.mxu0 0
    %2312 = vmatpush1.bf16.msra.mxu0 %v2002
    %2313 = vmatprep.subr.bf16.mxu0 0
    %2314 = vmatpush1.bf16.msra.mxu0 %v2003
    %2315 = vmatprep.subr.bf16.mxu0 0
    %2316 = vmatpush1.bf16.msra.mxu0 %v2004
    %2317 = vmatprep.subr.bf16.mxu0 0
    %2318 = vmatpush1.bf16.msra.mxu0 %v2005
    %2319 = vmatprep.subr.bf16.mxu0 0
    %2320 = vmatpush1.bf16.msra.mxu0 %v2006
    %2321 = vmatprep.subr.bf16.mxu0 0
    %2322 = vmatpush1.bf16.msra.mxu0 %v2007
    %2323 = vmatprep.subr.bf16.mxu0 0
    %2324 = vmatpush1.bf16.msra.mxu0 %v2008
    %2325 = vmatprep.subr.bf16.mxu0 0
    %2326 = vmatpush1.bf16.msra.mxu0 %v2009
    %2327 = vmatprep.subr.bf16.mxu0 0
    %2328 = vmatpush1.bf16.msra.mxu0 %v2010
    %2329 = vmatprep.subr.bf16.mxu0 0
    %2330 = vmatpush1.bf16.msra.mxu0 %v2011
    %2331 = vmatprep.subr.bf16.mxu0 0
    %2332 = vmatpush1.bf16.msra.mxu0 %v2012
    %2333 = vmatprep.mubr.bf16.mxu0 %v1182
    %2334 = vmatmul.mubr.bf16.gmra.mrb[0].mxu0 %v1181
    %v2335 = vpop.f32.mrb[0].mxu0
    %v2336 = vadd.f32 %v2296, %v2335
    %v2337 = vpop.f32.mrb[0].mxu0
    %v2338 = vpop.f32.mrb[0].mxu0
    %v2339 = vpop.f32.mrb[0].mxu0
    %2340 = vdwg.mxu0
    %2341 = vmatprep.subr.bf16.mxu0 0
    %2342 = vmatpush1.bf16.msra.mxu0 %v2013
    %2343 = vmatprep.subr.bf16.mxu0 0
    %2344 = vmatpush1.bf16.msra.mxu0 %v2014
    %2345 = vmatprep.subr.bf16.mxu0 0
    %2346 = vmatpush1.bf16.msra.mxu0 %v2015
    %2347 = vmatprep.subr.bf16.mxu0 0
    %2348 = vmatpush1.bf16.msra.mxu0 %v2016
    %2349 = vmatprep.subr.bf16.mxu0 0
    %2350 = vmatpush1.bf16.msra.mxu0 %v2017
    %2351 = vmatprep.subr.bf16.mxu0 0
    %2352 = vmatpush1.bf16.msra.mxu0 %v2018
    %2353 = vmatprep.subr.bf16.mxu0 0
    %2354 = vmatpush1.bf16.msra.mxu0 %v2019
    %2355 = vmatprep.subr.bf16.mxu0 0
    %2356 = vmatpush1.bf16.msra.mxu0 %v2020
    %2357 = vmatprep.subr.bf16.mxu0 0
    %2358 = vmatpush1.bf16.msra.mxu0 %v2021
    %2359 = vmatprep.subr.bf16.mxu0 0
    %2360 = vmatpush1.bf16.msra.mxu0 %v2022
    %2361 = vmatprep.subr.bf16.mxu0 0
    %2362 = vmatpush1.bf16.msra.mxu0 %v2023
    %2363 = vmatprep.subr.bf16.mxu0 0
    %2364 = vmatpush1.bf16.msra.mxu0 %v2024
    %2365 = vmatprep.subr.bf16.mxu0 0
    %2366 = vmatpush1.bf16.msra.mxu0 %v2025
    %2367 = vmatprep.subr.bf16.mxu0 0
    %2368 = vmatpush1.bf16.msra.mxu0 %v2026
    %2369 = vmatprep.subr.bf16.mxu0 0
    %2370 = vmatpush1.bf16.msra.mxu0 %v2027
    %2371 = vmatprep.subr.bf16.mxu0 0
    %2372 = vmatpush1.bf16.msra.mxu0 %v2028
    %2373 = vmatprep.mubr.bf16.mxu0 %v1184
    %2374 = vmatmul.mubr.bf16.gmra.mrb[0].mxu0 %v1183
    %v2375 = vpop.f32.mrb[0].mxu0
    %v2376 = vadd.f32 %v2336, %v2375
    %v2377 = vpop.f32.mrb[0].mxu0
    %v2378 = vpop.f32.mrb[0].mxu0
    %v2379 = vpop.f32.mrb[0].mxu0
    %2380 = vdwg.mxu0
    %2381 = vmatprep.subr.bf16.mxu0 0
    %2382 = vmatpush1.bf16.msra.mxu0 %v2029
    %2383 = vmatprep.subr.bf16.mxu0 0
    %2384 = vmatpush1.bf16.msra.mxu0 %v2030
    %2385 = vmatprep.subr.bf16.mxu0 0
    %2386 = vmatpush1.bf16.msra.mxu0 %v2031
    %2387 = vmatprep.subr.bf16.mxu0 0
    %2388 = vmatpush1.bf16.msra.mxu0 %v2032
    %2389 = vmatprep.subr.bf16.mxu0 0
    %2390 = vmatpush1.bf16.msra.mxu0 %v2033
    %2391 = vmatprep.subr.bf16.mxu0 0
    %2392 = vmatpush1.bf16.msra.mxu0 %v2034
    %2393 = vmatprep.subr.bf16.mxu0 0
    %2394 = vmatpush1.bf16.msra.mxu0 %v2035
    %2395 = vmatprep.subr.bf16.mxu0 0
    %2396 = vmatpush1.bf16.msra.mxu0 %v2036
    %2397 = vmatprep.subr.bf16.mxu0 0
    %2398 = vmatpush1.bf16.msra.mxu0 %v2037
    %2399 = vmatprep.subr.bf16.mxu0 0
    %2400 = vmatpush1.bf16.msra.mxu0 %v2038
    %2401 = vmatprep.subr.bf16.mxu0 0
    %2402 = vmatpush1.bf16.msra.mxu0 %v2039
    %2403 = vmatprep.subr.bf16.mxu0 0
    %2404 = vmatpush1.bf16.msra.mxu0 %v2040
    %2405 = vmatprep.subr.bf16.mxu0 0
    %2406 = vmatpush1.bf16.msra.mxu0 %v2041
    %2407 = vmatprep.subr.bf16.mxu0 0
    %2408 = vmatpush1.bf16.msra.mxu0 %v2042
    %2409 = vmatprep.subr.bf16.mxu0 0
    %2410 = vmatpush1.bf16.msra.mxu0 %v2043
    %2411 = vmatprep.subr.bf16.mxu0 0
    %2412 = vmatpush1.bf16.msra.mxu0 %v2044
    %2413 = vmatprep.mubr.bf16.mxu0 %v1186
    %2414 = vmatmul.mubr.bf16.gmra.mrb[0].mxu0 %v1185
    %v2415 = vpop.f32.mrb[0].mxu0
    %v2416 = vadd.f32 %v2376, %v2415
    %v2417 = vpop.f32.mrb[0].mxu0
    %v2418 = vpop.f32.mrb[0].mxu0
    %v2419 = vpop.f32.mrb[0].mxu0
    %2420 = vdwg.mxu0
    %2421 = vmatprep.subr.bf16.mxu0 0
    %2422 = vmatpush1.bf16.msra.mxu0 %v2045
    %2423 = vmatprep.subr.bf16.mxu0 0
    %2424 = vmatpush1.bf16.msra.mxu0 %v2046
    %2425 = vmatprep.subr.bf16.mxu0 0
    %2426 = vmatpush1.bf16.msra.mxu0 %v2047
    %2427 = vmatprep.subr.bf16.mxu0 0
    %2428 = vmatpush1.bf16.msra.mxu0 %v2048
    %2429 = vmatprep.subr.bf16.mxu0 0
    %2430 = vmatpush1.bf16.msra.mxu0 %v2049
    %2431 = vmatprep.subr.bf16.mxu0 0
    %2432 = vmatpush1.bf16.msra.mxu0 %v2050
    %2433 = vmatprep.subr.bf16.mxu0 0
    %2434 = vmatpush1.bf16.msra.mxu0 %v2051
    %2435 = vmatprep.subr.bf16.mxu0 0
    %2436 = vmatpush1.bf16.msra.mxu0 %v2052
    %2437 = vmatprep.subr.bf16.mxu0 0
    %2438 = vmatpush1.bf16.msra.mxu0 %v2053
    %2439 = vmatprep.subr.bf16.mxu0 0
    %2440 = vmatpush1.bf16.msra.mxu0 %v2054
    %2441 = vmatprep.subr.bf16.mxu0 0
    %2442 = vmatpush1.bf16.msra.mxu0 %v2055
    %2443 = vmatprep.subr.bf16.mxu0 0
    %2444 = vmatpush1.bf16.msra.mxu0 %v2056
    %2445 = vmatprep.subr.bf16.mxu0 0
    %2446 = vmatpush1.bf16.msra.mxu0 %v2057
    %2447 = vmatprep.subr.bf16.mxu0 0
    %2448 = vmatpush1.bf16.msra.mxu0 %v2058
    %2449 = vmatprep.subr.bf16.mxu0 0
    %2450 = vmatpush1.bf16.msra.mxu0 %v2059
    %2451 = vmatprep.subr.bf16.mxu0 0
    %2452 = vmatpush1.bf16.msra.mxu0 %v2060
    %2453 = vmatprep.mubr.bf16.mxu0 %v1188
    %2454 = vmatmul.mubr.bf16.gmra.mrb[0].mxu0 %v1187
    %v2455 = vpop.f32.mrb[0].mxu0
    %v2456 = vadd.f32 %v2416, %v2455
    %v2457 = vpop.f32.mrb[0].mxu0
    %v2458 = vpop.f32.mrb[0].mxu0
    %v2459 = vpop.f32.mrb[0].mxu0
    %2460 = vdwg.mxu0
    %2461 = vmatprep.subr.bf16.mxu0 0
    %2462 = vmatpush1.bf16.msra.mxu0 %v2061
    %2463 = vmatprep.subr.bf16.mxu0 0
    %2464 = vmatpush1.bf16.msra.mxu0 %v2062
    %2465 = vmatprep.subr.bf16.mxu0 0
    %2466 = vmatpush1.bf16.msra.mxu0 %v2063
    %2467 = vmatprep.subr.bf16.mxu0 0
    %2468 = vmatpush1.bf16.msra.mxu0 %v2064
    %2469 = vmatprep.subr.bf16.mxu0 0
    %2470 = vmatpush1.bf16.msra.mxu0 %v2065
    %2471 = vmatprep.subr.bf16.mxu0 0
    %2472 = vmatpush1.bf16.msra.mxu0 %v2066
    %2473 = vmatprep.subr.bf16.mxu0 0
    %2474 = vmatpush1.bf16.msra.mxu0 %v2067
    %2475 = vmatprep.subr.bf16.mxu0 0
    %2476 = vmatpush1.bf16.msra.mxu0 %v2068
    %2477 = vmatprep.subr.bf16.mxu0 0
    %2478 = vmatpush1.bf16.msra.mxu0 %v2069
    %2479 = vmatprep.subr.bf16.mxu0 0
    %2480 = vmatpush1.bf16.msra.mxu0 %v2070
    %2481 = vmatprep.subr.bf16.mxu0 0
    %2482 = vmatpush1.bf16.msra.mxu0 %v2071
    %2483 = vmatprep.subr.bf16.mxu0 0
    %2484 = vmatpush1.bf16.msra.mxu0 %v2072
    %2485 = vmatprep.subr.bf16.mxu0 0
    %2486 = vmatpush1.bf16.msra.mxu0 %v2073
    %2487 = vmatprep.subr.bf16.mxu0 0
    %2488 = vmatpush1.bf16.msra.mxu0 %v2074
    %2489 = vmatprep.subr.bf16.mxu0 0
    %2490 = vmatpush1.bf16.msra.mxu0 %v2075
    %2491 = vmatprep.subr.bf16.mxu0 0
    %2492 = vmatpush1.bf16.msra.mxu0 %v2076
    %2493 = vmatprep.mubr.bf16.mxu0 %v1190
    %2494 = vmatmul.mubr.bf16.gmra.mrb[0].mxu0 %v1189
    %v2495 = vpop.f32.mrb[0].mxu0
    %v2496 = vadd.f32 %v2456, %v2495
    %v2497 = vpop.f32.mrb[0].mxu0
    %v2498 = vpop.f32.mrb[0].mxu0
    %v2499 = vpop.f32.mrb[0].mxu0
    %2500 = vdwg.mxu0
    %2501 = vmatprep.subr.bf16.mxu0 0
    %2502 = vmatpush1.bf16.msra.mxu0 %v2077
    %2503 = vmatprep.subr.bf16.mxu0 0
    %2504 = vmatpush1.bf16.msra.mxu0 %v2078
    %2505 = vmatprep.subr.bf16.mxu0 0
    %2506 = vmatpush1.bf16.msra.mxu0 %v2079
    %2507 = vmatprep.subr.bf16.mxu0 0
    %2508 = vmatpush1.bf16.msra.mxu0 %v2080
    %2509 = vmatprep.subr.bf16.mxu0 0
    %2510 = vmatpush1.bf16.msra.mxu0 %v2081
    %2511 = vmatprep.subr.bf16.mxu0 0
    %2512 = vmatpush1.bf16.msra.mxu0 %v2082
    %2513 = vmatprep.subr.bf16.mxu0 0
    %2514 = vmatpush1.bf16.msra.mxu0 %v2083
    %2515 = vmatprep.subr.bf16.mxu0 0
    %2516 = vmatpush1.bf16.msra.mxu0 %v2084
    %2517 = vmatprep.subr.bf16.mxu0 0
    %2518 = vmatpush1.bf16.msra.mxu0 %v2085
    %2519 = vmatprep.subr.bf16.mxu0 0
    %2520 = vmatpush1.bf16.msra.mxu0 %v2086
    %2521 = vmatprep.subr.bf16.mxu0 0
    %2522 = vmatpush1.bf16.msra.mxu0 %v2087
    %2523 = vmatprep.subr.bf16.mxu0 0
    %2524 = vmatpush1.bf16.msra.mxu0 %v2088
    %2525 = vmatprep.subr.bf16.mxu0 0
    %2526 = vmatpush1.bf16.msra.mxu0 %v2089
    %2527 = vmatprep.subr.bf16.mxu0 0
    %2528 = vmatpush1.bf16.msra.mxu0 %v2090
    %2529 = vmatprep.subr.bf16.mxu0 0
    %2530 = vmatpush1.bf16.msra.mxu0 %v2091
    %2531 = vmatprep.subr.bf16.mxu0 0
    %2532 = vmatpush1.bf16.msra.mxu0 %v2092
    %2533 = vmatprep.mubr.bf16.mxu0 %v1192
    %2534 = vmatmul.mubr.bf16.gmra.mrb[0].mxu0 %v1191
    %v2535 = vpop.f32.mrb[0].mxu0
    %v2536 = vadd.f32 %v2496, %v2535
    %v2537 = vpop.f32.mrb[0].mxu0
    %v2538 = vpop.f32.mrb[0].mxu0
    %v2539 = vpop.f32.mrb[0].mxu0
    %2540 = vdwg.mxu0
    %v2541 = vadd.f32 %v216, %v2536
    %v2542 = vsel %vm148, %v2541, 0.0
    %2543 = vadd.xlane.f32.xlu0 %v2542
    %v2544 = vpop.xlane.xlu0 %2543
    %v2545 = vmul.f32 %v2544, %v196
    %v2546 = vsub.f32 %v2541, %v2545
    %v2547 = vmul.f32 %v2546, %v2546
    %v2548 = vsel %vm148, %v2547, 0.0
    %2549 = vadd.xlane.f32.xlu0 %v2548
    %v2550 = vpop.xlane.xlu0 %2549
    %v2551 = vmul.f32 %v2550, %v196
    %v2552 = vadd.f32 %v2551, 1e-05
    %v2553 = vrsqrt.pop %v2552
    %v2554 = vmul.f32 %v2546, %v2553
    %v2555 = vlaneseq
    %v2556 = vshrl.u32 %v2555, 7
    %v2557 = vsub.s32 0, %v2556
    %v2558 = vrot.slane %v107, %v2557
    %v2559 = vmul.f32 %v2554, %v2558
    %v2560 = vlaneseq
    %v2561 = vshrl.u32 %v2560, 7
    %v2562 = vsub.s32 0, %v2561
    %v2563 = vrot.slane %v108, %v2562
    %v2564 = vadd.f32 %v2559, %v2563
    %v2565 = vld [vmem:[%s10 + $0x7] sm:$0x1]
    %v2566 = vld [vmem:[%s10 + $0x8] sm:$0x1]
    %v2567 = vld [vmem:[%s10 + $0x9] sm:$0x1]
    %v2568 = vld [vmem:[%s10 + $0xa] sm:$0x1]
    %v2569 = vld [vmem:[%s10 + $0xb] sm:$0x1]
    %v2570 = vld [vmem:[%s10 + $0xc] sm:$0x1]
    %v2571 = vld [vmem:[%s11] sm:$0xff]
    %v2572 = vld [vmem:[%s11 + $0x8] sm:$0xff]
    %v2573 = vpack.c.bf16 %v2564, %v2564
    %v2574 = vld [vmem:[%s5] sm:$0xf]
    %v2575 = vld [vmem:[%s5 + $0x4] sm:$0xf]
    %v2576 = vld [vmem:[%s5 + $0x8] sm:$0xf]
    %v2577 = vld [vmem:[%s5 + $0xc] sm:$0xf]
    %v2578 = vld [vmem:[%s5 + $0x10] sm:$0xf]
    %v2579 = vld [vmem:[%s5 + $0x14] sm:$0xf]
    %v2580 = vld [vmem:[%s5 + $0x18] sm:$0xf]
    %v2581 = vld [vmem:[%s5 + $0x1c] sm:$0xf]
    %v2582 = vlaneseq
    %v2583 = vshrl.u32 %v2582, 7
    %v2584 = vsub.s32 0, %v2583
    %v2585 = vrot.slane %v2565, %v2584
    %v2594 = vunpack.c.l.b16 %v2574
    %v2595 = vunpack.c.l.b16 %v2575
    %v2596 = vunpack.c.l.b16 %v2576
    %v2597 = vunpack.c.l.b16 %v2577
    %v2598 = vunpack.c.l.b16 %v2578
    %v2599 = vunpack.c.l.b16 %v2579
    %v2600 = vunpack.c.l.b16 %v2580
    %v2601 = vunpack.c.l.b16 %v2581
    %v2602 = vpack.c.b16 %v2595, %v2594
    %v2603 = vpack.c.b16 %v2597, %v2596
    %v2604 = vpack.c.b16 %v2599, %v2598
    %v2605 = vpack.c.b16 %v2601, %v2600
    %v2611 = vsel %vm148, %v2573, 0
    %2613 = vmatprep.subr.bf16.mxu0 0
    %2614 = vmatpush1.bf16.msra.mxu0 %v2602
    %2615 = vmatprep.subr.bf16.mxu0 0
    %2616 = vmatpush1.bf16.msra.mxu0 %v2603
    %2617 = vmatprep.subr.bf16.mxu0 0
    %2618 = vmatpush1.bf16.msra.mxu0 %v2604
    %2619 = vmatprep.subr.bf16.mxu0 0
    %2620 = vmatpush1.bf16.msra.mxu0 %v2605
    %2621 = vmatprep.subr.bf16.mxu0 0
    %2622 = vmatpush1.bf16.msra.mxu0 0
    %2623 = vmatprep.subr.bf16.mxu0 0
    %2624 = vmatpush1.bf16.msra.mxu0 0
    %2625 = vmatprep.subr.bf16.mxu0 0
    %2626 = vmatpush1.bf16.msra.mxu0 0
    %2627 = vmatprep.subr.bf16.mxu0 0
    %2628 = vmatpush1.bf16.msra.mxu0 0
    %2629 = vmatprep.subr.bf16.mxu0 0
    %2630 = vmatpush1.bf16.msra.mxu0 0
    %2631 = vmatprep.subr.bf16.mxu0 0
    %2632 = vmatpush1.bf16.msra.mxu0 0
    %2633 = vmatprep.subr.bf16.mxu0 0
    %2634 = vmatpush1.bf16.msra.mxu0 0
    %2635 = vmatprep.subr.bf16.mxu0 0
    %2636 = vmatpush1.bf16.msra.mxu0 0
    %2637 = vmatprep.subr.bf16.mxu0 0
    %2638 = vmatpush1.bf16.msra.mxu0 0
    %2639 = vmatprep.subr.bf16.mxu0 0
    %2640 = vmatpush1.bf16.msra.mxu0 0
    %2641 = vmatprep.subr.bf16.mxu0 0
    %2642 = vmatpush1.bf16.msra.mxu0 0
    %2643 = vmatprep.subr.bf16.mxu0 0
    %2644 = vmatpush1.bf16.msra.mxu0 0
    %2645 = vmatprep.mubr.bf16.mxu0 0
    %2646 = vmatmul.mubr.bf16.gmra.mrb[0].mxu0 %v2611
    %v2647 = vpop.f32.mrb[0].mxu0
    %v2648 = vadd.f32 %v2585, %v2647
    %v2649 = vpop.f32.mrb[0].mxu0
    %v2650 = vpop.f32.mrb[0].mxu0
    %v2651 = vpop.f32.mrb[0].mxu0
    %2652 = vdwg.mxu0
    %v2653 = vadd.f32 %v2564, %v2648
    %v2654 = vsel %vm148, %v2653, 0.0
    %2655 = vadd.xlane.f32.xlu0 %v2654
    %v2656 = vpop.xlane.xlu0 %2655
    %v2657 = vmul.f32 %v2656, %v196
    %v2658 = vsub.f32 %v2653, %v2657
    %v2659 = vmul.f32 %v2658, %v2658
    %v2660 = vsel %vm148, %v2659, 0.0
    %2661 = vadd.xlane.f32.xlu0 %v2660
    %v2662 = vpop.xlane.xlu0 %2661
    %v2663 = vmul.f32 %v2662, %v196
    %v2664 = vadd.f32 %v2663, 1e-05
    %v2665 = vrsqrt.pop %v2664
    %v2666 = vmul.f32 %v2658, %v2665
    %v2667 = vlaneseq
    %v2668 = vshrl.u32 %v2667, 7
    %v2669 = vsub.s32 0, %v2668
    %v2670 = vrot.slane %v2566, %v2669
    %v2671 = vmul.f32 %v2666, %v2670
    %v2672 = vlaneseq
    %v2673 = vshrl.u32 %v2672, 7
    %v2674 = vsub.s32 0, %v2673
    %v2675 = vrot.slane %v2567, %v2674
    %v2676 = vadd.f32 %v2671, %v2675
    %v2677 = vpack.c.bf16 %v2676, %v2676
    %v2678 = vld [vmem:[%s6] sm:$0xff]
    %v2679 = vld [vmem:[%s6 + $0x8] sm:$0xff]
    %v2680 = vld [vmem:[%s6 + $0x10] sm:$0xff]
    %v2681 = vld [vmem:[%s6 + $0x18] sm:$0xff]
    %v2682 = vld [vmem:[%s6 + $0x20] sm:$0xff]
    %v2683 = vld [vmem:[%s6 + $0x28] sm:$0xff]
    %v2684 = vld [vmem:[%s6 + $0x30] sm:$0xff]
    %v2685 = vld [vmem:[%s6 + $0x38] sm:$0xff]
    %v2686 = vld [vmem:[%s6 + $0x40] sm:$0xff]
    %v2687 = vld [vmem:[%s6 + $0x48] sm:$0xff]
    %v2688 = vld [vmem:[%s6 + $0x50] sm:$0xff]
    %v2689 = vld [vmem:[%s6 + $0x58] sm:$0xff]
    %v2690 = vld [vmem:[%s6 + $0x60] sm:$0xff]
    %v2691 = vld [vmem:[%s6 + $0x68] sm:$0xff]
    %v2692 = vld [vmem:[%s6 + $0x70] sm:$0xff]
    %v2693 = vld [vmem:[%s6 + $0x78] sm:$0xff]
    %v2694 = vld [vmem:[%s6 + $0x80] sm:$0xff]
    %v2695 = vld [vmem:[%s6 + $0x88] sm:$0xff]
    %v2696 = vld [vmem:[%s6 + $0x90] sm:$0xff]
    %v2697 = vld [vmem:[%s6 + $0x98] sm:$0xff]
    %v2698 = vld [vmem:[%s6 + $0xa0] sm:$0xff]
    %v2699 = vld [vmem:[%s6 + $0xa8] sm:$0xff]
    %v2700 = vld [vmem:[%s6 + $0xb0] sm:$0xff]
    %v2701 = vld [vmem:[%s6 + $0xb8] sm:$0xff]
    %v2702 = vld [vmem:[%s6 + $0xc0] sm:$0xff]
    %v2703 = vld [vmem:[%s6 + $0xc8] sm:$0xff]
    %v2704 = vld [vmem:[%s6 + $0xd0] sm:$0xff]
    %v2705 = vld [vmem:[%s6 + $0xd8] sm:$0xff]
    %v2706 = vld [vmem:[%s6 + $0xe0] sm:$0xff]
    %v2707 = vld [vmem:[%s6 + $0xe8] sm:$0xff]
    %v2708 = vld [vmem:[%s6 + $0xf0] sm:$0xff]
    %v2709 = vld [vmem:[%s6 + $0xf8] sm:$0xff]
    %v2710 = vld [vmem:[%s6 + $0x100] sm:$0xff]
    %v2711 = vld [vmem:[%s6 + $0x108] sm:$0xff]
    %v2712 = vld [vmem:[%s6 + $0x110] sm:$0xff]
    %v2713 = vld [vmem:[%s6 + $0x118] sm:$0xff]
    %v2714 = vld [vmem:[%s6 + $0x120] sm:$0xff]
    %v2715 = vld [vmem:[%s6 + $0x128] sm:$0xff]
    %v2716 = vld [vmem:[%s6 + $0x130] sm:$0xff]
    %v2717 = vld [vmem:[%s6 + $0x138] sm:$0xff]
    %v2718 = vld [vmem:[%s6 + $0x140] sm:$0xff]
    %v2719 = vld [vmem:[%s6 + $0x148] sm:$0xff]
    %v2720 = vld [vmem:[%s6 + $0x150] sm:$0xff]
    %v2721 = vld [vmem:[%s6 + $0x158] sm:$0xff]
    %v2722 = vld [vmem:[%s6 + $0x160] sm:$0xff]
    %v2723 = vld [vmem:[%s6 + $0x168] sm:$0xff]
    %v2724 = vld [vmem:[%s6 + $0x170] sm:$0xff]
    %v2725 = vld [vmem:[%s6 + $0x178] sm:$0xff]
    %v2726 = vld [vmem:[%s6 + $0x180] sm:$0xff]
    %v2727 = vld [vmem:[%s6 + $0x188] sm:$0xff]
    %v2728 = vld [vmem:[%s6 + $0x190] sm:$0xff]
    %v2729 = vld [vmem:[%s6 + $0x198] sm:$0xff]
    %v2730 = vld [vmem:[%s6 + $0x1a0] sm:$0xff]
    %v2731 = vld [vmem:[%s6 + $0x1a8] sm:$0xff]
    %v2732 = vld [vmem:[%s6 + $0x1b0] sm:$0xff]
    %v2733 = vld [vmem:[%s6 + $0x1b8] sm:$0xff]
    %v2734 = vld [vmem:[%s6 + $0x1c0] sm:$0xff]
    %v2735 = vld [vmem:[%s6 + $0x1c8] sm:$0xff]
    %v2736 = vld [vmem:[%s6 + $0x1d0] sm:$0xff]
    %v2737 = vld [vmem:[%s6 + $0x1d8] sm:$0xff]
    %v2738 = vld [vmem:[%s6 + $0x1e0] sm:$0xff]
    %v2739 = vld [vmem:[%s6 + $0x1e8] sm:$0xff]
    %v2740 = vld [vmem:[%s6 + $0x1f0] sm:$0xff]
    %v2741 = vld [vmem:[%s6 + $0x1f8] sm:$0xff]
    %v2806 = vunpack.c.l.b16 %v2678
    %v2807 = vunpack.c.h.b16 %v2678
    %v2808 = vunpack.c.l.b16 %v2679
    %v2809 = vunpack.c.h.b16 %v2679
    %v2810 = vunpack.c.l.b16 %v2680
    %v2811 = vunpack.c.h.b16 %v2680
    %v2812 = vunpack.c.l.b16 %v2681
    %v2813 = vunpack.c.h.b16 %v2681
    %v2814 = vunpack.c.l.b16 %v2682
    %v2815 = vunpack.c.h.b16 %v2682
    %v2816 = vunpack.c.l.b16 %v2683
    %v2817 = vunpack.c.h.b16 %v2683
    %v2818 = vunpack.c.l.b16 %v2684
    %v2819 = vunpack.c.h.b16 %v2684
    %v2820 = vunpack.c.l.b16 %v2685
    %v2821 = vunpack.c.h.b16 %v2685
    %v2822 = vunpack.c.l.b16 %v2686
    %v2823 = vunpack.c.h.b16 %v2686
    %v2824 = vunpack.c.l.b16 %v2687
    %v2825 = vunpack.c.h.b16 %v2687
    %v2826 = vunpack.c.l.b16 %v2688
    %v2827 = vunpack.c.h.b16 %v2688
    %v2828 = vunpack.c.l.b16 %v2689
    %v2829 = vunpack.c.h.b16 %v2689
    %v2830 = vunpack.c.l.b16 %v2690
    %v2831 = vunpack.c.h.b16 %v2690
    %v2832 = vunpack.c.l.b16 %v2691
    %v2833 = vunpack.c.h.b16 %v2691
    %v2834 = vunpack.c.l.b16 %v2692
    %v2835 = vunpack.c.h.b16 %v2692
    %v2836 = vunpack.c.l.b16 %v2693
    %v2837 = vunpack.c.h.b16 %v2693
    %v2838 = vunpack.c.l.b16 %v2694
    %v2839 = vunpack.c.h.b16 %v2694
    %v2840 = vunpack.c.l.b16 %v2695
    %v2841 = vunpack.c.h.b16 %v2695
    %v2842 = vunpack.c.l.b16 %v2696
    %v2843 = vunpack.c.h.b16 %v2696
    %v2844 = vunpack.c.l.b16 %v2697
    %v2845 = vunpack.c.h.b16 %v2697
    %v2846 = vunpack.c.l.b16 %v2698
    %v2847 = vunpack.c.h.b16 %v2698
    %v2848 = vunpack.c.l.b16 %v2699
    %v2849 = vunpack.c.h.b16 %v2699
    %v2850 = vunpack.c.l.b16 %v2700
    %v2851 = vunpack.c.h.b16 %v2700
    %v2852 = vunpack.c.l.b16 %v2701
    %v2853 = vunpack.c.h.b16 %v2701
    %v2854 = vunpack.c.l.b16 %v2702
    %v2855 = vunpack.c.h.b16 %v2702
    %v2856 = vunpack.c.l.b16 %v2703
    %v2857 = vunpack.c.h.b16 %v2703
    %v2858 = vunpack.c.l.b16 %v2704
    %v2859 = vunpack.c.h.b16 %v2704
    %v2860 = vunpack.c.l.b16 %v2705
    %v2861 = vunpack.c.h.b16 %v2705
    %v2862 = vunpack.c.l.b16 %v2706
    %v2863 = vunpack.c.h.b16 %v2706
    %v2864 = vunpack.c.l.b16 %v2707
    %v2865 = vunpack.c.h.b16 %v2707
    %v2866 = vunpack.c.l.b16 %v2708
    %v2867 = vunpack.c.h.b16 %v2708
    %v2868 = vunpack.c.l.b16 %v2709
    %v2869 = vunpack.c.h.b16 %v2709
    %v2870 = vunpack.c.l.b16 %v2710
    %v2871 = vunpack.c.h.b16 %v2710
    %v2872 = vunpack.c.l.b16 %v2711
    %v2873 = vunpack.c.h.b16 %v2711
    %v2874 = vunpack.c.l.b16 %v2712
    %v2875 = vunpack.c.h.b16 %v2712
    %v2876 = vunpack.c.l.b16 %v2713
    %v2877 = vunpack.c.h.b16 %v2713
    %v2878 = vunpack.c.l.b16 %v2714
    %v2879 = vunpack.c.h.b16 %v2714
    %v2880 = vunpack.c.l.b16 %v2715
    %v2881 = vunpack.c.h.b16 %v2715
    %v2882 = vunpack.c.l.b16 %v2716
    %v2883 = vunpack.c.h.b16 %v2716
    %v2884 = vunpack.c.l.b16 %v2717
    %v2885 = vunpack.c.h.b16 %v2717
    %v2886 = vunpack.c.l.b16 %v2718
    %v2887 = vunpack.c.h.b16 %v2718
    %v2888 = vunpack.c.l.b16 %v2719
    %v2889 = vunpack.c.h.b16 %v2719
    %v2890 = vunpack.c.l.b16 %v2720
    %v2891 = vunpack.c.h.b16 %v2720
    %v2892 = vunpack.c.l.b16 %v2721
    %v2893 = vunpack.c.h.b16 %v2721
    %v2894 = vunpack.c.l.b16 %v2722
    %v2895 = vunpack.c.h.b16 %v2722
    %v2896 = vunpack.c.l.b16 %v2723
    %v2897 = vunpack.c.h.b16 %v2723
    %v2898 = vunpack.c.l.b16 %v2724
    %v2899 = vunpack.c.h.b16 %v2724
    %v2900 = vunpack.c.l.b16 %v2725
    %v2901 = vunpack.c.h.b16 %v2725
    %v2902 = vunpack.c.l.b16 %v2726
    %v2903 = vunpack.c.h.b16 %v2726
    %v2904 = vunpack.c.l.b16 %v2727
    %v2905 = vunpack.c.h.b16 %v2727
    %v2906 = vunpack.c.l.b16 %v2728
    %v2907 = vunpack.c.h.b16 %v2728
    %v2908 = vunpack.c.l.b16 %v2729
    %v2909 = vunpack.c.h.b16 %v2729
    %v2910 = vunpack.c.l.b16 %v2730
    %v2911 = vunpack.c.h.b16 %v2730
    %v2912 = vunpack.c.l.b16 %v2731
    %v2913 = vunpack.c.h.b16 %v2731
    %v2914 = vunpack.c.l.b16 %v2732
    %v2915 = vunpack.c.h.b16 %v2732
    %v2916 = vunpack.c.l.b16 %v2733
    %v2917 = vunpack.c.h.b16 %v2733
    %v2918 = vunpack.c.l.b16 %v2734
    %v2919 = vunpack.c.h.b16 %v2734
    %v2920 = vunpack.c.l.b16 %v2735
    %v2921 = vunpack.c.h.b16 %v2735
    %v2922 = vunpack.c.l.b16 %v2736
    %v2923 = vunpack.c.h.b16 %v2736
    %v2924 = vunpack.c.l.b16 %v2737
    %v2925 = vunpack.c.h.b16 %v2737
    %v2926 = vunpack.c.l.b16 %v2738
    %v2927 = vunpack.c.h.b16 %v2738
    %v2928 = vunpack.c.l.b16 %v2739
    %v2929 = vunpack.c.h.b16 %v2739
    %v2930 = vunpack.c.l.b16 %v2740
    %v2931 = vunpack.c.h.b16 %v2740
    %v2932 = vunpack.c.l.b16 %v2741
    %v2933 = vunpack.c.h.b16 %v2741
    %v2934 = vpack.c.b16 %v2822, %v2806
    %v2935 = vpack.c.b16 %v2823, %v2807
    %v2936 = vpack.c.b16 %v2824, %v2808
    %v2937 = vpack.c.b16 %v2825, %v2809
    %v2938 = vpack.c.b16 %v2826, %v2810
    %v2939 = vpack.c.b16 %v2827, %v2811
    %v2940 = vpack.c.b16 %v2828, %v2812
    %v2941 = vpack.c.b16 %v2829, %v2813
    %v2942 = vpack.c.b16 %v2830, %v2814
    %v2943 = vpack.c.b16 %v2831, %v2815
    %v2944 = vpack.c.b16 %v2832, %v2816
    %v2945 = vpack.c.b16 %v2833, %v2817
    %v2946 = vpack.c.b16 %v2834, %v2818
    %v2947 = vpack.c.b16 %v2835, %v2819
    %v2948 = vpack.c.b16 %v2836, %v2820
    %v2949 = vpack.c.b16 %v2837, %v2821
    %v2950 = vpack.c.b16 %v2854, %v2838
    %v2951 = vpack.c.b16 %v2855, %v2839
    %v2952 = vpack.c.b16 %v2856, %v2840
    %v2953 = vpack.c.b16 %v2857, %v2841
    %v2954 = vpack.c.b16 %v2858, %v2842
    %v2955 = vpack.c.b16 %v2859, %v2843
    %v2956 = vpack.c.b16 %v2860, %v2844
    %v2957 = vpack.c.b16 %v2861, %v2845
    %v2958 = vpack.c.b16 %v2862, %v2846
    %v2959 = vpack.c.b16 %v2863, %v2847
    %v2960 = vpack.c.b16 %v2864, %v2848
    %v2961 = vpack.c.b16 %v2865, %v2849
    %v2962 = vpack.c.b16 %v2866, %v2850
    %v2963 = vpack.c.b16 %v2867, %v2851
    %v2964 = vpack.c.b16 %v2868, %v2852
    %v2965 = vpack.c.b16 %v2869, %v2853
    %v2966 = vpack.c.b16 %v2886, %v2870
    %v2967 = vpack.c.b16 %v2887, %v2871
    %v2968 = vpack.c.b16 %v2888, %v2872
    %v2969 = vpack.c.b16 %v2889, %v2873
    %v2970 = vpack.c.b16 %v2890, %v2874
    %v2971 = vpack.c.b16 %v2891, %v2875
    %v2972 = vpack.c.b16 %v2892, %v2876
    %v2973 = vpack.c.b16 %v2893, %v2877
    %v2974 = vpack.c.b16 %v2894, %v2878
    %v2975 = vpack.c.b16 %v2895, %v2879
    %v2976 = vpack.c.b16 %v2896, %v2880
    %v2977 = vpack.c.b16 %v2897, %v2881
    %v2978 = vpack.c.b16 %v2898, %v2882
    %v2979 = vpack.c.b16 %v2899, %v2883
    %v2980 = vpack.c.b16 %v2900, %v2884
    %v2981 = vpack.c.b16 %v2901, %v2885
    %v2982 = vpack.c.b16 %v2918, %v2902
    %v2983 = vpack.c.b16 %v2919, %v2903
    %v2984 = vpack.c.b16 %v2920, %v2904
    %v2985 = vpack.c.b16 %v2921, %v2905
    %v2986 = vpack.c.b16 %v2922, %v2906
    %v2987 = vpack.c.b16 %v2923, %v2907
    %v2988 = vpack.c.b16 %v2924, %v2908
    %v2989 = vpack.c.b16 %v2925, %v2909
    %v2990 = vpack.c.b16 %v2926, %v2910
    %v2991 = vpack.c.b16 %v2927, %v2911
    %v2992 = vpack.c.b16 %v2928, %v2912
    %v2993 = vpack.c.b16 %v2929, %v2913
    %v2994 = vpack.c.b16 %v2930, %v2914
    %v2995 = vpack.c.b16 %v2931, %v2915
    %v2996 = vpack.c.b16 %v2932, %v2916
    %v2997 = vpack.c.b16 %v2933, %v2917
    %v3063 = vsel %vm148, %v2677, 0
    %3065 = vmatprep.subr.bf16.mxu0 %v2935
    %3066 = vmatpush1.bf16.msra.mxu0 %v2934
    %3067 = vmatprep.subr.bf16.mxu0 %v2951
    %3068 = vmatpush1.bf16.msra.mxu0 %v2950
    %3069 = vmatprep.subr.bf16.mxu0 %v2967
    %3070 = vmatpush1.bf16.msra.mxu0 %v2966
    %3071 = vmatprep.subr.bf16.mxu0 %v2983
    %3072 = vmatpush1.bf16.msra.mxu0 %v2982
    %3073 = vmatprep.subr.bf16.mxu0 0
    %3074 = vmatpush1.bf16.msra.mxu0 0
    %3075 = vmatprep.subr.bf16.mxu0 0
    %3076 = vmatpush1.bf16.msra.mxu0 0
    %3077 = vmatprep.subr.bf16.mxu0 0
    %3078 = vmatpush1.bf16.msra.mxu0 0
    %3079 = vmatprep.subr.bf16.mxu0 0
    %3080 = vmatpush1.bf16.msra.mxu0 0
    %3081 = vmatprep.subr.bf16.mxu0 0
    %3082 = vmatpush1.bf16.msra.mxu0 0
    %3083 = vmatprep.subr.bf16.mxu0 0
    %3084 = vmatpush1.bf16.msra.mxu0 0
    %3085 = vmatprep.subr.bf16.mxu0 0
    %3086 = vmatpush1.bf16.msra.mxu0 0
    %3087 = vmatprep.subr.bf16.mxu0 0
    %3088 = vmatpush1.bf16.msra.mxu0 0
    %3089 = vmatprep.subr.bf16.mxu0 0
    %3090 = vmatpush1.bf16.msra.mxu0 0
    %3091 = vmatprep.subr.bf16.mxu0 0
    %3092 = vmatpush1.bf16.msra.mxu0 0
    %3093 = vmatprep.subr.bf16.mxu0 0
    %3094 = vmatpush1.bf16.msra.mxu0 0
    %3095 = vmatprep.subr.bf16.mxu0 0
    %3096 = vmatpush1.bf16.msra.mxu0 0
    %3097 = vmatprep.mubr.bf16.mxu0 0
    %3098 = vmatmul.mubr.bf16.gmra.mrb[0].mxu0 %v3063
    %v3099 = vpop.f32.mrb[0].mxu0
    %v3100 = vadd.f32 0.0, %v3099
    %v3101 = vpop.f32.mrb[0].mxu0
    %v3102 = vadd.f32 0.0, %v3101
    %v3103 = vpop.f32.mrb[0].mxu0
    %v3104 = vpop.f32.mrb[0].mxu0
    %3105 = vdwg.mxu0
    %3106 = vmatprep.subr.bf16.mxu0 %v2937
    %3107 = vmatpush1.bf16.msra.mxu0 %v2936
    %3108 = vmatprep.subr.bf16.mxu0 %v2953
    %3109 = vmatpush1.bf16.msra.mxu0 %v2952
    %3110 = vmatprep.subr.bf16.mxu0 %v2969
    %3111 = vmatpush1.bf16.msra.mxu0 %v2968
    %3112 = vmatprep.subr.bf16.mxu0 %v2985
    %3113 = vmatpush1.bf16.msra.mxu0 %v2984
    %3114 = vmatprep.subr.bf16.mxu0 0
    %3115 = vmatpush1.bf16.msra.mxu0 0
    %3116 = vmatprep.subr.bf16.mxu0 0
    %3117 = vmatpush1.bf16.msra.mxu0 0
    %3118 = vmatprep.subr.bf16.mxu0 0
    %3119 = vmatpush1.bf16.msra.mxu0 0
    %3120 = vmatprep.subr.bf16.mxu0 0
    %3121 = vmatpush1.bf16.msra.mxu0 0
    %3122 = vmatprep.subr.bf16.mxu0 0
    %3123 = vmatpush1.bf16.msra.mxu0 0
    %3124 = vmatprep.subr.bf16.mxu0 0
    %3125 = vmatpush1.bf16.msra.mxu0 0
    %3126 = vmatprep.subr.bf16.mxu0 0
    %3127 = vmatpush1.bf16.msra.mxu0 0
    %3128 = vmatprep.subr.bf16.mxu0 0
    %3129 = vmatpush1.bf16.msra.mxu0 0
    %3130 = vmatprep.subr.bf16.mxu0 0
    %3131 = vmatpush1.bf16.msra.mxu0 0
    %3132 = vmatprep.subr.bf16.mxu0 0
    %3133 = vmatpush1.bf16.msra.mxu0 0
    %3134 = vmatprep.subr.bf16.mxu0 0
    %3135 = vmatpush1.bf16.msra.mxu0 0
    %3136 = vmatprep.subr.bf16.mxu0 0
    %3137 = vmatpush1.bf16.msra.mxu0 0
    %3138 = vmatprep.mubr.bf16.mxu0 0
    %3139 = vmatmul.mubr.bf16.gmra.mrb[0].mxu0 %v3063
    %v3140 = vpop.f32.mrb[0].mxu0
    %v3141 = vadd.f32 0.0, %v3140
    %v3142 = vpop.f32.mrb[0].mxu0
    %v3143 = vadd.f32 0.0, %v3142
    %v3144 = vpop.f32.mrb[0].mxu0
    %v3145 = vpop.f32.mrb[0].mxu0
    %3146 = vdwg.mxu0
    %3147 = vmatprep.subr.bf16.mxu0 %v2939
    %3148 = vmatpush1.bf16.msra.mxu0 %v2938
    %3149 = vmatprep.subr.bf16.mxu0 %v2955
    %3150 = vmatpush1.bf16.msra.mxu0 %v2954
    %3151 = vmatprep.subr.bf16.mxu0 %v2971
    %3152 = vmatpush1.bf16.msra.mxu0 %v2970
    %3153 = vmatprep.subr.bf16.mxu0 %v2987
    %3154 = vmatpush1.bf16.msra.mxu0 %v2986
    %3155 = vmatprep.subr.bf16.mxu0 0
    %3156 = vmatpush1.bf16.msra.mxu0 0
    %3157 = vmatprep.subr.bf16.mxu0 0
    %3158 = vmatpush1.bf16.msra.mxu0 0
    %3159 = vmatprep.subr.bf16.mxu0 0
    %3160 = vmatpush1.bf16.msra.mxu0 0
    %3161 = vmatprep.subr.bf16.mxu0 0
    %3162 = vmatpush1.bf16.msra.mxu0 0
    %3163 = vmatprep.subr.bf16.mxu0 0
    %3164 = vmatpush1.bf16.msra.mxu0 0
    %3165 = vmatprep.subr.bf16.mxu0 0
    %3166 = vmatpush1.bf16.msra.mxu0 0
    %3167 = vmatprep.subr.bf16.mxu0 0
    %3168 = vmatpush1.bf16.msra.mxu0 0
    %3169 = vmatprep.subr.bf16.mxu0 0
    %3170 = vmatpush1.bf16.msra.mxu0 0
    %3171 = vmatprep.subr.bf16.mxu0 0
    %3172 = vmatpush1.bf16.msra.mxu0 0
    %3173 = vmatprep.subr.bf16.mxu0 0
    %3174 = vmatpush1.bf16.msra.mxu0 0
    %3175 = vmatprep.subr.bf16.mxu0 0
    %3176 = vmatpush1.bf16.msra.mxu0 0
    %3177 = vmatprep.subr.bf16.mxu0 0
    %3178 = vmatpush1.bf16.msra.mxu0 0
    %3179 = vmatprep.mubr.bf16.mxu0 0
    %3180 = vmatmul.mubr.bf16.gmra.mrb[0].mxu0 %v3063
    %v3181 = vpop.f32.mrb[0].mxu0
    %v3182 = vadd.f32 0.0, %v3181
    %v3183 = vpop.f32.mrb[0].mxu0
    %v3184 = vadd.f32 0.0, %v3183
    %v3185 = vpop.f32.mrb[0].mxu0
    %v3186 = vpop.f32.mrb[0].mxu0
    %3187 = vdwg.mxu0
    %3188 = vmatprep.subr.bf16.mxu0 %v2941
    %3189 = vmatpush1.bf16.msra.mxu0 %v2940
    %3190 = vmatprep.subr.bf16.mxu0 %v2957
    %3191 = vmatpush1.bf16.msra.mxu0 %v2956
    %3192 = vmatprep.subr.bf16.mxu0 %v2973
    %3193 = vmatpush1.bf16.msra.mxu0 %v2972
    %3194 = vmatprep.subr.bf16.mxu0 %v2989
    %3195 = vmatpush1.bf16.msra.mxu0 %v2988
    %3196 = vmatprep.subr.bf16.mxu0 0
    %3197 = vmatpush1.bf16.msra.mxu0 0
    %3198 = vmatprep.subr.bf16.mxu0 0
    %3199 = vmatpush1.bf16.msra.mxu0 0
    %3200 = vmatprep.subr.bf16.mxu0 0
    %3201 = vmatpush1.bf16.msra.mxu0 0
    %3202 = vmatprep.subr.bf16.mxu0 0
    %3203 = vmatpush1.bf16.msra.mxu0 0
    %3204 = vmatprep.subr.bf16.mxu0 0
    %3205 = vmatpush1.bf16.msra.mxu0 0
    %3206 = vmatprep.subr.bf16.mxu0 0
    %3207 = vmatpush1.bf16.msra.mxu0 0
    %3208 = vmatprep.subr.bf16.mxu0 0
    %3209 = vmatpush1.bf16.msra.mxu0 0
    %3210 = vmatprep.subr.bf16.mxu0 0
    %3211 = vmatpush1.bf16.msra.mxu0 0
    %3212 = vmatprep.subr.bf16.mxu0 0
    %3213 = vmatpush1.bf16.msra.mxu0 0
    %3214 = vmatprep.subr.bf16.mxu0 0
    %3215 = vmatpush1.bf16.msra.mxu0 0
    %3216 = vmatprep.subr.bf16.mxu0 0
    %3217 = vmatpush1.bf16.msra.mxu0 0
    %3218 = vmatprep.subr.bf16.mxu0 0
    %3219 = vmatpush1.bf16.msra.mxu0 0
    %3220 = vmatprep.mubr.bf16.mxu0 0
    %3221 = vmatmul.mubr.bf16.gmra.mrb[0].mxu0 %v3063
    %v3222 = vpop.f32.mrb[0].mxu0
    %v3223 = vadd.f32 0.0, %v3222
    %v3224 = vpop.f32.mrb[0].mxu0
    %v3225 = vadd.f32 0.0, %v3224
    %v3226 = vpop.f32.mrb[0].mxu0
    %v3227 = vpop.f32.mrb[0].mxu0
    %3228 = vdwg.mxu0
    %3229 = vmatprep.subr.bf16.mxu0 %v2943
    %3230 = vmatpush1.bf16.msra.mxu0 %v2942
    %3231 = vmatprep.subr.bf16.mxu0 %v2959
    %3232 = vmatpush1.bf16.msra.mxu0 %v2958
    %3233 = vmatprep.subr.bf16.mxu0 %v2975
    %3234 = vmatpush1.bf16.msra.mxu0 %v2974
    %3235 = vmatprep.subr.bf16.mxu0 %v2991
    %3236 = vmatpush1.bf16.msra.mxu0 %v2990
    %3237 = vmatprep.subr.bf16.mxu0 0
    %3238 = vmatpush1.bf16.msra.mxu0 0
    %3239 = vmatprep.subr.bf16.mxu0 0
    %3240 = vmatpush1.bf16.msra.mxu0 0
    %3241 = vmatprep.subr.bf16.mxu0 0
    %3242 = vmatpush1.bf16.msra.mxu0 0
    %3243 = vmatprep.subr.bf16.mxu0 0
    %3244 = vmatpush1.bf16.msra.mxu0 0
    %3245 = vmatprep.subr.bf16.mxu0 0
    %3246 = vmatpush1.bf16.msra.mxu0 0
    %3247 = vmatprep.subr.bf16.mxu0 0
    %3248 = vmatpush1.bf16.msra.mxu0 0
    %3249 = vmatprep.subr.bf16.mxu0 0
    %3250 = vmatpush1.bf16.msra.mxu0 0
    %3251 = vmatprep.subr.bf16.mxu0 0
    %3252 = vmatpush1.bf16.msra.mxu0 0
    %3253 = vmatprep.subr.bf16.mxu0 0
    %3254 = vmatpush1.bf16.msra.mxu0 0
    %3255 = vmatprep.subr.bf16.mxu0 0
    %3256 = vmatpush1.bf16.msra.mxu0 0
    %3257 = vmatprep.subr.bf16.mxu0 0
    %3258 = vmatpush1.bf16.msra.mxu0 0
    %3259 = vmatprep.subr.bf16.mxu0 0
    %3260 = vmatpush1.bf16.msra.mxu0 0
    %3261 = vmatprep.mubr.bf16.mxu0 0
    %3262 = vmatmul.mubr.bf16.gmra.mrb[0].mxu0 %v3063
    %v3263 = vpop.f32.mrb[0].mxu0
    %v3264 = vadd.f32 0.0, %v3263
    %v3265 = vpop.f32.mrb[0].mxu0
    %v3266 = vadd.f32 0.0, %v3265
    %v3267 = vpop.f32.mrb[0].mxu0
    %v3268 = vpop.f32.mrb[0].mxu0
    %3269 = vdwg.mxu0
    %3270 = vmatprep.subr.bf16.mxu0 %v2945
    %3271 = vmatpush1.bf16.msra.mxu0 %v2944
    %3272 = vmatprep.subr.bf16.mxu0 %v2961
    %3273 = vmatpush1.bf16.msra.mxu0 %v2960
    %3274 = vmatprep.subr.bf16.mxu0 %v2977
    %3275 = vmatpush1.bf16.msra.mxu0 %v2976
    %3276 = vmatprep.subr.bf16.mxu0 %v2993
    %3277 = vmatpush1.bf16.msra.mxu0 %v2992
    %3278 = vmatprep.subr.bf16.mxu0 0
    %3279 = vmatpush1.bf16.msra.mxu0 0
    %3280 = vmatprep.subr.bf16.mxu0 0
    %3281 = vmatpush1.bf16.msra.mxu0 0
    %3282 = vmatprep.subr.bf16.mxu0 0
    %3283 = vmatpush1.bf16.msra.mxu0 0
    %3284 = vmatprep.subr.bf16.mxu0 0
    %3285 = vmatpush1.bf16.msra.mxu0 0
    %3286 = vmatprep.subr.bf16.mxu0 0
    %3287 = vmatpush1.bf16.msra.mxu0 0
    %3288 = vmatprep.subr.bf16.mxu0 0
    %3289 = vmatpush1.bf16.msra.mxu0 0
    %3290 = vmatprep.subr.bf16.mxu0 0
    %3291 = vmatpush1.bf16.msra.mxu0 0
    %3292 = vmatprep.subr.bf16.mxu0 0
    %3293 = vmatpush1.bf16.msra.mxu0 0
    %3294 = vmatprep.subr.bf16.mxu0 0
    %3295 = vmatpush1.bf16.msra.mxu0 0
    %3296 = vmatprep.subr.bf16.mxu0 0
    %3297 = vmatpush1.bf16.msra.mxu0 0
    %3298 = vmatprep.subr.bf16.mxu0 0
    %3299 = vmatpush1.bf16.msra.mxu0 0
    %3300 = vmatprep.subr.bf16.mxu0 0
    %3301 = vmatpush1.bf16.msra.mxu0 0
    %3302 = vmatprep.mubr.bf16.mxu0 0
    %3303 = vmatmul.mubr.bf16.gmra.mrb[0].mxu0 %v3063
    %v3304 = vpop.f32.mrb[0].mxu0
    %v3305 = vadd.f32 0.0, %v3304
    %v3306 = vpop.f32.mrb[0].mxu0
    %v3307 = vadd.f32 0.0, %v3306
    %v3308 = vpop.f32.mrb[0].mxu0
    %v3309 = vpop.f32.mrb[0].mxu0
    %3310 = vdwg.mxu0
    %3311 = vmatprep.subr.bf16.mxu0 %v2947
    %3312 = vmatpush1.bf16.msra.mxu0 %v2946
    %3313 = vmatprep.subr.bf16.mxu0 %v2963
    %3314 = vmatpush1.bf16.msra.mxu0 %v2962
    %3315 = vmatprep.subr.bf16.mxu0 %v2979
    %3316 = vmatpush1.bf16.msra.mxu0 %v2978
    %3317 = vmatprep.subr.bf16.mxu0 %v2995
    %3318 = vmatpush1.bf16.msra.mxu0 %v2994
    %3319 = vmatprep.subr.bf16.mxu0 0
    %3320 = vmatpush1.bf16.msra.mxu0 0
    %3321 = vmatprep.subr.bf16.mxu0 0
    %3322 = vmatpush1.bf16.msra.mxu0 0
    %3323 = vmatprep.subr.bf16.mxu0 0
    %3324 = vmatpush1.bf16.msra.mxu0 0
    %3325 = vmatprep.subr.bf16.mxu0 0
    %3326 = vmatpush1.bf16.msra.mxu0 0
    %3327 = vmatprep.subr.bf16.mxu0 0
    %3328 = vmatpush1.bf16.msra.mxu0 0
    %3329 = vmatprep.subr.bf16.mxu0 0
    %3330 = vmatpush1.bf16.msra.mxu0 0
    %3331 = vmatprep.subr.bf16.mxu0 0
    %3332 = vmatpush1.bf16.msra.mxu0 0
    %3333 = vmatprep.subr.bf16.mxu0 0
    %3334 = vmatpush1.bf16.msra.mxu0 0
    %3335 = vmatprep.subr.bf16.mxu0 0
    %3336 = vmatpush1.bf16.msra.mxu0 0
    %3337 = vmatprep.subr.bf16.mxu0 0
    %3338 = vmatpush1.bf16.msra.mxu0 0
    %3339 = vmatprep.subr.bf16.mxu0 0
    %3340 = vmatpush1.bf16.msra.mxu0 0
    %3341 = vmatprep.subr.bf16.mxu0 0
    %3342 = vmatpush1.bf16.msra.mxu0 0
    %3343 = vmatprep.mubr.bf16.mxu0 0
    %3344 = vmatmul.mubr.bf16.gmra.mrb[0].mxu0 %v3063
    %v3345 = vpop.f32.mrb[0].mxu0
    %v3346 = vadd.f32 0.0, %v3345
    %v3347 = vpop.f32.mrb[0].mxu0
    %v3348 = vadd.f32 0.0, %v3347
    %v3349 = vpop.f32.mrb[0].mxu0
    %v3350 = vpop.f32.mrb[0].mxu0
    %3351 = vdwg.mxu0
    %3352 = vmatprep.subr.bf16.mxu0 %v2949
    %3353 = vmatpush1.bf16.msra.mxu0 %v2948
    %3354 = vmatprep.subr.bf16.mxu0 %v2965
    %3355 = vmatpush1.bf16.msra.mxu0 %v2964
    %3356 = vmatprep.subr.bf16.mxu0 %v2981
    %3357 = vmatpush1.bf16.msra.mxu0 %v2980
    %3358 = vmatprep.subr.bf16.mxu0 %v2997
    %3359 = vmatpush1.bf16.msra.mxu0 %v2996
    %3360 = vmatprep.subr.bf16.mxu0 0
    %3361 = vmatpush1.bf16.msra.mxu0 0
    %3362 = vmatprep.subr.bf16.mxu0 0
    %3363 = vmatpush1.bf16.msra.mxu0 0
    %3364 = vmatprep.subr.bf16.mxu0 0
    %3365 = vmatpush1.bf16.msra.mxu0 0
    %3366 = vmatprep.subr.bf16.mxu0 0
    %3367 = vmatpush1.bf16.msra.mxu0 0
    %3368 = vmatprep.subr.bf16.mxu0 0
    %3369 = vmatpush1.bf16.msra.mxu0 0
    %3370 = vmatprep.subr.bf16.mxu0 0
    %3371 = vmatpush1.bf16.msra.mxu0 0
    %3372 = vmatprep.subr.bf16.mxu0 0
    %3373 = vmatpush1.bf16.msra.mxu0 0
    %3374 = vmatprep.subr.bf16.mxu0 0
    %3375 = vmatpush1.bf16.msra.mxu0 0
    %3376 = vmatprep.subr.bf16.mxu0 0
    %3377 = vmatpush1.bf16.msra.mxu0 0
    %3378 = vmatprep.subr.bf16.mxu0 0
    %3379 = vmatpush1.bf16.msra.mxu0 0
    %3380 = vmatprep.subr.bf16.mxu0 0
    %3381 = vmatpush1.bf16.msra.mxu0 0
    %3382 = vmatprep.subr.bf16.mxu0 0
    %3383 = vmatpush1.bf16.msra.mxu0 0
    %3384 = vmatprep.mubr.bf16.mxu0 0
    %3385 = vmatmul.mubr.bf16.gmra.mrb[0].mxu0 %v3063
    %v3386 = vpop.f32.mrb[0].mxu0
    %v3387 = vadd.f32 0.0, %v3386
    %v3388 = vpop.f32.mrb[0].mxu0
    %v3389 = vadd.f32 0.0, %v3388
    %v3390 = vpop.f32.mrb[0].mxu0
    %v3391 = vpop.f32.mrb[0].mxu0
    %3392 = vdwg.mxu0
    %v3393 = vpack.c.bf16 %v3100, %v3100
    %v3394 = vpack.c.bf16 %v3102, %v3102
    %v3395 = vpack.c.bf16 %v3141, %v3141
    %v3396 = vpack.c.bf16 %v3143, %v3143
    %v3397 = vpack.c.bf16 %v3182, %v3182
    %v3398 = vpack.c.bf16 %v3184, %v3184
    %v3399 = vpack.c.bf16 %v3223, %v3223
    %v3400 = vpack.c.bf16 %v3225, %v3225
    %v3401 = vpack.c.bf16 %v3264, %v3264
    %v3402 = vpack.c.bf16 %v3266, %v3266
    %v3403 = vpack.c.bf16 %v3305, %v3305
    %v3404 = vpack.c.bf16 %v3307, %v3307
    %v3405 = vpack.c.bf16 %v3346, %v3346
    %v3406 = vpack.c.bf16 %v3348, %v3348
    %v3407 = vpack.c.bf16 %v3387, %v3387
    %v3408 = vpack.c.bf16 %v3389, %v3389
    %v3411 = vcombine.high %v2571, %v2571
    %v3413 = vunpack.c.l.s4 1966171168
    %v3414 = vunpack.c.0.s8 %v3413
    %v3415 = vlaneseq
    %v3416 = vshrl.u32 %v3415, 7
    %v3417 = vsub.s32 %v3414, %v3416
    %v3418 = vrot.slane %v2571, %v3417
    %v3420 = vunpack.c.l.s4 1966171168
    %v3421 = vunpack.c.0.s8 %v3420
    %v3422 = vlaneseq
    %v3423 = vshrl.u32 %v3422, 7
    %v3424 = vsub.s32 %v3421, %v3423
    %v3425 = vrot.slane %v3411, %v3424
    %v3426 = vcombine.high %v3418, %v3418
    %v3427 = vcombine.high %v3425, %v3425
    %v3429 = vunpack.c.l.s4 1966171168
    %v3430 = vunpack.c.0.s8 %v3429
    %v3431 = vlaneseq
    %v3432 = vshrl.u32 %v3431, 7
    %v3433 = vsub.s32 %v3430, %v3432
    %v3434 = vrot.slane %v3418, %v3433
    %v3436 = vunpack.c.l.s4 1966171168
    %v3437 = vunpack.c.0.s8 %v3436
    %v3438 = vlaneseq
    %v3439 = vshrl.u32 %v3438, 7
    %v3440 = vsub.s32 %v3437, %v3439
    %v3441 = vrot.slane %v3425, %v3440
    %v3443 = vunpack.c.l.s4 1966171168
    %v3444 = vunpack.c.0.s8 %v3443
    %v3445 = vlaneseq
    %v3446 = vshrl.u32 %v3445, 7
    %v3447 = vsub.s32 %v3444, %v3446
    %v3448 = vrot.slane %v3426, %v3447
    %v3450 = vunpack.c.l.s4 1966171168
    %v3451 = vunpack.c.0.s8 %v3450
    %v3452 = vlaneseq
    %v3453 = vshrl.u32 %v3452, 7
    %v3454 = vsub.s32 %v3451, %v3453
    %v3455 = vrot.slane %v3427, %v3454
    %v3456 = vcombine.high %v3434, %v3434
    %v3457 = vcombine.high %v3441, %v3441
    %v3458 = vcombine.high %v3448, %v3448
    %v3459 = vcombine.high %v3455, %v3455
    %v3460 = vcombine.high %v2572, %v2572
    %v3462 = vunpack.c.l.s4 1966171168
    %v3463 = vunpack.c.0.s8 %v3462
    %v3464 = vlaneseq
    %v3465 = vshrl.u32 %v3464, 7
    %v3466 = vsub.s32 %v3463, %v3465
    %v3467 = vrot.slane %v2572, %v3466
    %v3469 = vunpack.c.l.s4 1966171168
    %v3470 = vunpack.c.0.s8 %v3469
    %v3471 = vlaneseq
    %v3472 = vshrl.u32 %v3471, 7
    %v3473 = vsub.s32 %v3470, %v3472
    %v3474 = vrot.slane %v3460, %v3473
    %v3475 = vcombine.high %v3467, %v3467
    %v3476 = vcombine.high %v3474, %v3474
    %v3478 = vunpack.c.l.s4 1966171168
    %v3479 = vunpack.c.0.s8 %v3478
    %v3480 = vlaneseq
    %v3481 = vshrl.u32 %v3480, 7
    %v3482 = vsub.s32 %v3479, %v3481
    %v3483 = vrot.slane %v3467, %v3482
    %v3485 = vunpack.c.l.s4 1966171168
    %v3486 = vunpack.c.0.s8 %v3485
    %v3487 = vlaneseq
    %v3488 = vshrl.u32 %v3487, 7
    %v3489 = vsub.s32 %v3486, %v3488
    %v3490 = vrot.slane %v3474, %v3489
    %v3492 = vunpack.c.l.s4 1966171168
    %v3493 = vunpack.c.0.s8 %v3492
    %v3494 = vlaneseq
    %v3495 = vshrl.u32 %v3494, 7
    %v3496 = vsub.s32 %v3493, %v3495
    %v3497 = vrot.slane %v3475, %v3496
    %v3499 = vunpack.c.l.s4 1966171168
    %v3500 = vunpack.c.0.s8 %v3499
    %v3501 = vlaneseq
    %v3502 = vshrl.u32 %v3501, 7
    %v3503 = vsub.s32 %v3500, %v3502
    %v3504 = vrot.slane %v3476, %v3503
    %v3505 = vcombine.high %v3483, %v3483
    %v3506 = vcombine.high %v3490, %v3490
    %v3507 = vcombine.high %v3497, %v3497
    %v3508 = vcombine.high %v3504, %v3504
    %v3510 = vshrl.u32 %v3434, 16
    %v3511 = vpack.i.b16 %v3510, %v3510
    %v3513 = vlaneseq
    %v3514 = vshrl.u32 %v3513, 7
    %v3515 = vsub.s32 0, %v3514
    %v3516 = vrot.slane %v3511, %v3515
    %v3518 = vshrl.u32 %v3448, 16
    %v3519 = vpack.i.b16 %v3518, %v3518
    %v3521 = vlaneseq
    %v3522 = vshrl.u32 %v3521, 7
    %v3523 = vsub.s32 0, %v3522
    %v3524 = vrot.slane %v3519, %v3523
    %v3526 = vshrl.u32 %v3456, 16
    %v3527 = vpack.i.b16 %v3526, %v3526
    %v3529 = vlaneseq
    %v3530 = vshrl.u32 %v3529, 7
    %v3531 = vsub.s32 0, %v3530
    %v3532 = vrot.slane %v3527, %v3531
    %v3534 = vshrl.u32 %v3458, 16
    %v3535 = vpack.i.b16 %v3534, %v3534
    %v3537 = vlaneseq
    %v3538 = vshrl.u32 %v3537, 7
    %v3539 = vsub.s32 0, %v3538
    %v3540 = vrot.slane %v3535, %v3539
    %v3542 = vshrl.u32 %v3441, 16
    %v3543 = vpack.i.b16 %v3542, %v3542
    %v3545 = vlaneseq
    %v3546 = vshrl.u32 %v3545, 7
    %v3547 = vsub.s32 0, %v3546
    %v3548 = vrot.slane %v3543, %v3547
    %v3550 = vshrl.u32 %v3455, 16
    %v3551 = vpack.i.b16 %v3550, %v3550
    %v3553 = vlaneseq
    %v3554 = vshrl.u32 %v3553, 7
    %v3555 = vsub.s32 0, %v3554
    %v3556 = vrot.slane %v3551, %v3555
    %v3558 = vshrl.u32 %v3457, 16
    %v3559 = vpack.i.b16 %v3558, %v3558
    %v3561 = vlaneseq
    %v3562 = vshrl.u32 %v3561, 7
    %v3563 = vsub.s32 0, %v3562
    %v3564 = vrot.slane %v3559, %v3563
    %v3566 = vshrl.u32 %v3459, 16
    %v3567 = vpack.i.b16 %v3566, %v3566
    %v3569 = vlaneseq
    %v3570 = vshrl.u32 %v3569, 7
    %v3571 = vsub.s32 0, %v3570
    %v3572 = vrot.slane %v3567, %v3571
    %v3574 = vshrl.u32 %v3483, 16
    %v3575 = vpack.i.b16 %v3574, %v3574
    %v3577 = vlaneseq
    %v3578 = vshrl.u32 %v3577, 7
    %v3579 = vsub.s32 0, %v3578
    %v3580 = vrot.slane %v3575, %v3579
    %v3582 = vshrl.u32 %v3497, 16
    %v3583 = vpack.i.b16 %v3582, %v3582
    %v3585 = vlaneseq
    %v3586 = vshrl.u32 %v3585, 7
    %v3587 = vsub.s32 0, %v3586
    %v3588 = vrot.slane %v3583, %v3587
    %v3590 = vshrl.u32 %v3505, 16
    %v3591 = vpack.i.b16 %v3590, %v3590
    %v3593 = vlaneseq
    %v3594 = vshrl.u32 %v3593, 7
    %v3595 = vsub.s32 0, %v3594
    %v3596 = vrot.slane %v3591, %v3595
    %v3598 = vshrl.u32 %v3507, 16
    %v3599 = vpack.i.b16 %v3598, %v3598
    %v3601 = vlaneseq
    %v3602 = vshrl.u32 %v3601, 7
    %v3603 = vsub.s32 0, %v3602
    %v3604 = vrot.slane %v3599, %v3603
    %v3606 = vshrl.u32 %v3490, 16
    %v3607 = vpack.i.b16 %v3606, %v3606
    %v3609 = vlaneseq
    %v3610 = vshrl.u32 %v3609, 7
    %v3611 = vsub.s32 0, %v3610
    %v3612 = vrot.slane %v3607, %v3611
    %v3614 = vshrl.u32 %v3504, 16
    %v3615 = vpack.i.b16 %v3614, %v3614
    %v3617 = vlaneseq
    %v3618 = vshrl.u32 %v3617, 7
    %v3619 = vsub.s32 0, %v3618
    %v3620 = vrot.slane %v3615, %v3619
    %v3622 = vshrl.u32 %v3506, 16
    %v3623 = vpack.i.b16 %v3622, %v3622
    %v3625 = vlaneseq
    %v3626 = vshrl.u32 %v3625, 7
    %v3627 = vsub.s32 0, %v3626
    %v3628 = vrot.slane %v3623, %v3627
    %v3630 = vshrl.u32 %v3508, 16
    %v3631 = vpack.i.b16 %v3630, %v3630
    %v3633 = vlaneseq
    %v3634 = vshrl.u32 %v3633, 7
    %v3635 = vsub.s32 0, %v3634
    %v3636 = vrot.slane %v3631, %v3635
    %v3637 = vadd.bf16 %v3393, %v3516
    %v3638 = vadd.bf16 %v3394, %v3524
    %v3639 = vadd.bf16 %v3395, %v3532
    %v3640 = vadd.bf16 %v3396, %v3540
    %v3641 = vadd.bf16 %v3397, %v3548
    %v3642 = vadd.bf16 %v3398, %v3556
    %v3643 = vadd.bf16 %v3399, %v3564
    %v3644 = vadd.bf16 %v3400, %v3572
    %v3645 = vadd.bf16 %v3401, %v3580
    %v3646 = vadd.bf16 %v3402, %v3588
    %v3647 = vadd.bf16 %v3403, %v3596
    %v3648 = vadd.bf16 %v3404, %v3604
    %v3649 = vadd.bf16 %v3405, %v3612
    %v3650 = vadd.bf16 %v3406, %v3620
    %v3651 = vadd.bf16 %v3407, %v3628
    %v3652 = vadd.bf16 %v3408, %v3636
    %v3653 = vmax.bf16 %v3637, 0
    %v3654 = vmax.bf16 %v3638, 0
    %v3655 = vmax.bf16 %v3639, 0
    %v3656 = vmax.bf16 %v3640, 0
    %v3657 = vmax.bf16 %v3641, 0
    %v3658 = vmax.bf16 %v3642, 0
    %v3659 = vmax.bf16 %v3643, 0
    %v3660 = vmax.bf16 %v3644, 0
    %v3661 = vmax.bf16 %v3645, 0
    %v3662 = vmax.bf16 %v3646, 0
    %v3663 = vmax.bf16 %v3647, 0
    %v3664 = vmax.bf16 %v3648, 0
    %v3665 = vmax.bf16 %v3649, 0
    %v3666 = vmax.bf16 %v3650, 0
    %v3667 = vmax.bf16 %v3651, 0
    %v3668 = vmax.bf16 %v3652, 0
    %v3669 = vld [vmem:[%s7] sm:$0xf]
    %v3670 = vld [vmem:[%s7 + $0x4] sm:$0xf]
    %v3671 = vld [vmem:[%s7 + $0x8] sm:$0xf]
    %v3672 = vld [vmem:[%s7 + $0xc] sm:$0xf]
    %v3673 = vld [vmem:[%s7 + $0x10] sm:$0xf]
    %v3674 = vld [vmem:[%s7 + $0x14] sm:$0xf]
    %v3675 = vld [vmem:[%s7 + $0x18] sm:$0xf]
    %v3676 = vld [vmem:[%s7 + $0x1c] sm:$0xf]
    %v3677 = vld [vmem:[%s7 + $0x20] sm:$0xf]
    %v3678 = vld [vmem:[%s7 + $0x24] sm:$0xf]
    %v3679 = vld [vmem:[%s7 + $0x28] sm:$0xf]
    %v3680 = vld [vmem:[%s7 + $0x2c] sm:$0xf]
    %v3681 = vld [vmem:[%s7 + $0x30] sm:$0xf]
    %v3682 = vld [vmem:[%s7 + $0x34] sm:$0xf]
    %v3683 = vld [vmem:[%s7 + $0x38] sm:$0xf]
    %v3684 = vld [vmem:[%s7 + $0x3c] sm:$0xf]
    %v3685 = vld [vmem:[%s7 + $0x40] sm:$0xf]
    %v3686 = vld [vmem:[%s7 + $0x44] sm:$0xf]
    %v3687 = vld [vmem:[%s7 + $0x48] sm:$0xf]
    %v3688 = vld [vmem:[%s7 + $0x4c] sm:$0xf]
    %v3689 = vld [vmem:[%s7 + $0x50] sm:$0xf]
    %v3690 = vld [vmem:[%s7 + $0x54] sm:$0xf]
    %v3691 = vld [vmem:[%s7 + $0x58] sm:$0xf]
    %v3692 = vld [vmem:[%s7 + $0x5c] sm:$0xf]
    %v3693 = vld [vmem:[%s7 + $0x60] sm:$0xf]
    %v3694 = vld [vmem:[%s7 + $0x64] sm:$0xf]
    %v3695 = vld [vmem:[%s7 + $0x68] sm:$0xf]
    %v3696 = vld [vmem:[%s7 + $0x6c] sm:$0xf]
    %v3697 = vld [vmem:[%s7 + $0x70] sm:$0xf]
    %v3698 = vld [vmem:[%s7 + $0x74] sm:$0xf]
    %v3699 = vld [vmem:[%s7 + $0x78] sm:$0xf]
    %v3700 = vld [vmem:[%s7 + $0x7c] sm:$0xf]
    %v3701 = vld [vmem:[%s7 + $0x80] sm:$0xf]
    %v3702 = vld [vmem:[%s7 + $0x84] sm:$0xf]
    %v3703 = vld [vmem:[%s7 + $0x88] sm:$0xf]
    %v3704 = vld [vmem:[%s7 + $0x8c] sm:$0xf]
    %v3705 = vld [vmem:[%s7 + $0x90] sm:$0xf]
    %v3706 = vld [vmem:[%s7 + $0x94] sm:$0xf]
    %v3707 = vld [vmem:[%s7 + $0x98] sm:$0xf]
    %v3708 = vld [vmem:[%s7 + $0x9c] sm:$0xf]
    %v3709 = vld [vmem:[%s7 + $0xa0] sm:$0xf]
    %v3710 = vld [vmem:[%s7 + $0xa4] sm:$0xf]
    %v3711 = vld [vmem:[%s7 + $0xa8] sm:$0xf]
    %v3712 = vld [vmem:[%s7 + $0xac] sm:$0xf]
    %v3713 = vld [vmem:[%s7 + $0xb0] sm:$0xf]
    %v3714 = vld [vmem:[%s7 + $0xb4] sm:$0xf]
    %v3715 = vld [vmem:[%s7 + $0xb8] sm:$0xf]
    %v3716 = vld [vmem:[%s7 + $0xbc] sm:$0xf]
    %v3717 = vld [vmem:[%s7 + $0xc0] sm:$0xf]
    %v3718 = vld [vmem:[%s7 + $0xc4] sm:$0xf]
    %v3719 = vld [vmem:[%s7 + $0xc8] sm:$0xf]
    %v3720 = vld [vmem:[%s7 + $0xcc] sm:$0xf]
    %v3721 = vld [vmem:[%s7 + $0xd0] sm:$0xf]
    %v3722 = vld [vmem:[%s7 + $0xd4] sm:$0xf]
    %v3723 = vld [vmem:[%s7 + $0xd8] sm:$0xf]
    %v3724 = vld [vmem:[%s7 + $0xdc] sm:$0xf]
    %v3725 = vld [vmem:[%s7 + $0xe0] sm:$0xf]
    %v3726 = vld [vmem:[%s7 + $0xe4] sm:$0xf]
    %v3727 = vld [vmem:[%s7 + $0xe8] sm:$0xf]
    %v3728 = vld [vmem:[%s7 + $0xec] sm:$0xf]
    %v3729 = vld [vmem:[%s7 + $0xf0] sm:$0xf]
    %v3730 = vld [vmem:[%s7 + $0xf4] sm:$0xf]
    %v3731 = vld [vmem:[%s7 + $0xf8] sm:$0xf]
    %v3732 = vld [vmem:[%s7 + $0xfc] sm:$0xf]
    %v3733 = vld [vmem:[%s7 + $0x100] sm:$0xf]
    %v3734 = vld [vmem:[%s7 + $0x104] sm:$0xf]
    %v3735 = vld [vmem:[%s7 + $0x108] sm:$0xf]
    %v3736 = vld [vmem:[%s7 + $0x10c] sm:$0xf]
    %v3737 = vld [vmem:[%s7 + $0x110] sm:$0xf]
    %v3738 = vld [vmem:[%s7 + $0x114] sm:$0xf]
    %v3739 = vld [vmem:[%s7 + $0x118] sm:$0xf]
    %v3740 = vld [vmem:[%s7 + $0x11c] sm:$0xf]
    %v3741 = vld [vmem:[%s7 + $0x120] sm:$0xf]
    %v3742 = vld [vmem:[%s7 + $0x124] sm:$0xf]
    %v3743 = vld [vmem:[%s7 + $0x128] sm:$0xf]
    %v3744 = vld [vmem:[%s7 + $0x12c] sm:$0xf]
    %v3745 = vld [vmem:[%s7 + $0x130] sm:$0xf]
    %v3746 = vld [vmem:[%s7 + $0x134] sm:$0xf]
    %v3747 = vld [vmem:[%s7 + $0x138] sm:$0xf]
    %v3748 = vld [vmem:[%s7 + $0x13c] sm:$0xf]
    %v3749 = vld [vmem:[%s7 + $0x140] sm:$0xf]
    %v3750 = vld [vmem:[%s7 + $0x144] sm:$0xf]
    %v3751 = vld [vmem:[%s7 + $0x148] sm:$0xf]
    %v3752 = vld [vmem:[%s7 + $0x14c] sm:$0xf]
    %v3753 = vld [vmem:[%s7 + $0x150] sm:$0xf]
    %v3754 = vld [vmem:[%s7 + $0x154] sm:$0xf]
    %v3755 = vld [vmem:[%s7 + $0x158] sm:$0xf]
    %v3756 = vld [vmem:[%s7 + $0x15c] sm:$0xf]
    %v3757 = vld [vmem:[%s7 + $0x160] sm:$0xf]
    %v3758 = vld [vmem:[%s7 + $0x164] sm:$0xf]
    %v3759 = vld [vmem:[%s7 + $0x168] sm:$0xf]
    %v3760 = vld [vmem:[%s7 + $0x16c] sm:$0xf]
    %v3761 = vld [vmem:[%s7 + $0x170] sm:$0xf]
    %v3762 = vld [vmem:[%s7 + $0x174] sm:$0xf]
    %v3763 = vld [vmem:[%s7 + $0x178] sm:$0xf]
    %v3764 = vld [vmem:[%s7 + $0x17c] sm:$0xf]
    %v3765 = vld [vmem:[%s7 + $0x180] sm:$0xf]
    %v3766 = vld [vmem:[%s7 + $0x184] sm:$0xf]
    %v3767 = vld [vmem:[%s7 + $0x188] sm:$0xf]
    %v3768 = vld [vmem:[%s7 + $0x18c] sm:$0xf]
    %v3769 = vld [vmem:[%s7 + $0x190] sm:$0xf]
    %v3770 = vld [vmem:[%s7 + $0x194] sm:$0xf]
    %v3771 = vld [vmem:[%s7 + $0x198] sm:$0xf]
    %v3772 = vld [vmem:[%s7 + $0x19c] sm:$0xf]
    %v3773 = vld [vmem:[%s7 + $0x1a0] sm:$0xf]
    %v3774 = vld [vmem:[%s7 + $0x1a4] sm:$0xf]
    %v3775 = vld [vmem:[%s7 + $0x1a8] sm:$0xf]
    %v3776 = vld [vmem:[%s7 + $0x1ac] sm:$0xf]
    %v3777 = vld [vmem:[%s7 + $0x1b0] sm:$0xf]
    %v3778 = vld [vmem:[%s7 + $0x1b4] sm:$0xf]
    %v3779 = vld [vmem:[%s7 + $0x1b8] sm:$0xf]
    %v3780 = vld [vmem:[%s7 + $0x1bc] sm:$0xf]
    %v3781 = vld [vmem:[%s7 + $0x1c0] sm:$0xf]
    %v3782 = vld [vmem:[%s7 + $0x1c4] sm:$0xf]
    %v3783 = vld [vmem:[%s7 + $0x1c8] sm:$0xf]
    %v3784 = vld [vmem:[%s7 + $0x1cc] sm:$0xf]
    %v3785 = vld [vmem:[%s7 + $0x1d0] sm:$0xf]
    %v3786 = vld [vmem:[%s7 + $0x1d4] sm:$0xf]
    %v3787 = vld [vmem:[%s7 + $0x1d8] sm:$0xf]
    %v3788 = vld [vmem:[%s7 + $0x1dc] sm:$0xf]
    %v3789 = vld [vmem:[%s7 + $0x1e0] sm:$0xf]
    %v3790 = vld [vmem:[%s7 + $0x1e4] sm:$0xf]
    %v3791 = vld [vmem:[%s7 + $0x1e8] sm:$0xf]
    %v3792 = vld [vmem:[%s7 + $0x1ec] sm:$0xf]
    %v3793 = vld [vmem:[%s7 + $0x1f0] sm:$0xf]
    %v3794 = vld [vmem:[%s7 + $0x1f4] sm:$0xf]
    %v3795 = vld [vmem:[%s7 + $0x1f8] sm:$0xf]
    %v3796 = vld [vmem:[%s7 + $0x1fc] sm:$0xf]
    %v3797 = vld [vmem:[%s7 + $0x200] sm:$0xf]
    %v3798 = vld [vmem:[%s7 + $0x204] sm:$0xf]
    %v3799 = vld [vmem:[%s7 + $0x208] sm:$0xf]
    %v3800 = vld [vmem:[%s7 + $0x20c] sm:$0xf]
    %v3801 = vld [vmem:[%s7 + $0x210] sm:$0xf]
    %v3802 = vld [vmem:[%s7 + $0x214] sm:$0xf]
    %v3803 = vld [vmem:[%s7 + $0x218] sm:$0xf]
    %v3804 = vld [vmem:[%s7 + $0x21c] sm:$0xf]
    %v3805 = vld [vmem:[%s7 + $0x220] sm:$0xf]
    %v3806 = vld [vmem:[%s7 + $0x224] sm:$0xf]
    %v3807 = vld [vmem:[%s7 + $0x228] sm:$0xf]
    %v3808 = vld [vmem:[%s7 + $0x22c] sm:$0xf]
    %v3809 = vld [vmem:[%s7 + $0x230] sm:$0xf]
    %v3810 = vld [vmem:[%s7 + $0x234] sm:$0xf]
    %v3811 = vld [vmem:[%s7 + $0x238] sm:$0xf]
    %v3812 = vld [vmem:[%s7 + $0x23c] sm:$0xf]
    %v3813 = vld [vmem:[%s7 + $0x240] sm:$0xf]
    %v3814 = vld [vmem:[%s7 + $0x244] sm:$0xf]
    %v3815 = vld [vmem:[%s7 + $0x248] sm:$0xf]
    %v3816 = vld [vmem:[%s7 + $0x24c] sm:$0xf]
    %v3817 = vld [vmem:[%s7 + $0x250] sm:$0xf]
    %v3818 = vld [vmem:[%s7 + $0x254] sm:$0xf]
    %v3819 = vld [vmem:[%s7 + $0x258] sm:$0xf]
    %v3820 = vld [vmem:[%s7 + $0x25c] sm:$0xf]
    %v3821 = vld [vmem:[%s7 + $0x260] sm:$0xf]
    %v3822 = vld [vmem:[%s7 + $0x264] sm:$0xf]
    %v3823 = vld [vmem:[%s7 + $0x268] sm:$0xf]
    %v3824 = vld [vmem:[%s7 + $0x26c] sm:$0xf]
    %v3825 = vld [vmem:[%s7 + $0x270] sm:$0xf]
    %v3826 = vld [vmem:[%s7 + $0x274] sm:$0xf]
    %v3827 = vld [vmem:[%s7 + $0x278] sm:$0xf]
    %v3828 = vld [vmem:[%s7 + $0x27c] sm:$0xf]
    %v3829 = vld [vmem:[%s7 + $0x280] sm:$0xf]
    %v3830 = vld [vmem:[%s7 + $0x284] sm:$0xf]
    %v3831 = vld [vmem:[%s7 + $0x288] sm:$0xf]
    %v3832 = vld [vmem:[%s7 + $0x28c] sm:$0xf]
    %v3833 = vld [vmem:[%s7 + $0x290] sm:$0xf]
    %v3834 = vld [vmem:[%s7 + $0x294] sm:$0xf]
    %v3835 = vld [vmem:[%s7 + $0x298] sm:$0xf]
    %v3836 = vld [vmem:[%s7 + $0x29c] sm:$0xf]
    %v3837 = vld [vmem:[%s7 + $0x2a0] sm:$0xf]
    %v3838 = vld [vmem:[%s7 + $0x2a4] sm:$0xf]
    %v3839 = vld [vmem:[%s7 + $0x2a8] sm:$0xf]
    %v3840 = vld [vmem:[%s7 + $0x2ac] sm:$0xf]
    %v3841 = vld [vmem:[%s7 + $0x2b0] sm:$0xf]
    %v3842 = vld [vmem:[%s7 + $0x2b4] sm:$0xf]
    %v3843 = vld [vmem:[%s7 + $0x2b8] sm:$0xf]
    %v3844 = vld [vmem:[%s7 + $0x2bc] sm:$0xf]
    %v3845 = vld [vmem:[%s7 + $0x2c0] sm:$0xf]
    %v3846 = vld [vmem:[%s7 + $0x2c4] sm:$0xf]
    %v3847 = vld [vmem:[%s7 + $0x2c8] sm:$0xf]
    %v3848 = vld [vmem:[%s7 + $0x2cc] sm:$0xf]
    %v3849 = vld [vmem:[%s7 + $0x2d0] sm:$0xf]
    %v3850 = vld [vmem:[%s7 + $0x2d4] sm:$0xf]
    %v3851 = vld [vmem:[%s7 + $0x2d8] sm:$0xf]
    %v3852 = vld [vmem:[%s7 + $0x2dc] sm:$0xf]
    %v3853 = vld [vmem:[%s7 + $0x2e0] sm:$0xf]
    %v3854 = vld [vmem:[%s7 + $0x2e4] sm:$0xf]
    %v3855 = vld [vmem:[%s7 + $0x2e8] sm:$0xf]
    %v3856 = vld [vmem:[%s7 + $0x2ec] sm:$0xf]
    %v3857 = vld [vmem:[%s7 + $0x2f0] sm:$0xf]
    %v3858 = vld [vmem:[%s7 + $0x2f4] sm:$0xf]
    %v3859 = vld [vmem:[%s7 + $0x2f8] sm:$0xf]
    %v3860 = vld [vmem:[%s7 + $0x2fc] sm:$0xf]
    %v3861 = vld [vmem:[%s7 + $0x300] sm:$0xf]
    %v3862 = vld [vmem:[%s7 + $0x304] sm:$0xf]
    %v3863 = vld [vmem:[%s7 + $0x308] sm:$0xf]
    %v3864 = vld [vmem:[%s7 + $0x30c] sm:$0xf]
    %v3865 = vld [vmem:[%s7 + $0x310] sm:$0xf]
    %v3866 = vld [vmem:[%s7 + $0x314] sm:$0xf]
    %v3867 = vld [vmem:[%s7 + $0x318] sm:$0xf]
    %v3868 = vld [vmem:[%s7 + $0x31c] sm:$0xf]
    %v3869 = vld [vmem:[%s7 + $0x320] sm:$0xf]
    %v3870 = vld [vmem:[%s7 + $0x324] sm:$0xf]
    %v3871 = vld [vmem:[%s7 + $0x328] sm:$0xf]
    %v3872 = vld [vmem:[%s7 + $0x32c] sm:$0xf]
    %v3873 = vld [vmem:[%s7 + $0x330] sm:$0xf]
    %v3874 = vld [vmem:[%s7 + $0x334] sm:$0xf]
    %v3875 = vld [vmem:[%s7 + $0x338] sm:$0xf]
    %v3876 = vld [vmem:[%s7 + $0x33c] sm:$0xf]
    %v3877 = vld [vmem:[%s7 + $0x340] sm:$0xf]
    %v3878 = vld [vmem:[%s7 + $0x344] sm:$0xf]
    %v3879 = vld [vmem:[%s7 + $0x348] sm:$0xf]
    %v3880 = vld [vmem:[%s7 + $0x34c] sm:$0xf]
    %v3881 = vld [vmem:[%s7 + $0x350] sm:$0xf]
    %v3882 = vld [vmem:[%s7 + $0x354] sm:$0xf]
    %v3883 = vld [vmem:[%s7 + $0x358] sm:$0xf]
    %v3884 = vld [vmem:[%s7 + $0x35c] sm:$0xf]
    %v3885 = vld [vmem:[%s7 + $0x360] sm:$0xf]
    %v3886 = vld [vmem:[%s7 + $0x364] sm:$0xf]
    %v3887 = vld [vmem:[%s7 + $0x368] sm:$0xf]
    %v3888 = vld [vmem:[%s7 + $0x36c] sm:$0xf]
    %v3889 = vld [vmem:[%s7 + $0x370] sm:$0xf]
    %v3890 = vld [vmem:[%s7 + $0x374] sm:$0xf]
    %v3891 = vld [vmem:[%s7 + $0x378] sm:$0xf]
    %v3892 = vld [vmem:[%s7 + $0x37c] sm:$0xf]
    %v3893 = vld [vmem:[%s7 + $0x380] sm:$0xf]
    %v3894 = vld [vmem:[%s7 + $0x384] sm:$0xf]
    %v3895 = vld [vmem:[%s7 + $0x388] sm:$0xf]
    %v3896 = vld [vmem:[%s7 + $0x38c] sm:$0xf]
    %v3897 = vld [vmem:[%s7 + $0x390] sm:$0xf]
    %v3898 = vld [vmem:[%s7 + $0x394] sm:$0xf]
    %v3899 = vld [vmem:[%s7 + $0x398] sm:$0xf]
    %v3900 = vld [vmem:[%s7 + $0x39c] sm:$0xf]
    %v3901 = vld [vmem:[%s7 + $0x3a0] sm:$0xf]
    %v3902 = vld [vmem:[%s7 + $0x3a4] sm:$0xf]
    %v3903 = vld [vmem:[%s7 + $0x3a8] sm:$0xf]
    %v3904 = vld [vmem:[%s7 + $0x3ac] sm:$0xf]
    %v3905 = vld [vmem:[%s7 + $0x3b0] sm:$0xf]
    %v3906 = vld [vmem:[%s7 + $0x3b4] sm:$0xf]
    %v3907 = vld [vmem:[%s7 + $0x3b8] sm:$0xf]
    %v3908 = vld [vmem:[%s7 + $0x3bc] sm:$0xf]
    %v3909 = vld [vmem:[%s7 + $0x3c0] sm:$0xf]
    %v3910 = vld [vmem:[%s7 + $0x3c4] sm:$0xf]
    %v3911 = vld [vmem:[%s7 + $0x3c8] sm:$0xf]
    %v3912 = vld [vmem:[%s7 + $0x3cc] sm:$0xf]
    %v3913 = vld [vmem:[%s7 + $0x3d0] sm:$0xf]
    %v3914 = vld [vmem:[%s7 + $0x3d4] sm:$0xf]
    %v3915 = vld [vmem:[%s7 + $0x3d8] sm:$0xf]
    %v3916 = vld [vmem:[%s7 + $0x3dc] sm:$0xf]
    %v3917 = vld [vmem:[%s7 + $0x3e0] sm:$0xf]
    %v3918 = vld [vmem:[%s7 + $0x3e4] sm:$0xf]
    %v3919 = vld [vmem:[%s7 + $0x3e8] sm:$0xf]
    %v3920 = vld [vmem:[%s7 + $0x3ec] sm:$0xf]
    %v3921 = vld [vmem:[%s7 + $0x3f0] sm:$0xf]
    %v3922 = vld [vmem:[%s7 + $0x3f4] sm:$0xf]
    %v3923 = vld [vmem:[%s7 + $0x3f8] sm:$0xf]
    %v3924 = vld [vmem:[%s7 + $0x3fc] sm:$0xf]
    %v3925 = vlaneseq
    %v3926 = vshrl.u32 %v3925, 7
    %v3927 = vsub.s32 0, %v3926
    %v3928 = vrot.slane %v2568, %v3927
    %v4185 = vunpack.c.l.b16 %v3669
    %v4186 = vunpack.c.l.b16 %v3670
    %v4187 = vunpack.c.l.b16 %v3671
    %v4188 = vunpack.c.l.b16 %v3672
    %v4189 = vunpack.c.l.b16 %v3673
    %v4190 = vunpack.c.l.b16 %v3674
    %v4191 = vunpack.c.l.b16 %v3675
    %v4192 = vunpack.c.l.b16 %v3676
    %v4193 = vunpack.c.l.b16 %v3677
    %v4194 = vunpack.c.l.b16 %v3678
    %v4195 = vunpack.c.l.b16 %v3679
    %v4196 = vunpack.c.l.b16 %v3680
    %v4197 = vunpack.c.l.b16 %v3681
    %v4198 = vunpack.c.l.b16 %v3682
    %v4199 = vunpack.c.l.b16 %v3683
    %v4200 = vunpack.c.l.b16 %v3684
    %v4201 = vunpack.c.l.b16 %v3685
    %v4202 = vunpack.c.l.b16 %v3686
    %v4203 = vunpack.c.l.b16 %v3687
    %v4204 = vunpack.c.l.b16 %v3688
    %v4205 = vunpack.c.l.b16 %v3689
    %v4206 = vunpack.c.l.b16 %v3690
    %v4207 = vunpack.c.l.b16 %v3691
    %v4208 = vunpack.c.l.b16 %v3692
    %v4209 = vunpack.c.l.b16 %v3693
    %v4210 = vunpack.c.l.b16 %v3694
    %v4211 = vunpack.c.l.b16 %v3695
    %v4212 = vunpack.c.l.b16 %v3696
    %v4213 = vunpack.c.l.b16 %v3697
    %v4214 = vunpack.c.l.b16 %v3698
    %v4215 = vunpack.c.l.b16 %v3699
    %v4216 = vunpack.c.l.b16 %v3700
    %v4217 = vunpack.c.l.b16 %v3701
    %v4218 = vunpack.c.l.b16 %v3702
    %v4219 = vunpack.c.l.b16 %v3703
    %v4220 = vunpack.c.l.b16 %v3704
    %v4221 = vunpack.c.l.b16 %v3705
    %v4222 = vunpack.c.l.b16 %v3706
    %v4223 = vunpack.c.l.b16 %v3707
    %v4224 = vunpack.c.l.b16 %v3708
    %v4225 = vunpack.c.l.b16 %v3709
    %v4226 = vunpack.c.l.b16 %v3710
    %v4227 = vunpack.c.l.b16 %v3711
    %v4228 = vunpack.c.l.b16 %v3712
    %v4229 = vunpack.c.l.b16 %v3713
    %v4230 = vunpack.c.l.b16 %v3714
    %v4231 = vunpack.c.l.b16 %v3715
    %v4232 = vunpack.c.l.b16 %v3716
    %v4233 = vunpack.c.l.b16 %v3717
    %v4234 = vunpack.c.l.b16 %v3718
    %v4235 = vunpack.c.l.b16 %v3719
    %v4236 = vunpack.c.l.b16 %v3720
    %v4237 = vunpack.c.l.b16 %v3721
    %v4238 = vunpack.c.l.b16 %v3722
    %v4239 = vunpack.c.l.b16 %v3723
    %v4240 = vunpack.c.l.b16 %v3724
    %v4241 = vunpack.c.l.b16 %v3725
    %v4242 = vunpack.c.l.b16 %v3726
    %v4243 = vunpack.c.l.b16 %v3727
    %v4244 = vunpack.c.l.b16 %v3728
    %v4245 = vunpack.c.l.b16 %v3729
    %v4246 = vunpack.c.l.b16 %v3730
    %v4247 = vunpack.c.l.b16 %v3731
    %v4248 = vunpack.c.l.b16 %v3732
    %v4249 = vunpack.c.l.b16 %v3733
    %v4250 = vunpack.c.l.b16 %v3734
    %v4251 = vunpack.c.l.b16 %v3735
    %v4252 = vunpack.c.l.b16 %v3736
    %v4253 = vunpack.c.l.b16 %v3737
    %v4254 = vunpack.c.l.b16 %v3738
    %v4255 = vunpack.c.l.b16 %v3739
    %v4256 = vunpack.c.l.b16 %v3740
    %v4257 = vunpack.c.l.b16 %v3741
    %v4258 = vunpack.c.l.b16 %v3742
    %v4259 = vunpack.c.l.b16 %v3743
    %v4260 = vunpack.c.l.b16 %v3744
    %v4261 = vunpack.c.l.b16 %v3745
    %v4262 = vunpack.c.l.b16 %v3746
    %v4263 = vunpack.c.l.b16 %v3747
    %v4264 = vunpack.c.l.b16 %v3748
    %v4265 = vunpack.c.l.b16 %v3749
    %v4266 = vunpack.c.l.b16 %v3750
    %v4267 = vunpack.c.l.b16 %v3751
    %v4268 = vunpack.c.l.b16 %v3752
    %v4269 = vunpack.c.l.b16 %v3753
    %v4270 = vunpack.c.l.b16 %v3754
    %v4271 = vunpack.c.l.b16 %v3755
    %v4272 = vunpack.c.l.b16 %v3756
    %v4273 = vunpack.c.l.b16 %v3757
    %v4274 = vunpack.c.l.b16 %v3758
    %v4275 = vunpack.c.l.b16 %v3759
    %v4276 = vunpack.c.l.b16 %v3760
    %v4277 = vunpack.c.l.b16 %v3761
    %v4278 = vunpack.c.l.b16 %v3762
    %v4279 = vunpack.c.l.b16 %v3763
    %v4280 = vunpack.c.l.b16 %v3764
    %v4281 = vunpack.c.l.b16 %v3765
    %v4282 = vunpack.c.l.b16 %v3766
    %v4283 = vunpack.c.l.b16 %v3767
    %v4284 = vunpack.c.l.b16 %v3768
    %v4285 = vunpack.c.l.b16 %v3769
    %v4286 = vunpack.c.l.b16 %v3770
    %v4287 = vunpack.c.l.b16 %v3771
    %v4288 = vunpack.c.l.b16 %v3772
    %v4289 = vunpack.c.l.b16 %v3773
    %v4290 = vunpack.c.l.b16 %v3774
    %v4291 = vunpack.c.l.b16 %v3775
    %v4292 = vunpack.c.l.b16 %v3776
    %v4293 = vunpack.c.l.b16 %v3777
    %v4294 = vunpack.c.l.b16 %v3778
    %v4295 = vunpack.c.l.b16 %v3779
    %v4296 = vunpack.c.l.b16 %v3780
    %v4297 = vunpack.c.l.b16 %v3781
    %v4298 = vunpack.c.l.b16 %v3782
    %v4299 = vunpack.c.l.b16 %v3783
    %v4300 = vunpack.c.l.b16 %v3784
    %v4301 = vunpack.c.l.b16 %v3785
    %v4302 = vunpack.c.l.b16 %v3786
    %v4303 = vunpack.c.l.b16 %v3787
    %v4304 = vunpack.c.l.b16 %v3788
    %v4305 = vunpack.c.l.b16 %v3789
    %v4306 = vunpack.c.l.b16 %v3790
    %v4307 = vunpack.c.l.b16 %v3791
    %v4308 = vunpack.c.l.b16 %v3792
    %v4309 = vunpack.c.l.b16 %v3793
    %v4310 = vunpack.c.l.b16 %v3794
    %v4311 = vunpack.c.l.b16 %v3795
    %v4312 = vunpack.c.l.b16 %v3796
    %v4313 = vunpack.c.l.b16 %v3797
    %v4314 = vunpack.c.l.b16 %v3798
    %v4315 = vunpack.c.l.b16 %v3799
    %v4316 = vunpack.c.l.b16 %v3800
    %v4317 = vunpack.c.l.b16 %v3801
    %v4318 = vunpack.c.l.b16 %v3802
    %v4319 = vunpack.c.l.b16 %v3803
    %v4320 = vunpack.c.l.b16 %v3804
    %v4321 = vunpack.c.l.b16 %v3805
    %v4322 = vunpack.c.l.b16 %v3806
    %v4323 = vunpack.c.l.b16 %v3807
    %v4324 = vunpack.c.l.b16 %v3808
    %v4325 = vunpack.c.l.b16 %v3809
    %v4326 = vunpack.c.l.b16 %v3810
    %v4327 = vunpack.c.l.b16 %v3811
    %v4328 = vunpack.c.l.b16 %v3812
    %v4329 = vunpack.c.l.b16 %v3813
    %v4330 = vunpack.c.l.b16 %v3814
    %v4331 = vunpack.c.l.b16 %v3815
    %v4332 = vunpack.c.l.b16 %v3816
    %v4333 = vunpack.c.l.b16 %v3817
    %v4334 = vunpack.c.l.b16 %v3818
    %v4335 = vunpack.c.l.b16 %v3819
    %v4336 = vunpack.c.l.b16 %v3820
    %v4337 = vunpack.c.l.b16 %v3821
    %v4338 = vunpack.c.l.b16 %v3822
    %v4339 = vunpack.c.l.b16 %v3823
    %v4340 = vunpack.c.l.b16 %v3824
    %v4341 = vunpack.c.l.b16 %v3825
    %v4342 = vunpack.c.l.b16 %v3826
    %v4343 = vunpack.c.l.b16 %v3827
    %v4344 = vunpack.c.l.b16 %v3828
    %v4345 = vunpack.c.l.b16 %v3829
    %v4346 = vunpack.c.l.b16 %v3830
    %v4347 = vunpack.c.l.b16 %v3831
    %v4348 = vunpack.c.l.b16 %v3832
    %v4349 = vunpack.c.l.b16 %v3833
    %v4350 = vunpack.c.l.b16 %v3834
    %v4351 = vunpack.c.l.b16 %v3835
    %v4352 = vunpack.c.l.b16 %v3836
    %v4353 = vunpack.c.l.b16 %v3837
    %v4354 = vunpack.c.l.b16 %v3838
    %v4355 = vunpack.c.l.b16 %v3839
    %v4356 = vunpack.c.l.b16 %v3840
    %v4357 = vunpack.c.l.b16 %v3841
    %v4358 = vunpack.c.l.b16 %v3842
    %v4359 = vunpack.c.l.b16 %v3843
    %v4360 = vunpack.c.l.b16 %v3844
    %v4361 = vunpack.c.l.b16 %v3845
    %v4362 = vunpack.c.l.b16 %v3846
    %v4363 = vunpack.c.l.b16 %v3847
    %v4364 = vunpack.c.l.b16 %v3848
    %v4365 = vunpack.c.l.b16 %v3849
    %v4366 = vunpack.c.l.b16 %v3850
    %v4367 = vunpack.c.l.b16 %v3851
    %v4368 = vunpack.c.l.b16 %v3852
    %v4369 = vunpack.c.l.b16 %v3853
    %v4370 = vunpack.c.l.b16 %v3854
    %v4371 = vunpack.c.l.b16 %v3855
    %v4372 = vunpack.c.l.b16 %v3856
    %v4373 = vunpack.c.l.b16 %v3857
    %v4374 = vunpack.c.l.b16 %v3858
    %v4375 = vunpack.c.l.b16 %v3859
    %v4376 = vunpack.c.l.b16 %v3860
    %v4377 = vunpack.c.l.b16 %v3861
    %v4378 = vunpack.c.l.b16 %v3862
    %v4379 = vunpack.c.l.b16 %v3863
    %v4380 = vunpack.c.l.b16 %v3864
    %v4381 = vunpack.c.l.b16 %v3865
    %v4382 = vunpack.c.l.b16 %v3866
    %v4383 = vunpack.c.l.b16 %v3867
    %v4384 = vunpack.c.l.b16 %v3868
    %v4385 = vunpack.c.l.b16 %v3869
    %v4386 = vunpack.c.l.b16 %v3870
    %v4387 = vunpack.c.l.b16 %v3871
    %v4388 = vunpack.c.l.b16 %v3872
    %v4389 = vunpack.c.l.b16 %v3873
    %v4390 = vunpack.c.l.b16 %v3874
    %v4391 = vunpack.c.l.b16 %v3875
    %v4392 = vunpack.c.l.b16 %v3876
    %v4393 = vunpack.c.l.b16 %v3877
    %v4394 = vunpack.c.l.b16 %v3878
    %v4395 = vunpack.c.l.b16 %v3879
    %v4396 = vunpack.c.l.b16 %v3880
    %v4397 = vunpack.c.l.b16 %v3881
    %v4398 = vunpack.c.l.b16 %v3882
    %v4399 = vunpack.c.l.b16 %v3883
    %v4400 = vunpack.c.l.b16 %v3884
    %v4401 = vunpack.c.l.b16 %v3885
    %v4402 = vunpack.c.l.b16 %v3886
    %v4403 = vunpack.c.l.b16 %v3887
    %v4404 = vunpack.c.l.b16 %v3888
    %v4405 = vunpack.c.l.b16 %v3889
    %v4406 = vunpack.c.l.b16 %v3890
    %v4407 = vunpack.c.l.b16 %v3891
    %v4408 = vunpack.c.l.b16 %v3892
    %v4409 = vunpack.c.l.b16 %v3893
    %v4410 = vunpack.c.l.b16 %v3894
    %v4411 = vunpack.c.l.b16 %v3895
    %v4412 = vunpack.c.l.b16 %v3896
    %v4413 = vunpack.c.l.b16 %v3897
    %v4414 = vunpack.c.l.b16 %v3898
    %v4415 = vunpack.c.l.b16 %v3899
    %v4416 = vunpack.c.l.b16 %v3900
    %v4417 = vunpack.c.l.b16 %v3901
    %v4418 = vunpack.c.l.b16 %v3902
    %v4419 = vunpack.c.l.b16 %v3903
    %v4420 = vunpack.c.l.b16 %v3904
    %v4421 = vunpack.c.l.b16 %v3905
    %v4422 = vunpack.c.l.b16 %v3906
    %v4423 = vunpack.c.l.b16 %v3907
    %v4424 = vunpack.c.l.b16 %v3908
    %v4425 = vunpack.c.l.b16 %v3909
    %v4426 = vunpack.c.l.b16 %v3910
    %v4427 = vunpack.c.l.b16 %v3911
    %v4428 = vunpack.c.l.b16 %v3912
    %v4429 = vunpack.c.l.b16 %v3913
    %v4430 = vunpack.c.l.b16 %v3914
    %v4431 = vunpack.c.l.b16 %v3915
    %v4432 = vunpack.c.l.b16 %v3916
    %v4433 = vunpack.c.l.b16 %v3917
    %v4434 = vunpack.c.l.b16 %v3918
    %v4435 = vunpack.c.l.b16 %v3919
    %v4436 = vunpack.c.l.b16 %v3920
    %v4437 = vunpack.c.l.b16 %v3921
    %v4438 = vunpack.c.l.b16 %v3922
    %v4439 = vunpack.c.l.b16 %v3923
    %v4440 = vunpack.c.l.b16 %v3924
    %v4441 = vpack.c.b16 %v4186, %v4185
    %v4442 = vpack.c.b16 %v4188, %v4187
    %v4443 = vpack.c.b16 %v4190, %v4189
    %v4444 = vpack.c.b16 %v4192, %v4191
    %v4445 = vpack.c.b16 %v4194, %v4193
    %v4446 = vpack.c.b16 %v4196, %v4195
    %v4447 = vpack.c.b16 %v4198, %v4197
    %v4448 = vpack.c.b16 %v4200, %v4199
    %v4449 = vpack.c.b16 %v4202, %v4201
    %v4450 = vpack.c.b16 %v4204, %v4203
    %v4451 = vpack.c.b16 %v4206, %v4205
    %v4452 = vpack.c.b16 %v4208, %v4207
    %v4453 = vpack.c.b16 %v4210, %v4209
    %v4454 = vpack.c.b16 %v4212, %v4211
    %v4455 = vpack.c.b16 %v4214, %v4213
    %v4456 = vpack.c.b16 %v4216, %v4215
    %v4457 = vpack.c.b16 %v4218, %v4217
    %v4458 = vpack.c.b16 %v4220, %v4219
    %v4459 = vpack.c.b16 %v4222, %v4221
    %v4460 = vpack.c.b16 %v4224, %v4223
    %v4461 = vpack.c.b16 %v4226, %v4225
    %v4462 = vpack.c.b16 %v4228, %v4227
    %v4463 = vpack.c.b16 %v4230, %v4229
    %v4464 = vpack.c.b16 %v4232, %v4231
    %v4465 = vpack.c.b16 %v4234, %v4233
    %v4466 = vpack.c.b16 %v4236, %v4235
    %v4467 = vpack.c.b16 %v4238, %v4237
    %v4468 = vpack.c.b16 %v4240, %v4239
    %v4469 = vpack.c.b16 %v4242, %v4241
    %v4470 = vpack.c.b16 %v4244, %v4243
    %v4471 = vpack.c.b16 %v4246, %v4245
    %v4472 = vpack.c.b16 %v4248, %v4247
    %v4473 = vpack.c.b16 %v4250, %v4249
    %v4474 = vpack.c.b16 %v4252, %v4251
    %v4475 = vpack.c.b16 %v4254, %v4253
    %v4476 = vpack.c.b16 %v4256, %v4255
    %v4477 = vpack.c.b16 %v4258, %v4257
    %v4478 = vpack.c.b16 %v4260, %v4259
    %v4479 = vpack.c.b16 %v4262, %v4261
    %v4480 = vpack.c.b16 %v4264, %v4263
    %v4481 = vpack.c.b16 %v4266, %v4265
    %v4482 = vpack.c.b16 %v4268, %v4267
    %v4483 = vpack.c.b16 %v4270, %v4269
    %v4484 = vpack.c.b16 %v4272, %v4271
    %v4485 = vpack.c.b16 %v4274, %v4273
    %v4486 = vpack.c.b16 %v4276, %v4275
    %v4487 = vpack.c.b16 %v4278, %v4277
    %v4488 = vpack.c.b16 %v4280, %v4279
    %v4489 = vpack.c.b16 %v4282, %v4281
    %v4490 = vpack.c.b16 %v4284, %v4283
    %v4491 = vpack.c.b16 %v4286, %v4285
    %v4492 = vpack.c.b16 %v4288, %v4287
    %v4493 = vpack.c.b16 %v4290, %v4289
    %v4494 = vpack.c.b16 %v4292, %v4291
    %v4495 = vpack.c.b16 %v4294, %v4293
    %v4496 = vpack.c.b16 %v4296, %v4295
    %v4497 = vpack.c.b16 %v4298, %v4297
    %v4498 = vpack.c.b16 %v4300, %v4299
    %v4499 = vpack.c.b16 %v4302, %v4301
    %v4500 = vpack.c.b16 %v4304, %v4303
    %v4501 = vpack.c.b16 %v4306, %v4305
    %v4502 = vpack.c.b16 %v4308, %v4307
    %v4503 = vpack.c.b16 %v4310, %v4309
    %v4504 = vpack.c.b16 %v4312, %v4311
    %v4505 = vpack.c.b16 %v4314, %v4313
    %v4506 = vpack.c.b16 %v4316, %v4315
    %v4507 = vpack.c.b16 %v4318, %v4317
    %v4508 = vpack.c.b16 %v4320, %v4319
    %v4509 = vpack.c.b16 %v4322, %v4321
    %v4510 = vpack.c.b16 %v4324, %v4323
    %v4511 = vpack.c.b16 %v4326, %v4325
    %v4512 = vpack.c.b16 %v4328, %v4327
    %v4513 = vpack.c.b16 %v4330, %v4329
    %v4514 = vpack.c.b16 %v4332, %v4331
    %v4515 = vpack.c.b16 %v4334, %v4333
    %v4516 = vpack.c.b16 %v4336, %v4335
    %v4517 = vpack.c.b16 %v4338, %v4337
    %v4518 = vpack.c.b16 %v4340, %v4339
    %v4519 = vpack.c.b16 %v4342, %v4341
    %v4520 = vpack.c.b16 %v4344, %v4343
    %v4521 = vpack.c.b16 %v4346, %v4345
    %v4522 = vpack.c.b16 %v4348, %v4347
    %v4523 = vpack.c.b16 %v4350, %v4349
    %v4524 = vpack.c.b16 %v4352, %v4351
    %v4525 = vpack.c.b16 %v4354, %v4353
    %v4526 = vpack.c.b16 %v4356, %v4355
    %v4527 = vpack.c.b16 %v4358, %v4357
    %v4528 = vpack.c.b16 %v4360, %v4359
    %v4529 = vpack.c.b16 %v4362, %v4361
    %v4530 = vpack.c.b16 %v4364, %v4363
    %v4531 = vpack.c.b16 %v4366, %v4365
    %v4532 = vpack.c.b16 %v4368, %v4367
    %v4533 = vpack.c.b16 %v4370, %v4369
    %v4534 = vpack.c.b16 %v4372, %v4371
    %v4535 = vpack.c.b16 %v4374, %v4373
    %v4536 = vpack.c.b16 %v4376, %v4375
    %v4537 = vpack.c.b16 %v4378, %v4377
    %v4538 = vpack.c.b16 %v4380, %v4379
    %v4539 = vpack.c.b16 %v4382, %v4381
    %v4540 = vpack.c.b16 %v4384, %v4383
    %v4541 = vpack.c.b16 %v4386, %v4385
    %v4542 = vpack.c.b16 %v4388, %v4387
    %v4543 = vpack.c.b16 %v4390, %v4389
    %v4544 = vpack.c.b16 %v4392, %v4391
    %v4545 = vpack.c.b16 %v4394, %v4393
    %v4546 = vpack.c.b16 %v4396, %v4395
    %v4547 = vpack.c.b16 %v4398, %v4397
    %v4548 = vpack.c.b16 %v4400, %v4399
    %v4549 = vpack.c.b16 %v4402, %v4401
    %v4550 = vpack.c.b16 %v4404, %v4403
    %v4551 = vpack.c.b16 %v4406, %v4405
    %v4552 = vpack.c.b16 %v4408, %v4407
    %v4553 = vpack.c.b16 %v4410, %v4409
    %v4554 = vpack.c.b16 %v4412, %v4411
    %v4555 = vpack.c.b16 %v4414, %v4413
    %v4556 = vpack.c.b16 %v4416, %v4415
    %v4557 = vpack.c.b16 %v4418, %v4417
    %v4558 = vpack.c.b16 %v4420, %v4419
    %v4559 = vpack.c.b16 %v4422, %v4421
    %v4560 = vpack.c.b16 %v4424, %v4423
    %v4561 = vpack.c.b16 %v4426, %v4425
    %v4562 = vpack.c.b16 %v4428, %v4427
    %v4563 = vpack.c.b16 %v4430, %v4429
    %v4564 = vpack.c.b16 %v4432, %v4431
    %v4565 = vpack.c.b16 %v4434, %v4433
    %v4566 = vpack.c.b16 %v4436, %v4435
    %v4567 = vpack.c.b16 %v4438, %v4437
    %v4568 = vpack.c.b16 %v4440, %v4439
    %4697 = vmatprep.subr.bf16.mxu0 0
    %4698 = vmatpush1.bf16.msra.mxu0 %v4441
    %4699 = vmatprep.subr.bf16.mxu0 0
    %4700 = vmatpush1.bf16.msra.mxu0 %v4442
    %4701 = vmatprep.subr.bf16.mxu0 0
    %4702 = vmatpush1.bf16.msra.mxu0 %v4443
    %4703 = vmatprep.subr.bf16.mxu0 0
    %4704 = vmatpush1.bf16.msra.mxu0 %v4444
    %4705 = vmatprep.subr.bf16.mxu0 0
    %4706 = vmatpush1.bf16.msra.mxu0 %v4445
    %4707 = vmatprep.subr.bf16.mxu0 0
    %4708 = vmatpush1.bf16.msra.mxu0 %v4446
    %4709 = vmatprep.subr.bf16.mxu0 0
    %4710 = vmatpush1.bf16.msra.mxu0 %v4447
    %4711 = vmatprep.subr.bf16.mxu0 0
    %4712 = vmatpush1.bf16.msra.mxu0 %v4448
    %4713 = vmatprep.subr.bf16.mxu0 0
    %4714 = vmatpush1.bf16.msra.mxu0 %v4449
    %4715 = vmatprep.subr.bf16.mxu0 0
    %4716 = vmatpush1.bf16.msra.mxu0 %v4450
    %4717 = vmatprep.subr.bf16.mxu0 0
    %4718 = vmatpush1.bf16.msra.mxu0 %v4451
    %4719 = vmatprep.subr.bf16.mxu0 0
    %4720 = vmatpush1.bf16.msra.mxu0 %v4452
    %4721 = vmatprep.subr.bf16.mxu0 0
    %4722 = vmatpush1.bf16.msra.mxu0 %v4453
    %4723 = vmatprep.subr.bf16.mxu0 0
    %4724 = vmatpush1.bf16.msra.mxu0 %v4454
    %4725 = vmatprep.subr.bf16.mxu0 0
    %4726 = vmatpush1.bf16.msra.mxu0 %v4455
    %4727 = vmatprep.subr.bf16.mxu0 0
    %4728 = vmatpush1.bf16.msra.mxu0 %v4456
    %4729 = vmatprep.mubr.bf16.mxu0 %v3654
    %4730 = vmatmul.mubr.bf16.gmra.mrb[0].mxu0 %v3653
    %v4731 = vpop.f32.mrb[0].mxu0
    %v4732 = vadd.f32 %v3928, %v4731
    %v4733 = vpop.f32.mrb[0].mxu0
    %v4734 = vpop.f32.mrb[0].mxu0
    %v4735 = vpop.f32.mrb[0].mxu0
    %4736 = vdwg.mxu0
    %4737 = vmatprep.subr.bf16.mxu0 0
    %4738 = vmatpush1.bf16.msra.mxu0 %v4457
    %4739 = vmatprep.subr.bf16.mxu0 0
    %4740 = vmatpush1.bf16.msra.mxu0 %v4458
    %4741 = vmatprep.subr.bf16.mxu0 0
    %4742 = vmatpush1.bf16.msra.mxu0 %v4459
    %4743 = vmatprep.subr.bf16.mxu0 0
    %4744 = vmatpush1.bf16.msra.mxu0 %v4460
    %4745 = vmatprep.subr.bf16.mxu0 0
    %4746 = vmatpush1.bf16.msra.mxu0 %v4461
    %4747 = vmatprep.subr.bf16.mxu0 0
    %4748 = vmatpush1.bf16.msra.mxu0 %v4462
    %4749 = vmatprep.subr.bf16.mxu0 0
    %4750 = vmatpush1.bf16.msra.mxu0 %v4463
    %4751 = vmatprep.subr.bf16.mxu0 0
    %4752 = vmatpush1.bf16.msra.mxu0 %v4464
    %4753 = vmatprep.subr.bf16.mxu0 0
    %4754 = vmatpush1.bf16.msra.mxu0 %v4465
    %4755 = vmatprep.subr.bf16.mxu0 0
    %4756 = vmatpush1.bf16.msra.mxu0 %v4466
    %4757 = vmatprep.subr.bf16.mxu0 0
    %4758 = vmatpush1.bf16.msra.mxu0 %v4467
    %4759 = vmatprep.subr.bf16.mxu0 0
    %4760 = vmatpush1.bf16.msra.mxu0 %v4468
    %4761 = vmatprep.subr.bf16.mxu0 0
    %4762 = vmatpush1.bf16.msra.mxu0 %v4469
    %4763 = vmatprep.subr.bf16.mxu0 0
    %4764 = vmatpush1.bf16.msra.mxu0 %v4470
    %4765 = vmatprep.subr.bf16.mxu0 0
    %4766 = vmatpush1.bf16.msra.mxu0 %v4471
    %4767 = vmatprep.subr.bf16.mxu0 0
    %4768 = vmatpush1.bf16.msra.mxu0 %v4472
    %4769 = vmatprep.mubr.bf16.mxu0 %v3656
    %4770 = vmatmul.mubr.bf16.gmra.mrb[0].mxu0 %v3655
    %v4771 = vpop.f32.mrb[0].mxu0
    %v4772 = vadd.f32 %v4732, %v4771
    %v4773 = vpop.f32.mrb[0].mxu0
    %v4774 = vpop.f32.mrb[0].mxu0
    %v4775 = vpop.f32.mrb[0].mxu0
    %4776 = vdwg.mxu0
    %4777 = vmatprep.subr.bf16.mxu0 0
    %4778 = vmatpush1.bf16.msra.mxu0 %v4473
    %4779 = vmatprep.subr.bf16.mxu0 0
    %4780 = vmatpush1.bf16.msra.mxu0 %v4474
    %4781 = vmatprep.subr.bf16.mxu0 0
    %4782 = vmatpush1.bf16.msra.mxu0 %v4475
    %4783 = vmatprep.subr.bf16.mxu0 0
    %4784 = vmatpush1.bf16.msra.mxu0 %v4476
    %4785 = vmatprep.subr.bf16.mxu0 0
    %4786 = vmatpush1.bf16.msra.mxu0 %v4477
    %4787 = vmatprep.subr.bf16.mxu0 0
    %4788 = vmatpush1.bf16.msra.mxu0 %v4478
    %4789 = vmatprep.subr.bf16.mxu0 0
    %4790 = vmatpush1.bf16.msra.mxu0 %v4479
    %4791 = vmatprep.subr.bf16.mxu0 0
    %4792 = vmatpush1.bf16.msra.mxu0 %v4480
    %4793 = vmatprep.subr.bf16.mxu0 0
    %4794 = vmatpush1.bf16.msra.mxu0 %v4481
    %4795 = vmatprep.subr.bf16.mxu0 0
    %4796 = vmatpush1.bf16.msra.mxu0 %v4482
    %4797 = vmatprep.subr.bf16.mxu0 0
    %4798 = vmatpush1.bf16.msra.mxu0 %v4483
    %4799 = vmatprep.subr.bf16.mxu0 0
    %4800 = vmatpush1.bf16.msra.mxu0 %v4484
    %4801 = vmatprep.subr.bf16.mxu0 0
    %4802 = vmatpush1.bf16.msra.mxu0 %v4485
    %4803 = vmatprep.subr.bf16.mxu0 0
    %4804 = vmatpush1.bf16.msra.mxu0 %v4486
    %4805 = vmatprep.subr.bf16.mxu0 0
    %4806 = vmatpush1.bf16.msra.mxu0 %v4487
    %4807 = vmatprep.subr.bf16.mxu0 0
    %4808 = vmatpush1.bf16.msra.mxu0 %v4488
    %4809 = vmatprep.mubr.bf16.mxu0 %v3658
    %4810 = vmatmul.mubr.bf16.gmra.mrb[0].mxu0 %v3657
    %v4811 = vpop.f32.mrb[0].mxu0
    %v4812 = vadd.f32 %v4772, %v4811
    %v4813 = vpop.f32.mrb[0].mxu0
    %v4814 = vpop.f32.mrb[0].mxu0
    %v4815 = vpop.f32.mrb[0].mxu0
    %4816 = vdwg.mxu0
    %4817 = vmatprep.subr.bf16.mxu0 0
    %4818 = vmatpush1.bf16.msra.mxu0 %v4489
    %4819 = vmatprep.subr.bf16.mxu0 0
    %4820 = vmatpush1.bf16.msra.mxu0 %v4490
    %4821 = vmatprep.subr.bf16.mxu0 0
    %4822 = vmatpush1.bf16.msra.mxu0 %v4491
    %4823 = vmatprep.subr.bf16.mxu0 0
    %4824 = vmatpush1.bf16.msra.mxu0 %v4492
    %4825 = vmatprep.subr.bf16.mxu0 0
    %4826 = vmatpush1.bf16.msra.mxu0 %v4493
    %4827 = vmatprep.subr.bf16.mxu0 0
    %4828 = vmatpush1.bf16.msra.mxu0 %v4494
    %4829 = vmatprep.subr.bf16.mxu0 0
    %4830 = vmatpush1.bf16.msra.mxu0 %v4495
    %4831 = vmatprep.subr.bf16.mxu0 0
    %4832 = vmatpush1.bf16.msra.mxu0 %v4496
    %4833 = vmatprep.subr.bf16.mxu0 0
    %4834 = vmatpush1.bf16.msra.mxu0 %v4497
    %4835 = vmatprep.subr.bf16.mxu0 0
    %4836 = vmatpush1.bf16.msra.mxu0 %v4498
    %4837 = vmatprep.subr.bf16.mxu0 0
    %4838 = vmatpush1.bf16.msra.mxu0 %v4499
    %4839 = vmatprep.subr.bf16.mxu0 0
    %4840 = vmatpush1.bf16.msra.mxu0 %v4500
    %4841 = vmatprep.subr.bf16.mxu0 0
    %4842 = vmatpush1.bf16.msra.mxu0 %v4501
    %4843 = vmatprep.subr.bf16.mxu0 0
    %4844 = vmatpush1.bf16.msra.mxu0 %v4502
    %4845 = vmatprep.subr.bf16.mxu0 0
    %4846 = vmatpush1.bf16.msra.mxu0 %v4503
    %4847 = vmatprep.subr.bf16.mxu0 0
    %4848 = vmatpush1.bf16.msra.mxu0 %v4504
    %4849 = vmatprep.mubr.bf16.mxu0 %v3660
    %4850 = vmatmul.mubr.bf16.gmra.mrb[0].mxu0 %v3659
    %v4851 = vpop.f32.mrb[0].mxu0
    %v4852 = vadd.f32 %v4812, %v4851
    %v4853 = vpop.f32.mrb[0].mxu0
    %v4854 = vpop.f32.mrb[0].mxu0
    %v4855 = vpop.f32.mrb[0].mxu0
    %4856 = vdwg.mxu0
    %4857 = vmatprep.subr.bf16.mxu0 0
    %4858 = vmatpush1.bf16.msra.mxu0 %v4505
    %4859 = vmatprep.subr.bf16.mxu0 0
    %4860 = vmatpush1.bf16.msra.mxu0 %v4506
    %4861 = vmatprep.subr.bf16.mxu0 0
    %4862 = vmatpush1.bf16.msra.mxu0 %v4507
    %4863 = vmatprep.subr.bf16.mxu0 0
    %4864 = vmatpush1.bf16.msra.mxu0 %v4508
    %4865 = vmatprep.subr.bf16.mxu0 0
    %4866 = vmatpush1.bf16.msra.mxu0 %v4509
    %4867 = vmatprep.subr.bf16.mxu0 0
    %4868 = vmatpush1.bf16.msra.mxu0 %v4510
    %4869 = vmatprep.subr.bf16.mxu0 0
    %4870 = vmatpush1.bf16.msra.mxu0 %v4511
    %4871 = vmatprep.subr.bf16.mxu0 0
    %4872 = vmatpush1.bf16.msra.mxu0 %v4512
    %4873 = vmatprep.subr.bf16.mxu0 0
    %4874 = vmatpush1.bf16.msra.mxu0 %v4513
    %4875 = vmatprep.subr.bf16.mxu0 0
    %4876 = vmatpush1.bf16.msra.mxu0 %v4514
    %4877 = vmatprep.subr.bf16.mxu0 0
    %4878 = vmatpush1.bf16.msra.mxu0 %v4515
    %4879 = vmatprep.subr.bf16.mxu0 0
    %4880 = vmatpush1.bf16.msra.mxu0 %v4516
    %4881 = vmatprep.subr.bf16.mxu0 0
    %4882 = vmatpush1.bf16.msra.mxu0 %v4517
    %4883 = vmatprep.subr.bf16.mxu0 0
    %4884 = vmatpush1.bf16.msra.mxu0 %v4518
    %4885 = vmatprep.subr.bf16.mxu0 0
    %4886 = vmatpush1.bf16.msra.mxu0 %v4519
    %4887 = vmatprep.subr.bf16.mxu0 0
    %4888 = vmatpush1.bf16.msra.mxu0 %v4520
    %4889 = vmatprep.mubr.bf16.mxu0 %v3662
    %4890 = vmatmul.mubr.bf16.gmra.mrb[0].mxu0 %v3661
    %v4891 = vpop.f32.mrb[0].mxu0
    %v4892 = vadd.f32 %v4852, %v4891
    %v4893 = vpop.f32.mrb[0].mxu0
    %v4894 = vpop.f32.mrb[0].mxu0
    %v4895 = vpop.f32.mrb[0].mxu0
    %4896 = vdwg.mxu0
    %4897 = vmatprep.subr.bf16.mxu0 0
    %4898 = vmatpush1.bf16.msra.mxu0 %v4521
    %4899 = vmatprep.subr.bf16.mxu0 0
    %4900 = vmatpush1.bf16.msra.mxu0 %v4522
    %4901 = vmatprep.subr.bf16.mxu0 0
    %4902 = vmatpush1.bf16.msra.mxu0 %v4523
    %4903 = vmatprep.subr.bf16.mxu0 0
    %4904 = vmatpush1.bf16.msra.mxu0 %v4524
    %4905 = vmatprep.subr.bf16.mxu0 0
    %4906 = vmatpush1.bf16.msra.mxu0 %v4525
    %4907 = vmatprep.subr.bf16.mxu0 0
    %4908 = vmatpush1.bf16.msra.mxu0 %v4526
    %4909 = vmatprep.subr.bf16.mxu0 0
    %4910 = vmatpush1.bf16.msra.mxu0 %v4527
    %4911 = vmatprep.subr.bf16.mxu0 0
    %4912 = vmatpush1.bf16.msra.mxu0 %v4528
    %4913 = vmatprep.subr.bf16.mxu0 0
    %4914 = vmatpush1.bf16.msra.mxu0 %v4529
    %4915 = vmatprep.subr.bf16.mxu0 0
    %4916 = vmatpush1.bf16.msra.mxu0 %v4530
    %4917 = vmatprep.subr.bf16.mxu0 0
    %4918 = vmatpush1.bf16.msra.mxu0 %v4531
    %4919 = vmatprep.subr.bf16.mxu0 0
    %4920 = vmatpush1.bf16.msra.mxu0 %v4532
    %4921 = vmatprep.subr.bf16.mxu0 0
    %4922 = vmatpush1.bf16.msra.mxu0 %v4533
    %4923 = vmatprep.subr.bf16.mxu0 0
    %4924 = vmatpush1.bf16.msra.mxu0 %v4534
    %4925 = vmatprep.subr.bf16.mxu0 0
    %4926 = vmatpush1.bf16.msra.mxu0 %v4535
    %4927 = vmatprep.subr.bf16.mxu0 0
    %4928 = vmatpush1.bf16.msra.mxu0 %v4536
    %4929 = vmatprep.mubr.bf16.mxu0 %v3664
    %4930 = vmatmul.mubr.bf16.gmra.mrb[0].mxu0 %v3663
    %v4931 = vpop.f32.mrb[0].mxu0
    %v4932 = vadd.f32 %v4892, %v4931
    %v4933 = vpop.f32.mrb[0].mxu0
    %v4934 = vpop.f32.mrb[0].mxu0
    %v4935 = vpop.f32.mrb[0].mxu0
    %4936 = vdwg.mxu0
    %4937 = vmatprep.subr.bf16.mxu0 0
    %4938 = vmatpush1.bf16.msra.mxu0 %v4537
    %4939 = vmatprep.subr.bf16.mxu0 0
    %4940 = vmatpush1.bf16.msra.mxu0 %v4538
    %4941 = vmatprep.subr.bf16.mxu0 0
    %4942 = vmatpush1.bf16.msra.mxu0 %v4539
    %4943 = vmatprep.subr.bf16.mxu0 0
    %4944 = vmatpush1.bf16.msra.mxu0 %v4540
    %4945 = vmatprep.subr.bf16.mxu0 0
    %4946 = vmatpush1.bf16.msra.mxu0 %v4541
    %4947 = vmatprep.subr.bf16.mxu0 0
    %4948 = vmatpush1.bf16.msra.mxu0 %v4542
    %4949 = vmatprep.subr.bf16.mxu0 0
    %4950 = vmatpush1.bf16.msra.mxu0 %v4543
    %4951 = vmatprep.subr.bf16.mxu0 0
    %4952 = vmatpush1.bf16.msra.mxu0 %v4544
    %4953 = vmatprep.subr.bf16.mxu0 0
    %4954 = vmatpush1.bf16.msra.mxu0 %v4545
    %4955 = vmatprep.subr.bf16.mxu0 0
    %4956 = vmatpush1.bf16.msra.mxu0 %v4546
    %4957 = vmatprep.subr.bf16.mxu0 0
    %4958 = vmatpush1.bf16.msra.mxu0 %v4547
    %4959 = vmatprep.subr.bf16.mxu0 0
    %4960 = vmatpush1.bf16.msra.mxu0 %v4548
    %4961 = vmatprep.subr.bf16.mxu0 0
    %4962 = vmatpush1.bf16.msra.mxu0 %v4549
    %4963 = vmatprep.subr.bf16.mxu0 0
    %4964 = vmatpush1.bf16.msra.mxu0 %v4550
    %4965 = vmatprep.subr.bf16.mxu0 0
    %4966 = vmatpush1.bf16.msra.mxu0 %v4551
    %4967 = vmatprep.subr.bf16.mxu0 0
    %4968 = vmatpush1.bf16.msra.mxu0 %v4552
    %4969 = vmatprep.mubr.bf16.mxu0 %v3666
    %4970 = vmatmul.mubr.bf16.gmra.mrb[0].mxu0 %v3665
    %v4971 = vpop.f32.mrb[0].mxu0
    %v4972 = vadd.f32 %v4932, %v4971
    %v4973 = vpop.f32.mrb[0].mxu0
    %v4974 = vpop.f32.mrb[0].mxu0
    %v4975 = vpop.f32.mrb[0].mxu0
    %4976 = vdwg.mxu0
    %4977 = vmatprep.subr.bf16.mxu0 0
    %4978 = vmatpush1.bf16.msra.mxu0 %v4553
    %4979 = vmatprep.subr.bf16.mxu0 0
    %4980 = vmatpush1.bf16.msra.mxu0 %v4554
    %4981 = vmatprep.subr.bf16.mxu0 0
    %4982 = vmatpush1.bf16.msra.mxu0 %v4555
    %4983 = vmatprep.subr.bf16.mxu0 0
    %4984 = vmatpush1.bf16.msra.mxu0 %v4556
    %4985 = vmatprep.subr.bf16.mxu0 0
    %4986 = vmatpush1.bf16.msra.mxu0 %v4557
    %4987 = vmatprep.subr.bf16.mxu0 0
    %4988 = vmatpush1.bf16.msra.mxu0 %v4558
    %4989 = vmatprep.subr.bf16.mxu0 0
    %4990 = vmatpush1.bf16.msra.mxu0 %v4559
    %4991 = vmatprep.subr.bf16.mxu0 0
    %4992 = vmatpush1.bf16.msra.mxu0 %v4560
    %4993 = vmatprep.subr.bf16.mxu0 0
    %4994 = vmatpush1.bf16.msra.mxu0 %v4561
    %4995 = vmatprep.subr.bf16.mxu0 0
    %4996 = vmatpush1.bf16.msra.mxu0 %v4562
    %4997 = vmatprep.subr.bf16.mxu0 0
    %4998 = vmatpush1.bf16.msra.mxu0 %v4563
    %4999 = vmatprep.subr.bf16.mxu0 0
    %5000 = vmatpush1.bf16.msra.mxu0 %v4564
    %5001 = vmatprep.subr.bf16.mxu0 0
    %5002 = vmatpush1.bf16.msra.mxu0 %v4565
    %5003 = vmatprep.subr.bf16.mxu0 0
    %5004 = vmatpush1.bf16.msra.mxu0 %v4566
    %5005 = vmatprep.subr.bf16.mxu0 0
    %5006 = vmatpush1.bf16.msra.mxu0 %v4567
    %5007 = vmatprep.subr.bf16.mxu0 0
    %5008 = vmatpush1.bf16.msra.mxu0 %v4568
    %5009 = vmatprep.mubr.bf16.mxu0 %v3668
    %5010 = vmatmul.mubr.bf16.gmra.mrb[0].mxu0 %v3667
    %v5011 = vpop.f32.mrb[0].mxu0
    %v5012 = vadd.f32 %v4972, %v5011
    %v5013 = vpop.f32.mrb[0].mxu0
    %v5014 = vpop.f32.mrb[0].mxu0
    %v5015 = vpop.f32.mrb[0].mxu0
    %5016 = vdwg.mxu0
    %v5017 = vadd.f32 %v2676, %v5012
    %v5018 = vsel %vm148, %v5017, 0.0
    %5019 = vadd.xlane.f32.xlu0 %v5018
    %v5020 = vpop.xlane.xlu0 %5019
    %v5021 = vmul.f32 %v5020, %v196
    %v5022 = vsub.f32 %v5017, %v5021
    %v5023 = vmul.f32 %v5022, %v5022
    %v5024 = vsel %vm148, %v5023, 0.0
    %5025 = vadd.xlane.f32.xlu0 %v5024
    %v5026 = vpop.xlane.xlu0 %5025
    %v5027 = vmul.f32 %v5026, %v196
    %v5028 = vadd.f32 %v5027, 1e-05
    %v5029 = vrsqrt.pop %v5028
    %v5030 = vmul.f32 %v5022, %v5029
    %v5031 = vlaneseq
    %v5032 = vshrl.u32 %v5031, 7
    %v5033 = vsub.s32 0, %v5032
    %v5034 = vrot.slane %v2569, %v5033
    %v5035 = vmul.f32 %v5030, %v5034
    %v5036 = vlaneseq
    %v5037 = vshrl.u32 %v5036, 7
    %v5038 = vsub.s32 0, %v5037
    %v5039 = vrot.slane %v2570, %v5038
    %v5040 = vadd.f32 %v5035, %v5039
    %v5041 = vpack.c.bf16 %v5040, %v5040
    %v5042 = vld [vmem:[%s8] sm:$0xf]
    %v5043 = vld [vmem:[%s8 + $0x4] sm:$0xf]
    %v5044 = vld [vmem:[%s8 + $0x8] sm:$0xf]
    %v5045 = vld [vmem:[%s8 + $0xc] sm:$0xf]
    %v5046 = vld [vmem:[%s8 + $0x10] sm:$0xf]
    %v5047 = vld [vmem:[%s8 + $0x14] sm:$0xf]
    %v5048 = vld [vmem:[%s8 + $0x18] sm:$0xf]
    %v5049 = vld [vmem:[%s8 + $0x1c] sm:$0xf]
    %v5050 = vld [vmem:[%s12] sm:$0x1]
    %v5051 = vlaneseq
    %v5052 = vshrl.u32 %v5051, 7
    %v5053 = vsub.s32 0, %v5052
    %v5054 = vrot.slane %v5050, %v5053
    %v5063 = vunpack.c.l.b16 %v5042
    %v5064 = vunpack.c.l.b16 %v5043
    %v5065 = vunpack.c.l.b16 %v5044
    %v5066 = vunpack.c.l.b16 %v5045
    %v5067 = vunpack.c.l.b16 %v5046
    %v5068 = vunpack.c.l.b16 %v5047
    %v5069 = vunpack.c.l.b16 %v5048
    %v5070 = vunpack.c.l.b16 %v5049
    %v5071 = vpack.c.b16 %v5064, %v5063
    %v5072 = vpack.c.b16 %v5066, %v5065
    %v5073 = vpack.c.b16 %v5068, %v5067
    %v5074 = vpack.c.b16 %v5070, %v5069
    %v5080 = vsel %vm148, %v5041, 0
    %5082 = vmatprep.subr.bf16.mxu0 0
    %5083 = vmatpush1.bf16.msra.mxu0 %v5071
    %5084 = vmatprep.subr.bf16.mxu0 0
    %5085 = vmatpush1.bf16.msra.mxu0 %v5072
    %5086 = vmatprep.subr.bf16.mxu0 0
    %5087 = vmatpush1.bf16.msra.mxu0 %v5073
    %5088 = vmatprep.subr.bf16.mxu0 0
    %5089 = vmatpush1.bf16.msra.mxu0 %v5074
    %5090 = vmatprep.subr.bf16.mxu0 0
    %5091 = vmatpush1.bf16.msra.mxu0 0
    %5092 = vmatprep.subr.bf16.mxu0 0
    %5093 = vmatpush1.bf16.msra.mxu0 0
    %5094 = vmatprep.subr.bf16.mxu0 0
    %5095 = vmatpush1.bf16.msra.mxu0 0
    %5096 = vmatprep.subr.bf16.mxu0 0
    %5097 = vmatpush1.bf16.msra.mxu0 0
    %5098 = vmatprep.subr.bf16.mxu0 0
    %5099 = vmatpush1.bf16.msra.mxu0 0
    %5100 = vmatprep.subr.bf16.mxu0 0
    %5101 = vmatpush1.bf16.msra.mxu0 0
    %5102 = vmatprep.subr.bf16.mxu0 0
    %5103 = vmatpush1.bf16.msra.mxu0 0
    %5104 = vmatprep.subr.bf16.mxu0 0
    %5105 = vmatpush1.bf16.msra.mxu0 0
    %5106 = vmatprep.subr.bf16.mxu0 0
    %5107 = vmatpush1.bf16.msra.mxu0 0
    %5108 = vmatprep.subr.bf16.mxu0 0
    %5109 = vmatpush1.bf16.msra.mxu0 0
    %5110 = vmatprep.subr.bf16.mxu0 0
    %5111 = vmatpush1.bf16.msra.mxu0 0
    %5112 = vmatprep.subr.bf16.mxu0 0
    %5113 = vmatpush1.bf16.msra.mxu0 0
    %5114 = vmatprep.mubr.bf16.mxu0 0
    %5115 = vmatmul.mubr.bf16.gmra.mrb[0].mxu0 %v5080
    %v5116 = vpop.f32.mrb[0].mxu0
    %v5117 = vadd.f32 %v5054, %v5116
    %v5118 = vpop.f32.mrb[0].mxu0
    %v5119 = vpop.f32.mrb[0].mxu0
    %v5120 = vpop.f32.mrb[0].mxu0
    %5121 = vdwg.mxu0
    %v5122 = vmax.f32 %v5117, 0.0
    %v5123 = vpack.c.bf16 %v5122, %v5122
    %v5124 = vld [vmem:[%s9] sm:$0xf]
    %v5125 = vld [vmem:[%s9 + $0x4] sm:$0xf]
    %v5126 = vld [vmem:[%s9 + $0x8] sm:$0xf]
    %v5127 = vld [vmem:[%s9 + $0xc] sm:$0xf]
    %v5128 = vld [vmem:[%s9 + $0x10] sm:$0xf]
    %v5129 = vld [vmem:[%s9 + $0x14] sm:$0xf]
    %v5130 = vld [vmem:[%s9 + $0x18] sm:$0xf]
    %v5131 = vld [vmem:[%s9 + $0x1c] sm:$0xf]
    %v5132 = vld [vmem:[%s9 + $0x20] sm:$0xf]
    %v5133 = vld [vmem:[%s9 + $0x24] sm:$0xf]
    %v5134 = vld [vmem:[%s9 + $0x28] sm:$0xf]
    %v5135 = vld [vmem:[%s9 + $0x2c] sm:$0xf]
    %v5136 = vld [vmem:[%s9 + $0x30] sm:$0xf]
    %v5137 = vld [vmem:[%s9 + $0x34] sm:$0xf]
    %v5138 = vld [vmem:[%s9 + $0x38] sm:$0xf]
    %v5139 = vld [vmem:[%s9 + $0x3c] sm:$0xf]
    %v5140 = vld [vmem:[%s12 + $0x1] sm:$0x1]
    %v5141 = vlaneseq
    %v5142 = vshrl.u32 %v5141, 7
    %v5143 = vsub.s32 0, %v5142
    %v5144 = vrot.slane %v5140, %v5143
    %v5161 = vunpack.c.l.b16 %v5124
    %v5162 = vunpack.c.l.b16 %v5125
    %v5163 = vunpack.c.l.b16 %v5126
    %v5164 = vunpack.c.l.b16 %v5127
    %v5165 = vunpack.c.l.b16 %v5128
    %v5166 = vunpack.c.l.b16 %v5129
    %v5167 = vunpack.c.l.b16 %v5130
    %v5168 = vunpack.c.l.b16 %v5131
    %v5169 = vunpack.c.l.b16 %v5132
    %v5170 = vunpack.c.l.b16 %v5133
    %v5171 = vunpack.c.l.b16 %v5134
    %v5172 = vunpack.c.l.b16 %v5135
    %v5173 = vunpack.c.l.b16 %v5136
    %v5174 = vunpack.c.l.b16 %v5137
    %v5175 = vunpack.c.l.b16 %v5138
    %v5176 = vunpack.c.l.b16 %v5139
    %v5177 = vpack.c.b16 %v5162, %v5161
    %v5178 = vpack.c.b16 %v5164, %v5163
    %v5179 = vpack.c.b16 %v5166, %v5165
    %v5180 = vpack.c.b16 %v5168, %v5167
    %v5181 = vpack.c.b16 %v5170, %v5169
    %v5182 = vpack.c.b16 %v5172, %v5171
    %v5183 = vpack.c.b16 %v5174, %v5173
    %v5184 = vpack.c.b16 %v5176, %v5175
    %5193 = vmatprep.subr.bf16.mxu0 0
    %5194 = vmatpush1.bf16.msra.mxu0 %v5177
    %5195 = vmatprep.subr.bf16.mxu0 0
    %5196 = vmatpush1.bf16.msra.mxu0 %v5178
    %5197 = vmatprep.subr.bf16.mxu0 0
    %5198 = vmatpush1.bf16.msra.mxu0 %v5179
    %5199 = vmatprep.subr.bf16.mxu0 0
    %5200 = vmatpush1.bf16.msra.mxu0 %v5180
    %5201 = vmatprep.subr.bf16.mxu0 0
    %5202 = vmatpush1.bf16.msra.mxu0 %v5181
    %5203 = vmatprep.subr.bf16.mxu0 0
    %5204 = vmatpush1.bf16.msra.mxu0 %v5182
    %5205 = vmatprep.subr.bf16.mxu0 0
    %5206 = vmatpush1.bf16.msra.mxu0 %v5183
    %5207 = vmatprep.subr.bf16.mxu0 0
    %5208 = vmatpush1.bf16.msra.mxu0 %v5184
    %5209 = vmatprep.subr.bf16.mxu0 0
    %5210 = vmatpush1.bf16.msra.mxu0 0
    %5211 = vmatprep.subr.bf16.mxu0 0
    %5212 = vmatpush1.bf16.msra.mxu0 0
    %5213 = vmatprep.subr.bf16.mxu0 0
    %5214 = vmatpush1.bf16.msra.mxu0 0
    %5215 = vmatprep.subr.bf16.mxu0 0
    %5216 = vmatpush1.bf16.msra.mxu0 0
    %5217 = vmatprep.subr.bf16.mxu0 0
    %5218 = vmatpush1.bf16.msra.mxu0 0
    %5219 = vmatprep.subr.bf16.mxu0 0
    %5220 = vmatpush1.bf16.msra.mxu0 0
    %5221 = vmatprep.subr.bf16.mxu0 0
    %5222 = vmatpush1.bf16.msra.mxu0 0
    %5223 = vmatprep.subr.bf16.mxu0 0
    %5224 = vmatpush1.bf16.msra.mxu0 0
    %5225 = vmatprep.mubr.bf16.mxu0 0
    %5226 = vmatmul.mubr.bf16.gmra.mrb[0].mxu0 %v5123
    %v5227 = vpop.f32.mrb[0].mxu0
    %v5228 = vadd.f32 %v5144, %v5227
    %v5229 = vpop.f32.mrb[0].mxu0
    %v5230 = vpop.f32.mrb[0].mxu0
    %v5231 = vpop.f32.mrb[0].mxu0
    %5232 = vdwg.mxu0
    %v5233 = vxor.u32 %v5228, 2147483648
    %v5234 = vmul.f32 %v5233, 1.442695
    %v5235 = vpow.pop %v5234
    %v5236 = vadd.f32 %v5235, 1.0
    %v5237 = vrcp.pop %v5236
    %v5238 = vmul.f32 1.0, %v5237
    %5239 = vst [vmem:[#allocation2] sm:$0xff] %v5238
    // Predicated region
    $region54: #{tpu_custom_call.1} parent=1 // pred_check
      _
    $region55: #{tpu_custom_call.1} parent=1 // pred_check_branch
      %5241 = sbr.rel (0) target = $region57
    $region56: #{tpu_custom_call.1} parent=1 // pred_region
      %s5243 = ssub.s32 128, 128
      %5244 = vsyncadd [#allocation3], %s5243
      %s5246 = sshll.u32 [#allocation2], 4
      %s5247 = int_to_ptr.vmem [resolvable:$true] %s5246
      %5249 = dma.vmem_to_hbm [thread:$0]  %s5247, 128, %s13, [#allocation3]
    $region57: #{tpu_custom_call.1} parent=1 // pred_fallthru
      _
    // Predicated region
    $region58: #{tpu_custom_call.1} parent=1 // pred_check
      _
    $region59: #{tpu_custom_call.1} parent=1 // pred_check_branch
      %5251 = sbr.rel (0) target = $region61
    $region60: #{tpu_custom_call.1} parent=1 // pred_region
      %5252 = dma.done [#allocation3], 128
    $region61: #{tpu_custom_call.1} parent=1 // pred_fallthru
      _
    %5253 = vsyncpa [#allocation3], 1

</llo_original>
